<compile_context>
chip_gen: v7x
topology: tpu7x:2x2x1
jax: 0.10.0
libtpu: 0.0.40
codegen_flags: <defaults>
</compile_context>

<pallas_src>
import functools
import math

import jax
import jax.numpy as jnp
import numpy as np
from jax import lax
from jax.experimental import pallas as pl
from jax.experimental.pallas import tpu as pltpu


def _gated_att_kernel(x_ref, w_ref, b_ref, gw_ref, gb_ref, o_ref, *, h, d_k,
                      approx_recip):
    """One grid step = B_BLK batch elements, all heads.

    x_ref  : (B_BLK, L, E)  inputs                       (compute dtype)
    w_ref  : (5E, E)        [Wq; Wk; Wv; bd(fqw)@Wq; bd(fkw)@Wk]  (compute dtype)
    b_ref  : (1, 5E)        fused biases                 (f32)
    gw_ref : (2E, E)        block-diag [fgw[:d_k]; fgw[d_k:]]     (compute dtype)
    gb_ref : (1, 2E)        tiled fc_g biases            (f32)
    o_ref  : (B_BLK, L, E)  output, heads packed along lanes      (input dtype)
    """
    cdt = x_ref.dtype
    b_blk, L, E = x_ref.shape
    M = b_blk * L
    scale = 1.0 / math.sqrt(d_k)

    def mm_t(a, w):  # a @ w.T on the MXU, f32 accumulation
        return lax.dot_general(a.astype(cdt), w, (((1,), (1,)), ((), ())),
                               preferred_element_type=jnp.float32)

    # Pack the B_BLK batch elements into the sublane (row) dim: M = B_BLK*L.
    x = x_ref[...].reshape(M, E)

    # Fused projection: [q | k | v | fc_q(q) | fc_k(k)] in ONE (M,E)@(E,5E) pass
    # (fc_q / fc_k are folded into Wq / Wk in the wrapper). Biases loaded once
    # per grid step, outside any inner loop.
    y = mm_t(x, w_ref[...]) + b_ref[...]                       # (M, 5E) f32
    q = y[:, 0 * E:1 * E]
    k = y[:, 1 * E:2 * E]
    v = y[:, 2 * E:3 * E]
    G = y[:, 3 * E:4 * E] * y[:, 4 * E:5 * E]                  # fc_q(q) * fc_k(k)

    # Fused gate: sigmoid(fc_g(G)) -> [mq | mk] in ONE (M,E)@(E,2E) pass.
    m = jax.nn.sigmoid(mm_t(G, gw_ref[...]) + gb_ref[...])     # (M, 2E) f32

    # Gating in f32 (v5e-friendly); fold 1/sqrt(d_k) into q; cast at MXU edge.
    qg = (q * m[:, :E] * scale).astype(cdt)
    kg = (k * m[:, E:]).astype(cdt)
    vg = v.astype(cdt)

    # Attention per batch element, heads batched on the leading dim.
    # TODO(synk): for large L, tile queries + stream KV (online softmax) so the
    # (h, L, L) score tensor fits v7x's 64 MiB VMEM.
    for b in range(b_blk):                                     # static unroll
        rows = slice(b * L, (b + 1) * L)

        def heads(t):                                          # (L, E) -> (h, L, d_k)
            return jnp.transpose(t[rows].reshape(L, h, d_k), (1, 0, 2))

        qh, kh, vh = heads(qg), heads(kg), heads(vg)
        s = jnp.einsum("hqd,hkd->hqk", qh, kh,
                       preferred_element_type=jnp.float32)     # (h, L, L)
        s = s - jnp.max(s, axis=-1, keepdims=True)             # stable softmax
        e = jnp.exp(s)
        inv = pl.reciprocal(jnp.sum(e, axis=-1, keepdims=True),
                            approx=approx_recip)
        p = (e * inv).astype(cdt)
        oh = jnp.einsum("hqk,hkd->hqd", p, vh,
                        preferred_element_type=jnp.float32)    # (h, L, d_k)
        # (h, L, d_k) -> (L, h*d_k): matches torch transpose(1,2).view(...),
        # lane-dense store.
        o_ref[b] = jnp.transpose(oh, (1, 0, 2)).reshape(L, E).astype(o_ref.dtype)


def _pick_b_blk(B, L, max_rows=512):
    """Largest divisor of B with B_BLK*L <= max_rows (feeds the MXU M dim)."""
    best = 1
    for d in range(1, B + 1):
        if B % d == 0 and d * L <= max_rows:
            best = d
    return best


def gated_query_att(inp, params, h, *, compute_dtype=None, b_blk=None):
    """Pallas wrapper reproducing GatedQueryAttLayer.forward(inp, mask=None)."""
    B, L, E = inp.shape
    d_k = E // h
    cdt = jnp.dtype(inp.dtype if compute_dtype is None else compute_dtype)
    odt = jnp.dtype(inp.dtype)            # always return the input dtype
    f32 = jnp.float32

    if b_blk is None:
        b_blk = _pick_b_blk(B, L)
    assert B % b_blk == 0
    n_blk = B // b_blk

    def bd(w):  # block-diagonal: per-head (d_out, d_in) -> (h*d_out, h*d_in)
        d_out, d_in = w.shape
        eye = jnp.eye(h, dtype=w.dtype)
        return (eye[:, None, :, None] * w[None, :, None, :]).reshape(h * d_out, h * d_in)

    wq, wk, wv = params["wq"], params["wk"], params["wv"]
    bq, bk, bv = params["bq"], params["bk"], params["bv"]
    fgw, fgb = params["fgw"], params["fgb"]
    bd_fq, bd_fk = bd(params["fqw"]), bd(params["fkw"])

    # Fold fc_q / fc_k into the QKV projection:
    #   fc_q(x @ Wq^T + bq) = x @ (bd(fqw) @ Wq)^T + (bd(fqw) @ bq + tile(fqb)).
    # One (5E, E) slab -> one MXU pass for [q | k | v | fc_q(q) | fc_k(k)].
    w_all = jnp.concatenate([wq, wk, wv, bd_fq @ wq, bd_fk @ wk],
                            axis=0).astype(cdt)                               # (5E, E)
    b_all = jnp.concatenate(
        [bq, bk, bv,
         bd_fq @ bq + jnp.tile(params["fqb"], h),
         bd_fk @ bk + jnp.tile(params["fkb"], h)]).astype(f32).reshape(1, 5 * E)

    # fc_g stays block-diagonal so gating stays lane-dense.
    # TODO(synk): for d_k >= 128 use a per-head batched dot_general instead
    # (the dense block-diag slab carries h-fold FLOP/VMEM/DMA overhead).
    gw = jnp.concatenate([bd(fgw[:d_k]), bd(fgw[d_k:])], axis=0).astype(cdt)  # (2E, E)
    gb = jnp.concatenate([jnp.tile(fgb[:d_k], h),
                          jnp.tile(fgb[d_k:], h)]).astype(f32).reshape(1, 2 * E)

    x = inp.astype(cdt)

    # VMEM budget (weights + double-buffered IO + f32 intermediates), clamped
    # to a range legal on v5e/v6e/v7x.
    isz, osz = cdt.itemsize, odt.itemsize
    weight_bytes = 7 * E * E * isz + 7 * E * 4
    io_bytes = 2 * b_blk * L * E * (isz + osz)
    act_bytes = 4 * b_blk * L * (10 * E) + 4 * b_blk * h * L * L * 3
    vmem_limit = int(min(64 << 20,
                         max(16 << 20,
                             2 * (2 * weight_bytes + io_bytes + act_bytes))))

    # Advisory cost estimate (projection 10*L*E^2 + gate 4*L*E^2 + attn 4*L^2*E).
    flops = B * (14 * L * E * E + 4 * L * L * E)
    transcendentals = B * (h * L * L + 2 * L * E)
    bytes_accessed = B * L * E * (isz + osz) + 7 * E * E * isz + 7 * E * 4

    kernel = functools.partial(_gated_att_kernel, h=h, d_k=d_k,
                               approx_recip=bool(cdt != jnp.float32))

    def build(buffered_weights):
        def const_spec(shape):
            idx = lambda b: (0,) * len(shape)
            if buffered_weights:
                # Grid-invariant weights: single buffer so VMEM isn't reserved
                # twice (matters at large E on v7x's 64 MiB VMEM).
                return pl.BlockSpec(shape, idx, pipeline_mode=pl.Buffered(1))
            return pl.BlockSpec(shape, idx)

        return pl.pallas_call(
            kernel,
            out_shape=jax.ShapeDtypeStruct((B, L, E), odt),
            grid_spec=pltpu.PrefetchScalarGridSpec(
                num_scalar_prefetch=0,
                grid=(n_blk,),
                in_specs=[
                    pl.BlockSpec((b_blk, L, E), lambda b: (b, 0, 0)),  # x tiles
                    const_spec((5 * E, E)),   # fused QKV + gate-input weights
                    const_spec((1, 5 * E)),   # fused biases
                    const_spec((2 * E, E)),   # fc_g block-diag weights
                    const_spec((1, 2 * E)),   # fc_g biases
                ],
                out_specs=pl.BlockSpec((b_blk, L, E), lambda b: (b, 0, 0)),
            ),
            compiler_params=pltpu.CompilerParams(
                dimension_semantics=("parallel",),
                vmem_limit_bytes=vmem_limit),
            cost_estimate=pl.CostEstimate(
                flops=flops, transcendentals=transcendentals,
                bytes_accessed=bytes_accessed),
        )

    # TODO(synk): when B // b_blk < 2 on v7x, add a second parallel grid axis
    # over query tiles so both TensorCores get work.
    # TODO(synk): if production E < 128, pad E to 128 in the wrapper (lane-dense
    # stores) and slice the padding off outside the kernel.
    try:
        return build(True)(x, w_all, b_all, gw, gb)
    except Exception:
        # pipeline_mode=pl.Buffered(1) not supported by this JAX build:
        # fall back to default double-buffering (correctness unchanged).
        return build(False)(x, w_all, b_all, gw, gb)


def reference_forward(inp, params, h):
    """Pure-JAX reference mirroring the PyTorch forward exactly (f32)."""
    B, L, E = inp.shape
    d_k = E // h

    def lin(x, w, b):
        return x @ w.T + b

    q = lin(inp, params["wq"], params["bq"]).reshape(B, L, h, d_k).transpose(0, 2, 1, 3)
    k = lin(inp, params["wk"], params["bk"]).reshape(B, L, h, d_k).transpose(0, 2, 1, 3)
    v = lin(inp, params["wv"], params["bv"]).reshape(B, L, h, d_k).transpose(0, 2, 1, 3)

    G = lin(q, params["fqw"], params["fqb"]) * lin(k, params["fkw"], params["fkb"])
    M = jax.nn.sigmoid(lin(G, params["fgw"], params["fgb"]))
    q = q * M[..., :d_k]
    k = k * M[..., d_k:]

    scores = jnp.einsum("bhqd,bhkd->bhqk", q, k) / math.sqrt(d_k)
    p = jax.nn.softmax(scores, axis=-1)
    x = jnp.einsum("bhqk,bhkd->bhqd", p, v)
    return x.transpose(0, 2, 1, 3).reshape(B, L, E)


def init_params(key, E, h):
    d_k = E // h
    ks = jax.random.split(key, 12)

    def u(k, shape, fan_in):
        bound = 1.0 / math.sqrt(fan_in)
        return jax.random.uniform(k, shape, jnp.float32, -bound, bound)

    return {
        "wq": u(ks[0], (E, E), E), "bq": u(ks[1], (E,), E),
        "wk": u(ks[2], (E, E), E), "bk": u(ks[3], (E,), E),
        "wv": u(ks[4], (E, E), E), "bv": u(ks[5], (E,), E),
        "fqw": u(ks[6], (d_k, d_k), d_k), "fqb": u(ks[7], (d_k,), d_k),
        "fkw": u(ks[8], (d_k, d_k), d_k), "fkb": u(ks[9], (d_k,), d_k),
        "fgw": u(ks[10], (2 * d_k, d_k), d_k), "fgb": u(ks[11], (2 * d_k,), d_k),
    }


if __name__ == "__main__":
    B, L, E, H = 2, 8, 32, 4   # batch, seq, embed_size, heads  (d_k = 8)

    key = jax.random.PRNGKey(0)
    k_inp, k_par = jax.random.split(key)
    inp = jax.random.normal(k_inp, (B, L, E), dtype=jnp.float32)
    params = init_params(k_par, E, H)

    ref = reference_forward(inp, params, H)

    # f32 path (exact softmax reciprocal).
    out = jax.block_until_ready(gated_query_att(inp, params, H))
    np.testing.assert_allclose(np.asarray(out), np.asarray(ref),
                               rtol=1e-2, atol=1e-2)

    # bf16 MXU path: bf16 operands, f32 accumulation, f32 output dtype.
    out_bf16 = jax.block_until_ready(
        gated_query_att(inp, params, H, compute_dtype=jnp.bfloat16))
    np.testing.assert_allclose(np.asarray(out_bf16), np.asarray(ref),
                               rtol=5e-2, atol=5e-2)

    print("KERNEL_OK")
</pallas_src>

<mosaic_0001>
module attributes {stable_mosaic.version = 11 : i64} {
  func.func @_gated_att_kernel(%arg0: i32, %arg1: memref<2x8x32xf32, #tpu.memory_space<vmem>>, %arg2: memref<160x32xf32, #tpu.memory_space<vmem>>, %arg3: memref<1x160xf32, #tpu.memory_space<vmem>>, %arg4: memref<64x32xf32, #tpu.memory_space<vmem>>, %arg5: memref<1x64xf32, #tpu.memory_space<vmem>>, %arg6: memref<2x8x32xf32, #tpu.memory_space<vmem>>) attributes {dimension_semantics = [#tpu.dimension_semantics<parallel>], iteration_bounds = array<i64: 1>, scalar_prefetch = 0 : i64, scratch_operands = 0 : i64, tpu.core_type = #tpu.core_type<tc>, window_params = [{transform_indices = @transform_0, window_bounds = array<i64: 2, 8, 32>}, {pipeline_mode = #tpu.pipeline_mode<synchronous>, transform_indices = @transform_1, window_bounds = array<i64: 160, 32>}, {pipeline_mode = #tpu.pipeline_mode<synchronous>, transform_indices = @transform_2, window_bounds = array<i64: 1, 160>}, {pipeline_mode = #tpu.pipeline_mode<synchronous>, transform_indices = @transform_3, window_bounds = array<i64: 64, 32>}, {pipeline_mode = #tpu.pipeline_mode<synchronous>, transform_indices = @transform_4, window_bounds = array<i64: 1, 64>}, {transform_indices = @transform_5, window_bounds = array<i64: 2, 8, 32>}]} {
    %c0 = arith.constant 0 : index
    %c0_0 = arith.constant 0 : index
    %c0_1 = arith.constant 0 : index
    %0 = vector.load %arg1[%c0, %c0_0, %c0_1] : memref<2x8x32xf32, #tpu.memory_space<vmem>>, vector<2x8x32xf32>
    %1 = vector.shape_cast %0 : vector<2x8x32xf32> to vector<16x32xf32>
    %c0_2 = arith.constant 0 : index
    %c0_3 = arith.constant 0 : index
    %2 = vector.load %arg2[%c0_2, %c0_3] : memref<160x32xf32, #tpu.memory_space<vmem>>, vector<160x32xf32>
    %cst = arith.constant dense<0.000000e+00> : vector<16x160xf32>
    %3 = tpu.matmul %1, %2, %cst {dimension_numbers = #tpu.dot_dimension_numbers<[1], [1], [0], [0], [0, 0, 1, 0], [], []>} : vector<16x32xf32>, vector<160x32xf32>, vector<16x160xf32> -> vector<16x160xf32>
    %c0_4 = arith.constant 0 : index
    %c0_5 = arith.constant 0 : index
    %4 = vector.load %arg3[%c0_4, %c0_5] : memref<1x160xf32, #tpu.memory_space<vmem>>, vector<1x160xf32>
    %5 = vector.broadcast %4 : vector<1x160xf32> to vector<16x160xf32>
    %6 = arith.addf %3, %5 : vector<16x160xf32>
    %7 = vector.extract_strided_slice %6 {offsets = [0, 0], sizes = [16, 32], strides = [1, 1]} : vector<16x160xf32> to vector<16x32xf32>
    %8 = vector.extract_strided_slice %6 {offsets = [0, 32], sizes = [16, 32], strides = [1, 1]} : vector<16x160xf32> to vector<16x32xf32>
    %9 = vector.extract_strided_slice %6 {offsets = [0, 64], sizes = [16, 32], strides = [1, 1]} : vector<16x160xf32> to vector<16x32xf32>
    %10 = vector.extract_strided_slice %6 {offsets = [0, 96], sizes = [16, 32], strides = [1, 1]} : vector<16x160xf32> to vector<16x32xf32>
    %11 = vector.extract_strided_slice %6 {offsets = [0, 128], sizes = [16, 32], strides = [1, 1]} : vector<16x160xf32> to vector<16x32xf32>
    %12 = arith.mulf %10, %11 : vector<16x32xf32>
    %c0_6 = arith.constant 0 : index
    %c0_7 = arith.constant 0 : index
    %13 = vector.load %arg4[%c0_6, %c0_7] : memref<64x32xf32, #tpu.memory_space<vmem>>, vector<64x32xf32>
    %cst_8 = arith.constant dense<0.000000e+00> : vector<16x64xf32>
    %14 = tpu.matmul %12, %13, %cst_8 {dimension_numbers = #tpu.dot_dimension_numbers<[1], [1], [0], [0], [0, 0, 1, 0], [], []>} : vector<16x32xf32>, vector<64x32xf32>, vector<16x64xf32> -> vector<16x64xf32>
    %c0_9 = arith.constant 0 : index
    %c0_10 = arith.constant 0 : index
    %15 = vector.load %arg5[%c0_9, %c0_10] : memref<1x64xf32, #tpu.memory_space<vmem>>, vector<1x64xf32>
    %16 = vector.broadcast %15 : vector<1x64xf32> to vector<16x64xf32>
    %17 = arith.addf %14, %16 : vector<16x64xf32>
    %18 = arith.negf %17 : vector<16x64xf32>
    %19 = math.exp %18 : vector<16x64xf32>
    %cst_11 = arith.constant 1.000000e+00 : f32
    %20 = vector.broadcast %cst_11 : f32 to vector<16x64xf32>
    %21 = arith.addf %20, %19 : vector<16x64xf32>
    %22 = arith.divf %20, %21 : vector<16x64xf32>
    %23 = vector.extract_strided_slice %22 {offsets = [0, 0], sizes = [16, 32], strides = [1, 1]} : vector<16x64xf32> to vector<16x32xf32>
    %24 = arith.mulf %7, %23 : vector<16x32xf32>
    %cst_12 = arith.constant 0.353553385 : f32
    %25 = vector.broadcast %cst_12 : f32 to vector<16x32xf32>
    %26 = arith.mulf %24, %25 : vector<16x32xf32>
    %27 = vector.extract_strided_slice %22 {offsets = [0, 32], sizes = [16, 32], strides = [1, 1]} : vector<16x64xf32> to vector<16x32xf32>
    %28 = arith.mulf %8, %27 : vector<16x32xf32>
    %29 = vector.extract_strided_slice %26 {offsets = [0, 0], sizes = [8, 32], strides = [1, 1]} : vector<16x32xf32> to vector<8x32xf32>
    %30 = vector.shape_cast %29 : vector<8x32xf32> to vector<8x4x8xf32>
    %31 = tpu.transpose %30, [1, 0, 2] : vector<8x4x8xf32> -> vector<4x8x8xf32>
    %32 = vector.extract_strided_slice %28 {offsets = [0, 0], sizes = [8, 32], strides = [1, 1]} : vector<16x32xf32> to vector<8x32xf32>
    %33 = vector.shape_cast %32 : vector<8x32xf32> to vector<8x4x8xf32>
    %34 = tpu.transpose %33, [1, 0, 2] : vector<8x4x8xf32> -> vector<4x8x8xf32>
    %35 = vector.extract_strided_slice %9 {offsets = [0, 0], sizes = [8, 32], strides = [1, 1]} : vector<16x32xf32> to vector<8x32xf32>
    %36 = vector.shape_cast %35 : vector<8x32xf32> to vector<8x4x8xf32>
    %37 = tpu.transpose %36, [1, 0, 2] : vector<8x4x8xf32> -> vector<4x8x8xf32>
    "tpu.trace_start"() <{level = 10 : i32, message = "hqd,hkd->hqk"}> : () -> ()
    %cst_13 = arith.constant dense<0.000000e+00> : vector<4x8x8xf32>
    %38 = tpu.matmul %31, %34, %cst_13 {dimension_numbers = #tpu.dot_dimension_numbers<[2], [2], [1], [1], [0, 0, 0, 1, 1, 1], [0], [0]>} : vector<4x8x8xf32>, vector<4x8x8xf32>, vector<4x8x8xf32> -> vector<4x8x8xf32>
    "tpu.trace_stop"() : () -> ()
    %cst_14 = arith.constant dense<0xFF800000> : vector<4x8xf32>
    %39 = vector.multi_reduction <maximumf>, %38, %cst_14 [2] : vector<4x8x8xf32> to vector<4x8xf32>
    %40 = vector.shape_cast %39 : vector<4x8xf32> to vector<4x8x1xf32>
    %41 = vector.broadcast %40 : vector<4x8x1xf32> to vector<4x8x8xf32>
    %42 = arith.subf %38, %41 : vector<4x8x8xf32>
    %43 = math.exp %42 : vector<4x8x8xf32>
    %cst_15 = arith.constant dense<0.000000e+00> : vector<4x8xf32>
    %44 = vector.multi_reduction <add>, %43, %cst_15 [2] : vector<4x8x8xf32> to vector<4x8xf32>
    %45 = vector.shape_cast %44 : vector<4x8xf32> to vector<4x8x1xf32>
    %46 = tpu.reciprocal %45 : vector<4x8x1xf32> -> vector<4x8x1xf32>
    %47 = vector.broadcast %46 : vector<4x8x1xf32> to vector<4x8x8xf32>
    %48 = arith.mulf %43, %47 : vector<4x8x8xf32>
    "tpu.trace_start"() <{level = 10 : i32, message = "hqk,hkd->hqd"}> : () -> ()
    %cst_16 = arith.constant dense<0.000000e+00> : vector<4x8x8xf32>
    %49 = tpu.matmul %48, %37, %cst_16 {dimension_numbers = #tpu.dot_dimension_numbers<[2], [1], [1], [2], [0, 0, 0, 1, 1, 2], [0], [0]>} : vector<4x8x8xf32>, vector<4x8x8xf32>, vector<4x8x8xf32> -> vector<4x8x8xf32>
    "tpu.trace_stop"() : () -> ()
    %50 = tpu.transpose %49, [1, 0, 2] : vector<4x8x8xf32> -> vector<8x4x8xf32>
    %51 = vector.shape_cast %50 : vector<8x4x8xf32> to vector<8x32xf32>
    %c0_17 = arith.constant 0 : index
    %c0_18 = arith.constant 0 : index
    %c0_19 = arith.constant 0 : index
    %52 = vector.load %arg6[%c0_17, %c0_18, %c0_19] : memref<2x8x32xf32, #tpu.memory_space<vmem>>, vector<1x8x32xf32>
    %53 = vector.shape_cast %52 : vector<1x8x32xf32> to vector<8x32xf32>
    %54 = vector.shape_cast %51 : vector<8x32xf32> to vector<1x8x32xf32>
    tpu.vector_store %arg6[%c0_17, %c0_18, %c0_19], %54 {strides = array<i32>} : memref<2x8x32xf32, #tpu.memory_space<vmem>>, vector<1x8x32xf32>,
    %55 = vector.extract_strided_slice %26 {offsets = [8, 0], sizes = [8, 32], strides = [1, 1]} : vector<16x32xf32> to vector<8x32xf32>
    %56 = vector.shape_cast %55 : vector<8x32xf32> to vector<8x4x8xf32>
    %57 = tpu.transpose %56, [1, 0, 2] : vector<8x4x8xf32> -> vector<4x8x8xf32>
    %58 = vector.extract_strided_slice %28 {offsets = [8, 0], sizes = [8, 32], strides = [1, 1]} : vector<16x32xf32> to vector<8x32xf32>
    %59 = vector.shape_cast %58 : vector<8x32xf32> to vector<8x4x8xf32>
    %60 = tpu.transpose %59, [1, 0, 2] : vector<8x4x8xf32> -> vector<4x8x8xf32>
    %61 = vector.extract_strided_slice %9 {offsets = [8, 0], sizes = [8, 32], strides = [1, 1]} : vector<16x32xf32> to vector<8x32xf32>
    %62 = vector.shape_cast %61 : vector<8x32xf32> to vector<8x4x8xf32>
    %63 = tpu.transpose %62, [1, 0, 2] : vector<8x4x8xf32> -> vector<4x8x8xf32>
    "tpu.trace_start"() <{level = 10 : i32, message = "hqd,hkd->hqk"}> : () -> ()
    %cst_20 = arith.constant dense<0.000000e+00> : vector<4x8x8xf32>
    %64 = tpu.matmul %57, %60, %cst_20 {dimension_numbers = #tpu.dot_dimension_numbers<[2], [2], [1], [1], [0, 0, 0, 1, 1, 1], [0], [0]>} : vector<4x8x8xf32>, vector<4x8x8xf32>, vector<4x8x8xf32> -> vector<4x8x8xf32>
    "tpu.trace_stop"() : () -> ()
    %cst_21 = arith.constant dense<0xFF800000> : vector<4x8xf32>
    %65 = vector.multi_reduction <maximumf>, %64, %cst_21 [2] : vector<4x8x8xf32> to vector<4x8xf32>
    %66 = vector.shape_cast %65 : vector<4x8xf32> to vector<4x8x1xf32>
    %67 = vector.broadcast %66 : vector<4x8x1xf32> to vector<4x8x8xf32>
    %68 = arith.subf %64, %67 : vector<4x8x8xf32>
    %69 = math.exp %68 : vector<4x8x8xf32>
    %cst_22 = arith.constant dense<0.000000e+00> : vector<4x8xf32>
    %70 = vector.multi_reduction <add>, %69, %cst_22 [2] : vector<4x8x8xf32> to vector<4x8xf32>
    %71 = vector.shape_cast %70 : vector<4x8xf32> to vector<4x8x1xf32>
    %72 = tpu.reciprocal %71 : vector<4x8x1xf32> -> vector<4x8x1xf32>
    %73 = vector.broadcast %72 : vector<4x8x1xf32> to vector<4x8x8xf32>
    %74 = arith.mulf %69, %73 : vector<4x8x8xf32>
    "tpu.trace_start"() <{level = 10 : i32, message = "hqk,hkd->hqd"}> : () -> ()
    %cst_23 = arith.constant dense<0.000000e+00> : vector<4x8x8xf32>
    %75 = tpu.matmul %74, %63, %cst_23 {dimension_numbers = #tpu.dot_dimension_numbers<[2], [1], [1], [2], [0, 0, 0, 1, 1, 2], [0], [0]>} : vector<4x8x8xf32>, vector<4x8x8xf32>, vector<4x8x8xf32> -> vector<4x8x8xf32>
    "tpu.trace_stop"() : () -> ()
    %76 = tpu.transpose %75, [1, 0, 2] : vector<4x8x8xf32> -> vector<8x4x8xf32>
    %77 = vector.shape_cast %76 : vector<8x4x8xf32> to vector<8x32xf32>
    %c1 = arith.constant 1 : index
    %c0_24 = arith.constant 0 : index
    %c0_25 = arith.constant 0 : index
    %78 = vector.load %arg6[%c1, %c0_24, %c0_25] : memref<2x8x32xf32, #tpu.memory_space<vmem>>, vector<1x8x32xf32>
    %79 = vector.shape_cast %78 : vector<1x8x32xf32> to vector<8x32xf32>
    %80 = vector.shape_cast %77 : vector<8x32xf32> to vector<1x8x32xf32>
    tpu.vector_store %arg6[%c1, %c0_24, %c0_25], %80 {strides = array<i32>} : memref<2x8x32xf32, #tpu.memory_space<vmem>>, vector<1x8x32xf32>,
    return
  }
  func.func @transform_0(%arg0: i32) -> (i32, i32, i32) {
    %c0_i32 = arith.constant 0 : i32
    %c0_i32_0 = arith.constant 0 : i32
    %c0_i32_1 = arith.constant 0 : i32
    return %arg0, %c0_i32, %c0_i32_0 : i32, i32, i32
  }
  func.func @transform_1(%arg0: i32) -> (i32, i32) {
    %c0_i32 = arith.constant 0 : i32
    %c0_i32_0 = arith.constant 0 : i32
    %c0_i32_1 = arith.constant 0 : i32
    return %c0_i32, %c0_i32_0 : i32, i32
  }
  func.func @transform_2(%arg0: i32) -> (i32, i32) {
    %c0_i32 = arith.constant 0 : i32
    %c0_i32_0 = arith.constant 0 : i32
    %c0_i32_1 = arith.constant 0 : i32
    return %c0_i32, %c0_i32_0 : i32, i32
  }
  func.func @transform_3(%arg0: i32) -> (i32, i32) {
    %c0_i32 = arith.constant 0 : i32
    %c0_i32_0 = arith.constant 0 : i32
    %c0_i32_1 = arith.constant 0 : i32
    return %c0_i32, %c0_i32_0 : i32, i32
  }
  func.func @transform_4(%arg0: i32) -> (i32, i32) {
    %c0_i32 = arith.constant 0 : i32
    %c0_i32_0 = arith.constant 0 : i32
    %c0_i32_1 = arith.constant 0 : i32
    return %c0_i32, %c0_i32_0 : i32, i32
  }
  func.func @transform_5(%arg0: i32) -> (i32, i32, i32) {
    %c0_i32 = arith.constant 0 : i32
    %c0_i32_0 = arith.constant 0 : i32
    %c0_i32_1 = arith.constant 0 : i32
    return %arg0, %c0_i32, %c0_i32_0 : i32, i32, i32
  }
}

module attributes {stable_mosaic.version = 11 : i64} {
  func.func @_gated_att_kernel(%arg0: i32, %arg1: memref<2x8x32xf32, #tpu.memory_space<vmem>>, %arg2: memref<160x32xf32, #tpu.memory_space<vmem>>, %arg3: memref<1x160xf32, #tpu.memory_space<vmem>>, %arg4: memref<64x32xf32, #tpu.memory_space<vmem>>, %arg5: memref<1x64xf32, #tpu.memory_space<vmem>>, %arg6: memref<2x8x32xf32, #tpu.memory_space<vmem>>) attributes {dimension_semantics = [#tpu.dimension_semantics<parallel>], iteration_bounds = array<i64: 1>, scalar_prefetch = 0 : i64, scratch_operands = 0 : i64, tpu.core_type = #tpu.core_type<tc>, window_params = [{transform_indices = @transform_0, window_bounds = array<i64: 2, 8, 32>}, {pipeline_mode = #tpu.pipeline_mode<synchronous>, transform_indices = @transform_1, window_bounds = array<i64: 160, 32>}, {pipeline_mode = #tpu.pipeline_mode<synchronous>, transform_indices = @transform_2, window_bounds = array<i64: 1, 160>}, {pipeline_mode = #tpu.pipeline_mode<synchronous>, transform_indices = @transform_3, window_bounds = array<i64: 64, 32>}, {pipeline_mode = #tpu.pipeline_mode<synchronous>, transform_indices = @transform_4, window_bounds = array<i64: 1, 64>}, {transform_indices = @transform_5, window_bounds = array<i64: 2, 8, 32>}]} {
    %c0 = arith.constant 0 : index
    %c0_0 = arith.constant 0 : index
    %c0_1 = arith.constant 0 : index
    %0 = vector.load %arg1[%c0, %c0_0, %c0_1] : memref<2x8x32xf32, #tpu.memory_space<vmem>>, vector<2x8x32xf32>
    %1 = vector.shape_cast %0 : vector<2x8x32xf32> to vector<16x32xf32>
    %c0_2 = arith.constant 0 : index
    %c0_3 = arith.constant 0 : index
    %2 = vector.load %arg2[%c0_2, %c0_3] : memref<160x32xf32, #tpu.memory_space<vmem>>, vector<160x32xf32>
    %cst = arith.constant dense<0.000000e+00> : vector<16x160xf32>
    %3 = tpu.matmul %1, %2, %cst {dimension_numbers = #tpu.dot_dimension_numbers<[1], [1], [0], [0], [0, 0, 1, 0], [], []>} : vector<16x32xf32>, vector<160x32xf32>, vector<16x160xf32> -> vector<16x160xf32>
    %c0_4 = arith.constant 0 : index
    %c0_5 = arith.constant 0 : index
    %4 = vector.load %arg3[%c0_4, %c0_5] : memref<1x160xf32, #tpu.memory_space<vmem>>, vector<1x160xf32>
    %5 = vector.broadcast %4 : vector<1x160xf32> to vector<16x160xf32>
    %6 = arith.addf %3, %5 : vector<16x160xf32>
    %7 = vector.extract_strided_slice %6 {offsets = [0, 0], sizes = [16, 32], strides = [1, 1]} : vector<16x160xf32> to vector<16x32xf32>
    %8 = vector.extract_strided_slice %6 {offsets = [0, 32], sizes = [16, 32], strides = [1, 1]} : vector<16x160xf32> to vector<16x32xf32>
    %9 = vector.extract_strided_slice %6 {offsets = [0, 64], sizes = [16, 32], strides = [1, 1]} : vector<16x160xf32> to vector<16x32xf32>
    %10 = vector.extract_strided_slice %6 {offsets = [0, 96], sizes = [16, 32], strides = [1, 1]} : vector<16x160xf32> to vector<16x32xf32>
    %11 = vector.extract_strided_slice %6 {offsets = [0, 128], sizes = [16, 32], strides = [1, 1]} : vector<16x160xf32> to vector<16x32xf32>
    %12 = arith.mulf %10, %11 : vector<16x32xf32>
    %c0_6 = arith.constant 0 : index
    %c0_7 = arith.constant 0 : index
    %13 = vector.load %arg4[%c0_6, %c0_7] : memref<64x32xf32, #tpu.memory_space<vmem>>, vector<64x32xf32>
    %cst_8 = arith.constant dense<0.000000e+00> : vector<16x64xf32>
    %14 = tpu.matmul %12, %13, %cst_8 {dimension_numbers = #tpu.dot_dimension_numbers<[1], [1], [0], [0], [0, 0, 1, 0], [], []>} : vector<16x32xf32>, vector<64x32xf32>, vector<16x64xf32> -> vector<16x64xf32>
    %c0_9 = arith.constant 0 : index
    %c0_10 = arith.constant 0 : index
    %15 = vector.load %arg5[%c0_9, %c0_10] : memref<1x64xf32, #tpu.memory_space<vmem>>, vector<1x64xf32>
    %16 = vector.broadcast %15 : vector<1x64xf32> to vector<16x64xf32>
    %17 = arith.addf %14, %16 : vector<16x64xf32>
    %18 = arith.negf %17 : vector<16x64xf32>
    %19 = math.exp %18 : vector<16x64xf32>
    %cst_11 = arith.constant 1.000000e+00 : f32
    %20 = vector.broadcast %cst_11 : f32 to vector<16x64xf32>
    %21 = arith.addf %20, %19 : vector<16x64xf32>
    %22 = arith.divf %20, %21 : vector<16x64xf32>
    %23 = vector.extract_strided_slice %22 {offsets = [0, 0], sizes = [16, 32], strides = [1, 1]} : vector<16x64xf32> to vector<16x32xf32>
    %24 = arith.mulf %7, %23 : vector<16x32xf32>
    %cst_12 = arith.constant 0.353553385 : f32
    %25 = vector.broadcast %cst_12 : f32 to vector<16x32xf32>
    %26 = arith.mulf %24, %25 : vector<16x32xf32>
    %27 = vector.extract_strided_slice %22 {offsets = [0, 32], sizes = [16, 32], strides = [1, 1]} : vector<16x64xf32> to vector<16x32xf32>
    %28 = arith.mulf %8, %27 : vector<16x32xf32>
    %29 = vector.extract_strided_slice %26 {offsets = [0, 0], sizes = [8, 32], strides = [1, 1]} : vector<16x32xf32> to vector<8x32xf32>
    %30 = vector.shape_cast %29 : vector<8x32xf32> to vector<8x4x8xf32>
    %31 = tpu.transpose %30, [1, 0, 2] : vector<8x4x8xf32> -> vector<4x8x8xf32>
    %32 = vector.extract_strided_slice %28 {offsets = [0, 0], sizes = [8, 32], strides = [1, 1]} : vector<16x32xf32> to vector<8x32xf32>
    %33 = vector.shape_cast %32 : vector<8x32xf32> to vector<8x4x8xf32>
    %34 = tpu.transpose %33, [1, 0, 2] : vector<8x4x8xf32> -> vector<4x8x8xf32>
    %35 = vector.extract_strided_slice %9 {offsets = [0, 0], sizes = [8, 32], strides = [1, 1]} : vector<16x32xf32> to vector<8x32xf32>
    %36 = vector.shape_cast %35 : vector<8x32xf32> to vector<8x4x8xf32>
    %37 = tpu.transpose %36, [1, 0, 2] : vector<8x4x8xf32> -> vector<4x8x8xf32>
    "tpu.trace_start"() <{level = 10 : i32, message = "hqd,hkd->hqk"}> : () -> ()
    %cst_13 = arith.constant dense<0.000000e+00> : vector<4x8x8xf32>
    %38 = tpu.matmul %31, %34, %cst_13 {dimension_numbers = #tpu.dot_dimension_numbers<[2], [2], [1], [1], [0, 0, 0, 1, 1, 1], [0], [0]>} : vector<4x8x8xf32>, vector<4x8x8xf32>, vector<4x8x8xf32> -> vector<4x8x8xf32>
    "tpu.trace_stop"() : () -> ()
    %cst_14 = arith.constant dense<0xFF800000> : vector<4x8xf32>
    %39 = vector.multi_reduction <maximumf>, %38, %cst_14 [2] : vector<4x8x8xf32> to vector<4x8xf32>
    %40 = vector.shape_cast %39 : vector<4x8xf32> to vector<4x8x1xf32>
    %41 = vector.broadcast %40 : vector<4x8x1xf32> to vector<4x8x8xf32>
    %42 = arith.subf %38, %41 : vector<4x8x8xf32>
    %43 = math.exp %42 : vector<4x8x8xf32>
    %cst_15 = arith.constant dense<0.000000e+00> : vector<4x8xf32>
    %44 = vector.multi_reduction <add>, %43, %cst_15 [2] : vector<4x8x8xf32> to vector<4x8xf32>
    %45 = vector.shape_cast %44 : vector<4x8xf32> to vector<4x8x1xf32>
    %46 = tpu.reciprocal %45 : vector<4x8x1xf32> -> vector<4x8x1xf32>
    %47 = vector.broadcast %46 : vector<4x8x1xf32> to vector<4x8x8xf32>
    %48 = arith.mulf %43, %47 : vector<4x8x8xf32>
    "tpu.trace_start"() <{level = 10 : i32, message = "hqk,hkd->hqd"}> : () -> ()
    %cst_16 = arith.constant dense<0.000000e+00> : vector<4x8x8xf32>
    %49 = tpu.matmul %48, %37, %cst_16 {dimension_numbers = #tpu.dot_dimension_numbers<[2], [1], [1], [2], [0, 0, 0, 1, 1, 2], [0], [0]>} : vector<4x8x8xf32>, vector<4x8x8xf32>, vector<4x8x8xf32> -> vector<4x8x8xf32>
    "tpu.trace_stop"() : () -> ()
    %50 = tpu.transpose %49, [1, 0, 2] : vector<4x8x8xf32> -> vector<8x4x8xf32>
    %51 = vector.shape_cast %50 : vector<8x4x8xf32> to vector<8x32xf32>
    %c0_17 = arith.constant 0 : index
    %c0_18 = arith.constant 0 : index
    %c0_19 = arith.constant 0 : index
    %52 = vector.load %arg6[%c0_17, %c0_18, %c0_19] : memref<2x8x32xf32, #tpu.memory_space<vmem>>, vector<1x8x32xf32>
    %53 = vector.shape_cast %52 : vector<1x8x32xf32> to vector<8x32xf32>
    %54 = vector.shape_cast %51 : vector<8x32xf32> to vector<1x8x32xf32>
    tpu.vector_store %arg6[%c0_17, %c0_18, %c0_19], %54 {strides = array<i32>} : memref<2x8x32xf32, #tpu.memory_space<vmem>>, vector<1x8x32xf32>,
    %55 = vector.extract_strided_slice %26 {offsets = [8, 0], sizes = [8, 32], strides = [1, 1]} : vector<16x32xf32> to vector<8x32xf32>
    %56 = vector.shape_cast %55 : vector<8x32xf32> to vector<8x4x8xf32>
    %57 = tpu.transpose %56, [1, 0, 2] : vector<8x4x8xf32> -> vector<4x8x8xf32>
    %58 = vector.extract_strided_slice %28 {offsets = [8, 0], sizes = [8, 32], strides = [1, 1]} : vector<16x32xf32> to vector<8x32xf32>
    %59 = vector.shape_cast %58 : vector<8x32xf32> to vector<8x4x8xf32>
    %60 = tpu.transpose %59, [1, 0, 2] : vector<8x4x8xf32> -> vector<4x8x8xf32>
    %61 = vector.extract_strided_slice %9 {offsets = [8, 0], sizes = [8, 32], strides = [1, 1]} : vector<16x32xf32> to vector<8x32xf32>
    %62 = vector.shape_cast %61 : vector<8x32xf32> to vector<8x4x8xf32>
    %63 = tpu.transpose %62, [1, 0, 2] : vector<8x4x8xf32> -> vector<4x8x8xf32>
    "tpu.trace_start"() <{level = 10 : i32, message = "hqd,hkd->hqk"}> : () -> ()
    %cst_20 = arith.constant dense<0.000000e+00> : vector<4x8x8xf32>
    %64 = tpu.matmul %57, %60, %cst_20 {dimension_numbers = #tpu.dot_dimension_numbers<[2], [2], [1], [1], [0, 0, 0, 1, 1, 1], [0], [0]>} : vector<4x8x8xf32>, vector<4x8x8xf32>, vector<4x8x8xf32> -> vector<4x8x8xf32>
    "tpu.trace_stop"() : () -> ()
    %cst_21 = arith.constant dense<0xFF800000> : vector<4x8xf32>
    %65 = vector.multi_reduction <maximumf>, %64, %cst_21 [2] : vector<4x8x8xf32> to vector<4x8xf32>
    %66 = vector.shape_cast %65 : vector<4x8xf32> to vector<4x8x1xf32>
    %67 = vector.broadcast %66 : vector<4x8x1xf32> to vector<4x8x8xf32>
    %68 = arith.subf %64, %67 : vector<4x8x8xf32>
    %69 = math.exp %68 : vector<4x8x8xf32>
    %cst_22 = arith.constant dense<0.000000e+00> : vector<4x8xf32>
    %70 = vector.multi_reduction <add>, %69, %cst_22 [2] : vector<4x8x8xf32> to vector<4x8xf32>
    %71 = vector.shape_cast %70 : vector<4x8xf32> to vector<4x8x1xf32>
    %72 = tpu.reciprocal %71 : vector<4x8x1xf32> -> vector<4x8x1xf32>
    %73 = vector.broadcast %72 : vector<4x8x1xf32> to vector<4x8x8xf32>
    %74 = arith.mulf %69, %73 : vector<4x8x8xf32>
    "tpu.trace_start"() <{level = 10 : i32, message = "hqk,hkd->hqd"}> : () -> ()
    %cst_23 = arith.constant dense<0.000000e+00> : vector<4x8x8xf32>
    %75 = tpu.matmul %74, %63, %cst_23 {dimension_numbers = #tpu.dot_dimension_numbers<[2], [1], [1], [2], [0, 0, 0, 1, 1, 2], [0], [0]>} : vector<4x8x8xf32>, vector<4x8x8xf32>, vector<4x8x8xf32> -> vector<4x8x8xf32>
    "tpu.trace_stop"() : () -> ()
    %76 = tpu.transpose %75, [1, 0, 2] : vector<4x8x8xf32> -> vector<8x4x8xf32>
    %77 = vector.shape_cast %76 : vector<8x4x8xf32> to vector<8x32xf32>
    %c1 = arith.constant 1 : index
    %c0_24 = arith.constant 0 : index
    %c0_25 = arith.constant 0 : index
    %78 = vector.load %arg6[%c1, %c0_24, %c0_25] : memref<2x8x32xf32, #tpu.memory_space<vmem>>, vector<1x8x32xf32>
    %79 = vector.shape_cast %78 : vector<1x8x32xf32> to vector<8x32xf32>
    %80 = vector.shape_cast %77 : vector<8x32xf32> to vector<1x8x32xf32>
    tpu.vector_store %arg6[%c1, %c0_24, %c0_25], %80 {strides = array<i32>} : memref<2x8x32xf32, #tpu.memory_space<vmem>>, vector<1x8x32xf32>,
    return
  }
  func.func @transform_0(%arg0: i32) -> (i32, i32, i32) {
    %c0_i32 = arith.constant 0 : i32
    %c0_i32_0 = arith.constant 0 : i32
    %c0_i32_1 = arith.constant 0 : i32
    return %arg0, %c0_i32, %c0_i32_0 : i32, i32, i32
  }
  func.func @transform_1(%arg0: i32) -> (i32, i32) {
    %c0_i32 = arith.constant 0 : i32
    %c0_i32_0 = arith.constant 0 : i32
    %c0_i32_1 = arith.constant 0 : i32
    return %c0_i32, %c0_i32_0 : i32, i32
  }
  func.func @transform_2(%arg0: i32) -> (i32, i32) {
    %c0_i32 = arith.constant 0 : i32
    %c0_i32_0 = arith.constant 0 : i32
    %c0_i32_1 = arith.constant 0 : i32
    return %c0_i32, %c0_i32_0 : i32, i32
  }
  func.func @transform_3(%arg0: i32) -> (i32, i32) {
    %c0_i32 = arith.constant 0 : i32
    %c0_i32_0 = arith.constant 0 : i32
    %c0_i32_1 = arith.constant 0 : i32
    return %c0_i32, %c0_i32_0 : i32, i32
  }
  func.func @transform_4(%arg0: i32) -> (i32, i32) {
    %c0_i32 = arith.constant 0 : i32
    %c0_i32_0 = arith.constant 0 : i32
    %c0_i32_1 = arith.constant 0 : i32
    return %c0_i32, %c0_i32_0 : i32, i32
  }
  func.func @transform_5(%arg0: i32) -> (i32, i32, i32) {
    %c0_i32 = arith.constant 0 : i32
    %c0_i32_0 = arith.constant 0 : i32
    %c0_i32_1 = arith.constant 0 : i32
    return %arg0, %c0_i32, %c0_i32_0 : i32, i32, i32
  }
}

</mosaic_0001>

<llo_original>
// kernel: tpu_custom_call.1
$region0: #{tpu_custom_call.1}
  #allocation0 [shape = 'u32[]', space=smem, size = 0x4, offset = 0x4, fixed_abs, tag = 'smem constant byte address 0x4 - core index']
  #allocation1 [shape = 'u32[144,128]{1,0:T(1,128)}', space=vmem, size = 0x12000, scoped, tag = 'internal scratch']
  %s0 = inlined_call_operand.vmem [shape: f32[2,8,32], index: 0, kind: input, shape index: {}]
  %s1 = inlined_call_operand.vmem [shape: f32[160,32], index: 1, kind: input, shape index: {}]
  %s2 = inlined_call_operand.vmem [shape: f32[1,160], index: 2, kind: input, shape index: {}]
  %s3 = inlined_call_operand.vmem [shape: f32[64,32], index: 3, kind: input, shape index: {}]
  %s4 = inlined_call_operand.vmem [shape: f32[1,64], index: 4, kind: input, shape index: {}]
  %s5 = inlined_call_operand.hbm [shape: f32[2,8,32], index: 5, kind: output, shape index: {}]
  %s6 = sld [smem:[#allocation0]]
  $region30: #{tpu_custom_call.1} parent=0
    _
  %s8 = ssub.s32 1, %s6
  %s9 = scalar_select 0, %s8, %s6
  $region1: #{tpu_custom_call.1} parent=0
    #allocation2 [shape = 'u8[8192]{0}', space=vmem, size = 0x2000, scoped, tag = 'output window, operand 0, single buffered']
    #allocation3 [shape = 's32[1]{0}', space=sflag, size = 0x4, scoped, tag = 'scoped memory for tpu_custom_call.1']
    %10 = vsyncpa [#allocation3], 0
    // Predicated region
    $region2: #{tpu_custom_call.1} parent=1 // pred_check
      _
    $region3: #{tpu_custom_call.1} parent=1 // pred_check_branch
      %12 = sbr.rel (0) target = $region5
    $region4: #{tpu_custom_call.1} parent=1 // pred_region
      _
    $region5: #{tpu_custom_call.1} parent=1 // pred_fallthru
      _
    // Predicated region
    $region6: #{tpu_custom_call.1} parent=1 // pred_check
      _
    $region7: #{tpu_custom_call.1} parent=1 // pred_check_branch
      %14 = sbr.rel (0) target = $region9
    $region8: #{tpu_custom_call.1} parent=1 // pred_region
      _
    $region9: #{tpu_custom_call.1} parent=1 // pred_fallthru
      _
    // Predicated region
    $region10: #{tpu_custom_call.1} parent=1 // pred_check
      _
    $region11: #{tpu_custom_call.1} parent=1 // pred_check_branch
      %16 = sbr.rel (0) target = $region13
    $region12: #{tpu_custom_call.1} parent=1 // pred_region
      _
    $region13: #{tpu_custom_call.1} parent=1 // pred_fallthru
      _
    // Predicated region
    $region14: #{tpu_custom_call.1} parent=1 // pred_check
      _
    $region15: #{tpu_custom_call.1} parent=1 // pred_check_branch
      %18 = sbr.rel (0) target = $region17
    $region16: #{tpu_custom_call.1} parent=1 // pred_region
      _
    $region17: #{tpu_custom_call.1} parent=1 // pred_fallthru
      _
    // Predicated region
    $region18: #{tpu_custom_call.1} parent=1 // pred_check
      _
    $region19: #{tpu_custom_call.1} parent=1 // pred_check_branch
      %20 = sbr.rel (0) target = $region21
    $region20: #{tpu_custom_call.1} parent=1 // pred_region
      _
    $region21: #{tpu_custom_call.1} parent=1 // pred_fallthru
      _
    %v21 = vld [vmem:[%s0] sm:$0xff]
    %v22 = vld [vmem:[%s0 + $0x8] sm:$0xff]
    %v23 = vld [vmem:[%s1] sm:$0xff]
    %v24 = vld [vmem:[%s1 + $0x8] sm:$0xff]
    %v25 = vld [vmem:[%s1 + $0x10] sm:$0xff]
    %v26 = vld [vmem:[%s1 + $0x18] sm:$0xff]
    %v27 = vld [vmem:[%s1 + $0x20] sm:$0xff]
    %v28 = vld [vmem:[%s1 + $0x28] sm:$0xff]
    %v29 = vld [vmem:[%s1 + $0x30] sm:$0xff]
    %v30 = vld [vmem:[%s1 + $0x38] sm:$0xff]
    %v31 = vld [vmem:[%s1 + $0x40] sm:$0xff]
    %v32 = vld [vmem:[%s1 + $0x48] sm:$0xff]
    %v33 = vld [vmem:[%s1 + $0x50] sm:$0xff]
    %v34 = vld [vmem:[%s1 + $0x58] sm:$0xff]
    %v35 = vld [vmem:[%s1 + $0x60] sm:$0xff]
    %v36 = vld [vmem:[%s1 + $0x68] sm:$0xff]
    %v37 = vld [vmem:[%s1 + $0x70] sm:$0xff]
    %v38 = vld [vmem:[%s1 + $0x78] sm:$0xff]
    %v39 = vld [vmem:[%s1 + $0x80] sm:$0xff]
    %v40 = vld [vmem:[%s1 + $0x88] sm:$0xff]
    %v41 = vld [vmem:[%s1 + $0x90] sm:$0xff]
    %v42 = vld [vmem:[%s1 + $0x98] sm:$0xff]
    %v43 = vld [vmem:[%s2] sm:$0x3]
    %v45 = vlaneseq
    %v46 = vshrl.u32 %v45, 7
    %v47 = vsub.s32 0, %v46
    %v48 = vrot.slane %v43, %v47
    %v49 = vlaneseq
    %v50 = vshrl.u32 %v49, 7
    %v51 = vsub.s32 1, %v50
    %v52 = vrot.slane %v43, %v51
    %vm55 = vcmask 261120
    %v57 = vsel %vm55, %v21, 0
    %v60 = vsel %vm55, %v22, 0
    %v63 = vsel %vm55, %v23, 0
    %v66 = vsel %vm55, %v24, 0
    %v69 = vsel %vm55, %v25, 0
    %v72 = vsel %vm55, %v26, 0
    %v75 = vsel %vm55, %v27, 0
    %v78 = vsel %vm55, %v28, 0
    %v81 = vsel %vm55, %v29, 0
    %v84 = vsel %vm55, %v30, 0
    %v87 = vsel %vm55, %v31, 0
    %v90 = vsel %vm55, %v32, 0
    %v93 = vsel %vm55, %v33, 0
    %v96 = vsel %vm55, %v34, 0
    %v99 = vsel %vm55, %v35, 0
    %v102 = vsel %vm55, %v36, 0
    %v105 = vsel %vm55, %v37, 0
    %v108 = vsel %vm55, %v38, 0
    %v111 = vsel %vm55, %v39, 0
    %v114 = vsel %vm55, %v40, 0
    %v117 = vsel %vm55, %v41, 0
    %v120 = vsel %vm55, %v42, 0
    %122 = vmatprep.subr.mxu0 0.0
    %123 = vmatpush1.xpose.msra.mxu0 %v63
    %124 = vmatprep.subr.mxu0 0.0
    %125 = vmatpush1.xpose.msra.mxu0 %v66
    %126 = vmatprep.subr.mxu0 0.0
    %127 = vmatpush1.xpose.msra.mxu0 %v69
    %128 = vmatprep.subr.mxu0 0.0
    %129 = vmatpush1.xpose.msra.mxu0 %v72
    %130 = vmatprep.subr.mxu0 0.0
    %131 = vmatpush1.xpose.msra.mxu0 %v75
    %132 = vmatprep.subr.mxu0 0.0
    %133 = vmatpush1.xpose.msra.mxu0 %v78
    %134 = vmatprep.subr.mxu0 0.0
    %135 = vmatpush1.xpose.msra.mxu0 %v81
    %136 = vmatprep.subr.mxu0 0.0
    %137 = vmatpush1.xpose.msra.mxu0 %v84
    %138 = vmatprep.subr.mxu0 0.0
    %139 = vmatpush1.xpose.msra.mxu0 %v87
    %140 = vmatprep.subr.mxu0 0.0
    %141 = vmatpush1.xpose.msra.mxu0 %v90
    %142 = vmatprep.subr.mxu0 0.0
    %143 = vmatpush1.xpose.msra.mxu0 %v93
    %144 = vmatprep.subr.mxu0 0.0
    %145 = vmatpush1.xpose.msra.mxu0 %v96
    %146 = vmatprep.subr.mxu0 0.0
    %147 = vmatpush1.xpose.msra.mxu0 %v99
    %148 = vmatprep.subr.mxu0 0.0
    %149 = vmatpush1.xpose.msra.mxu0 %v102
    %150 = vmatprep.subr.mxu0 0.0
    %151 = vmatpush1.xpose.msra.mxu0 %v105
    %152 = vmatprep.subr.mxu0 0.0
    %153 = vmatpush1.xpose.msra.mxu0 %v108
    %154 = vmatprep.subr.mxu0 0.0
    %155 = vmatpush1.xpose.msra.mxu0 %v111
    %156 = vmatprep.subr.mxu0 0.0
    %157 = vmatpush1.xpose.msra.mxu0 %v114
    %158 = vmatprep.subr.mxu0 0.0
    %159 = vmatpush1.xpose.msra.mxu0 %v117
    %160 = vmatprep.subr.mxu0 0.0
    %161 = vmatpush1.xpose.msra.mxu0 %v120
    %162 = vmatprep.subr.mxu0 0.0
    %163 = vmatpush1.xpose.msra.mxu0 0.0
    %164 = vmatprep.subr.mxu0 0.0
    %165 = vmatpush1.xpose.msra.mxu0 0.0
    %166 = vmatprep.subr.mxu0 0.0
    %167 = vmatpush1.xpose.msra.mxu0 0.0
    %168 = vmatprep.subr.mxu0 0.0
    %169 = vmatpush1.xpose.msra.mxu0 0.0
    %170 = vmatprep.subr.mxu0 0.0
    %171 = vmatpush1.xpose.msra.mxu0 0.0
    %172 = vmatprep.subr.mxu0 0.0
    %173 = vmatpush1.xpose.msra.mxu0 0.0
    %174 = vmatprep.subr.mxu0 0.0
    %175 = vmatpush1.xpose.msra.mxu0 0.0
    %176 = vmatprep.subr.mxu0 0.0
    %177 = vmatpush1.xpose.msra.mxu0 0.0
    %178 = vmatprep.subr.mxu0 0.0
    %179 = vmatpush1.xpose.msra.mxu0 0.0
    %180 = vmatprep.subr.mxu0 0.0
    %181 = vmatpush1.xpose.msra.mxu0 0.0
    %182 = vmatprep.subr.mxu0 0.0
    %183 = vmatpush1.xpose.msra.mxu0 0.0
    %184 = vmatprep.subr.mxu0 0.0
    %185 = vmatpush1.xpose.msra.mxu0 0.0
    %186 = vmatprep.mubr.f32.mxu0 0.0
    %187 = vmatmul.mubr.f32.gmra.mrb[0].mxu0 %v57
    %v188 = vpop.f32.mrb[0].mxu0
    %v189 = vadd.f32 %v48, %v188
    %v190 = vpop.f32.mrb[0].mxu0
    %v191 = vadd.f32 %v52, %v190
    %192 = vmatprep.mubr.f32.mxu0 0.0
    %193 = vmatmul.mubr.f32.gmra.mrb[0].mxu0 %v60
    %v194 = vpop.f32.mrb[0].mxu0
    %v195 = vadd.f32 %v48, %v194
    %v196 = vpop.f32.mrb[0].mxu0
    %v197 = vadd.f32 %v52, %v196
    %198 = vdwg.mxu0
    %201 = vrot.lane.b32.xlu0 %v191, 96
    %v202 = vpop.permute.xlu0 %201
    %203 = vrot.lane.b32.xlu0 %v197, 96
    %v204 = vpop.permute.xlu0 %203
    %v207 = vmul.f32 %v189, %v202
    %v208 = vmul.f32 %v195, %v204
    %v209 = vld [vmem:[%s3] sm:$0xff]
    %v210 = vld [vmem:[%s3 + $0x8] sm:$0xff]
    %v211 = vld [vmem:[%s3 + $0x10] sm:$0xff]
    %v212 = vld [vmem:[%s3 + $0x18] sm:$0xff]
    %v213 = vld [vmem:[%s3 + $0x20] sm:$0xff]
    %v214 = vld [vmem:[%s3 + $0x28] sm:$0xff]
    %v215 = vld [vmem:[%s3 + $0x30] sm:$0xff]
    %v216 = vld [vmem:[%s3 + $0x38] sm:$0xff]
    %v217 = vld [vmem:[%s4] sm:$0x1]
    %v219 = vlaneseq
    %v220 = vshrl.u32 %v219, 7
    %v221 = vsub.s32 0, %v220
    %v222 = vrot.slane %v217, %v221
    %226 = vrot.lane.b32.xlu0 %v207, 32
    %v227 = vpop.permute.xlu0 %226
    %228 = vrot.lane.b32.xlu0 %v208, 32
    %v229 = vpop.permute.xlu0 %228
    %v230 = vsel %vm55, %v227, 0
    %v232 = vsel %vm55, %v229, 0
    %v235 = vsel %vm55, %v209, 0
    %v238 = vsel %vm55, %v210, 0
    %v241 = vsel %vm55, %v211, 0
    %v244 = vsel %vm55, %v212, 0
    %v247 = vsel %vm55, %v213, 0
    %v250 = vsel %vm55, %v214, 0
    %v253 = vsel %vm55, %v215, 0
    %v256 = vsel %vm55, %v216, 0
    %258 = vmatprep.subr.mxu0 0.0
    %259 = vmatpush1.xpose.msra.mxu0 %v235
    %260 = vmatprep.subr.mxu0 0.0
    %261 = vmatpush1.xpose.msra.mxu0 %v238
    %262 = vmatprep.subr.mxu0 0.0
    %263 = vmatpush1.xpose.msra.mxu0 %v241
    %264 = vmatprep.subr.mxu0 0.0
    %265 = vmatpush1.xpose.msra.mxu0 %v244
    %266 = vmatprep.subr.mxu0 0.0
    %267 = vmatpush1.xpose.msra.mxu0 %v247
    %268 = vmatprep.subr.mxu0 0.0
    %269 = vmatpush1.xpose.msra.mxu0 %v250
    %270 = vmatprep.subr.mxu0 0.0
    %271 = vmatpush1.xpose.msra.mxu0 %v253
    %272 = vmatprep.subr.mxu0 0.0
    %273 = vmatpush1.xpose.msra.mxu0 %v256
    %274 = vmatprep.subr.mxu0 0.0
    %275 = vmatpush1.xpose.msra.mxu0 0.0
    %276 = vmatprep.subr.mxu0 0.0
    %277 = vmatpush1.xpose.msra.mxu0 0.0
    %278 = vmatprep.subr.mxu0 0.0
    %279 = vmatpush1.xpose.msra.mxu0 0.0
    %280 = vmatprep.subr.mxu0 0.0
    %281 = vmatpush1.xpose.msra.mxu0 0.0
    %282 = vmatprep.subr.mxu0 0.0
    %283 = vmatpush1.xpose.msra.mxu0 0.0
    %284 = vmatprep.subr.mxu0 0.0
    %285 = vmatpush1.xpose.msra.mxu0 0.0
    %286 = vmatprep.subr.mxu0 0.0
    %287 = vmatpush1.xpose.msra.mxu0 0.0
    %288 = vmatprep.subr.mxu0 0.0
    %289 = vmatpush1.xpose.msra.mxu0 0.0
    %290 = vmatprep.subr.mxu0 0.0
    %291 = vmatpush1.xpose.msra.mxu0 0.0
    %292 = vmatprep.subr.mxu0 0.0
    %293 = vmatpush1.xpose.msra.mxu0 0.0
    %294 = vmatprep.subr.mxu0 0.0
    %295 = vmatpush1.xpose.msra.mxu0 0.0
    %296 = vmatprep.subr.mxu0 0.0
    %297 = vmatpush1.xpose.msra.mxu0 0.0
    %298 = vmatprep.subr.mxu0 0.0
    %299 = vmatpush1.xpose.msra.mxu0 0.0
    %300 = vmatprep.subr.mxu0 0.0
    %301 = vmatpush1.xpose.msra.mxu0 0.0
    %302 = vmatprep.subr.mxu0 0.0
    %303 = vmatpush1.xpose.msra.mxu0 0.0
    %304 = vmatprep.subr.mxu0 0.0
    %305 = vmatpush1.xpose.msra.mxu0 0.0
    %306 = vmatprep.subr.mxu0 0.0
    %307 = vmatpush1.xpose.msra.mxu0 0.0
    %308 = vmatprep.subr.mxu0 0.0
    %309 = vmatpush1.xpose.msra.mxu0 0.0
    %310 = vmatprep.subr.mxu0 0.0
    %311 = vmatpush1.xpose.msra.mxu0 0.0
    %312 = vmatprep.subr.mxu0 0.0
    %313 = vmatpush1.xpose.msra.mxu0 0.0
    %314 = vmatprep.subr.mxu0 0.0
    %315 = vmatpush1.xpose.msra.mxu0 0.0
    %316 = vmatprep.subr.mxu0 0.0
    %317 = vmatpush1.xpose.msra.mxu0 0.0
    %318 = vmatprep.subr.mxu0 0.0
    %319 = vmatpush1.xpose.msra.mxu0 0.0
    %320 = vmatprep.subr.mxu0 0.0
    %321 = vmatpush1.xpose.msra.mxu0 0.0
    %322 = vmatprep.mubr.f32.mxu0 0.0
    %323 = vmatmul.mubr.f32.gmra.mrb[0].mxu0 %v230
    %v324 = vpop.f32.mrb[0].mxu0
    %v325 = vadd.f32 %v222, %v324
    %v326 = vpop.f32.mrb[0].mxu0
    %327 = vmatprep.mubr.f32.mxu0 0.0
    %328 = vmatmul.mubr.f32.gmra.mrb[0].mxu0 %v232
    %v329 = vpop.f32.mrb[0].mxu0
    %v330 = vadd.f32 %v222, %v329
    %v331 = vpop.f32.mrb[0].mxu0
    %332 = vdwg.mxu0
    %v333 = vxor.u32 %v325, 2147483648
    %v334 = vxor.u32 %v330, 2147483648
    %v335 = vmul.f32 %v333, 1.442695
    %v336 = vpow.pop %v335
    %v337 = vmul.f32 %v334, 1.442695
    %v338 = vpow.pop %v337
    %v339 = vadd.f32 %v336, 1.0
    %v340 = vadd.f32 %v338, 1.0
    %v341 = vrcp.pop %v339
    %v342 = vmul.f32 1.0, %v341
    %v343 = vrcp.pop %v340
    %v344 = vmul.f32 1.0, %v343
    %v345 = vmul.f32 %v189, %v342
    %v346 = vmul.f32 %v195, %v344
    %v347 = vmul.f32 %v345, 0.35355338
    %v348 = vmul.f32 %v346, 0.35355338
    %350 = vrot.lane.b32.xlu0 %v347, 120
    %v351 = vpop.permute.xlu0 %350
    %353 = vrot.lane.b32.xlu0 %v347, 112
    %v354 = vpop.permute.xlu0 %353
    %356 = vrot.lane.b32.xlu0 %v347, 104
    %v357 = vpop.permute.xlu0 %356
    %v359 = vcombine.low %v347, %v354
    %v360 = vcombine.high %v347, %v354
    %v362 = vunpack.c.l.s4 1983009808
    %v363 = vunpack.c.0.s8 %v362
    %v364 = vlaneseq
    %v365 = vshrl.u32 %v364, 7
    %v366 = vsub.s32 %v363, %v365
    %v367 = vrot.slane %v359, %v366
    %v369 = vunpack.c.l.s4 1983009808
    %v370 = vunpack.c.0.s8 %v369
    %v371 = vlaneseq
    %v372 = vshrl.u32 %v371, 7
    %v373 = vsub.s32 %v370, %v372
    %v374 = vrot.slane %v360, %v373
    %v375 = vcombine.low %v351, %v357
    %v376 = vcombine.high %v351, %v357
    %v378 = vunpack.c.l.s4 1983009808
    %v379 = vunpack.c.0.s8 %v378
    %v380 = vlaneseq
    %v381 = vshrl.u32 %v380, 7
    %v382 = vsub.s32 %v379, %v381
    %v383 = vrot.slane %v375, %v382
    %v385 = vunpack.c.l.s4 1983009808
    %v386 = vunpack.c.0.s8 %v385
    %v387 = vlaneseq
    %v388 = vshrl.u32 %v387, 7
    %v389 = vsub.s32 %v386, %v388
    %v390 = vrot.slane %v376, %v389
    %v391 = vcombine.low %v367, %v383
    %v392 = vcombine.high %v367, %v383
    %v394 = vunpack.c.l.s4 1934713408
    %v395 = vunpack.c.0.s8 %v394
    %v396 = vlaneseq
    %v397 = vshrl.u32 %v396, 7
    %v398 = vsub.s32 %v395, %v397
    %v399 = vrot.slane %v391, %v398
    %v401 = vunpack.c.l.s4 1934713408
    %v402 = vunpack.c.0.s8 %v401
    %v403 = vlaneseq
    %v404 = vshrl.u32 %v403, 7
    %v405 = vsub.s32 %v402, %v404
    %v406 = vrot.slane %v392, %v405
    %v407 = vcombine.low %v374, %v390
    %v408 = vcombine.high %v374, %v390
    %v410 = vunpack.c.l.s4 1934713408
    %v411 = vunpack.c.0.s8 %v410
    %v412 = vlaneseq
    %v413 = vshrl.u32 %v412, 7
    %v414 = vsub.s32 %v411, %v413
    %v415 = vrot.slane %v407, %v414
    %v417 = vunpack.c.l.s4 1934713408
    %v418 = vunpack.c.0.s8 %v417
    %v419 = vlaneseq
    %v420 = vshrl.u32 %v419, 7
    %v421 = vsub.s32 %v418, %v420
    %v422 = vrot.slane %v408, %v421
    %v423 = vcombine.high %v399, 0.0
    %v424 = vcombine.high %v406, 0.0
    %v425 = vcombine.high %v415, 0.0
    %v426 = vcombine.high %v422, 0.0
    %v427 = vcombine.low %v399, %v406
    %v429 = vunpack.c.l.s4 1983009808
    %v430 = vunpack.c.0.s8 %v429
    %v431 = vlaneseq
    %v432 = vshrl.u32 %v431, 7
    %v433 = vsub.s32 %v430, %v432
    %v434 = vrot.slane %v427, %v433
    %v435 = vcombine.low %v423, %v424
    %v437 = vunpack.c.l.s4 1983009808
    %v438 = vunpack.c.0.s8 %v437
    %v439 = vlaneseq
    %v440 = vshrl.u32 %v439, 7
    %v441 = vsub.s32 %v438, %v440
    %v442 = vrot.slane %v435, %v441
    %v443 = vcombine.low %v415, %v422
    %v445 = vunpack.c.l.s4 1983009808
    %v446 = vunpack.c.0.s8 %v445
    %v447 = vlaneseq
    %v448 = vshrl.u32 %v447, 7
    %v449 = vsub.s32 %v446, %v448
    %v450 = vrot.slane %v443, %v449
    %v451 = vcombine.low %v425, %v426
    %v453 = vunpack.c.l.s4 1983009808
    %v454 = vunpack.c.0.s8 %v453
    %v455 = vlaneseq
    %v456 = vshrl.u32 %v455, 7
    %v457 = vsub.s32 %v454, %v456
    %v458 = vrot.slane %v451, %v457
    %v459 = vcombine.low %v434, %v442
    %v460 = vcombine.high %v434, %v442
    %v462 = vunpack.c.l.s4 1934713408
    %v463 = vunpack.c.0.s8 %v462
    %v464 = vlaneseq
    %v465 = vshrl.u32 %v464, 7
    %v466 = vsub.s32 %v463, %v465
    %v467 = vrot.slane %v459, %v466
    %v469 = vunpack.c.l.s4 1934713408
    %v470 = vunpack.c.0.s8 %v469
    %v471 = vlaneseq
    %v472 = vshrl.u32 %v471, 7
    %v473 = vsub.s32 %v470, %v472
    %v474 = vrot.slane %v460, %v473
    %v475 = vcombine.low %v450, %v458
    %v476 = vcombine.high %v450, %v458
    %v478 = vunpack.c.l.s4 1934713408
    %v479 = vunpack.c.0.s8 %v478
    %v480 = vlaneseq
    %v481 = vshrl.u32 %v480, 7
    %v482 = vsub.s32 %v479, %v481
    %v483 = vrot.slane %v475, %v482
    %v485 = vunpack.c.l.s4 1934713408
    %v486 = vunpack.c.0.s8 %v485
    %v487 = vlaneseq
    %v488 = vshrl.u32 %v487, 7
    %v489 = vsub.s32 %v486, %v488
    %v490 = vrot.slane %v476, %v489
    %v491 = vcombine.low %v467, %v483
    %v492 = vcombine.high %v467, %v483
    %v493 = vcombine.low %v474, %v490
    %v494 = vcombine.high %v474, %v490
    %496 = vrot.lane.b32.xlu0 %v345, 120
    %v497 = vpop.permute.xlu0 %496
    %498 = vrot.lane.b32.xlu0 %v345, 112
    %v499 = vpop.permute.xlu0 %498
    %500 = vrot.lane.b32.xlu0 %v345, 104
    %v501 = vpop.permute.xlu0 %500
    %502 = vrot.lane.b32.xlu0 %v345, 96
    %v503 = vpop.permute.xlu0 %502
    %504 = vrot.lane.b32.xlu0 %v497, 96
    %v505 = vpop.permute.xlu0 %504
    %506 = vrot.lane.b32.xlu0 %v499, 96
    %v507 = vpop.permute.xlu0 %506
    %508 = vrot.lane.b32.xlu0 %v501, 96
    %v509 = vpop.permute.xlu0 %508
    %v514 = vcombine.low %v503, %v507
    %v515 = vcombine.high %v503, %v507
    %v517 = vunpack.c.l.s4 1983009808
    %v518 = vunpack.c.0.s8 %v517
    %v519 = vlaneseq
    %v520 = vshrl.u32 %v519, 7
    %v521 = vsub.s32 %v518, %v520
    %v522 = vrot.slane %v514, %v521
    %v524 = vunpack.c.l.s4 1983009808
    %v525 = vunpack.c.0.s8 %v524
    %v526 = vlaneseq
    %v527 = vshrl.u32 %v526, 7
    %v528 = vsub.s32 %v525, %v527
    %v529 = vrot.slane %v515, %v528
    %v530 = vcombine.low %v505, %v509
    %v531 = vcombine.high %v505, %v509
    %v533 = vunpack.c.l.s4 1983009808
    %v534 = vunpack.c.0.s8 %v533
    %v535 = vlaneseq
    %v536 = vshrl.u32 %v535, 7
    %v537 = vsub.s32 %v534, %v536
    %v538 = vrot.slane %v530, %v537
    %v540 = vunpack.c.l.s4 1983009808
    %v541 = vunpack.c.0.s8 %v540
    %v542 = vlaneseq
    %v543 = vshrl.u32 %v542, 7
    %v544 = vsub.s32 %v541, %v543
    %v545 = vrot.slane %v531, %v544
    %v546 = vcombine.low %v522, %v538
    %v547 = vcombine.high %v522, %v538
    %v549 = vunpack.c.l.s4 1934713408
    %v550 = vunpack.c.0.s8 %v549
    %v551 = vlaneseq
    %v552 = vshrl.u32 %v551, 7
    %v553 = vsub.s32 %v550, %v552
    %v554 = vrot.slane %v546, %v553
    %v556 = vunpack.c.l.s4 1934713408
    %v557 = vunpack.c.0.s8 %v556
    %v558 = vlaneseq
    %v559 = vshrl.u32 %v558, 7
    %v560 = vsub.s32 %v557, %v559
    %v561 = vrot.slane %v547, %v560
    %v562 = vcombine.low %v529, %v545
    %v563 = vcombine.high %v529, %v545
    %v565 = vunpack.c.l.s4 1934713408
    %v566 = vunpack.c.0.s8 %v565
    %v567 = vlaneseq
    %v568 = vshrl.u32 %v567, 7
    %v569 = vsub.s32 %v566, %v568
    %v570 = vrot.slane %v562, %v569
    %v572 = vunpack.c.l.s4 1934713408
    %v573 = vunpack.c.0.s8 %v572
    %v574 = vlaneseq
    %v575 = vshrl.u32 %v574, 7
    %v576 = vsub.s32 %v573, %v575
    %v577 = vrot.slane %v563, %v576
    %v578 = vcombine.high %v554, 0.0
    %v579 = vcombine.high %v561, 0.0
    %v580 = vcombine.high %v570, 0.0
    %v581 = vcombine.high %v577, 0.0
    %v582 = vcombine.low %v554, %v561
    %v584 = vunpack.c.l.s4 1983009808
    %v585 = vunpack.c.0.s8 %v584
    %v586 = vlaneseq
    %v587 = vshrl.u32 %v586, 7
    %v588 = vsub.s32 %v585, %v587
    %v589 = vrot.slane %v582, %v588
    %v590 = vcombine.low %v578, %v579
    %v592 = vunpack.c.l.s4 1983009808
    %v593 = vunpack.c.0.s8 %v592
    %v594 = vlaneseq
    %v595 = vshrl.u32 %v594, 7
    %v596 = vsub.s32 %v593, %v595
    %v597 = vrot.slane %v590, %v596
    %v598 = vcombine.low %v570, %v577
    %v600 = vunpack.c.l.s4 1983009808
    %v601 = vunpack.c.0.s8 %v600
    %v602 = vlaneseq
    %v603 = vshrl.u32 %v602, 7
    %v604 = vsub.s32 %v601, %v603
    %v605 = vrot.slane %v598, %v604
    %v606 = vcombine.low %v580, %v581
    %v608 = vunpack.c.l.s4 1983009808
    %v609 = vunpack.c.0.s8 %v608
    %v610 = vlaneseq
    %v611 = vshrl.u32 %v610, 7
    %v612 = vsub.s32 %v609, %v611
    %v613 = vrot.slane %v606, %v612
    %v614 = vcombine.low %v589, %v597
    %v615 = vcombine.high %v589, %v597
    %v617 = vunpack.c.l.s4 1934713408
    %v618 = vunpack.c.0.s8 %v617
    %v619 = vlaneseq
    %v620 = vshrl.u32 %v619, 7
    %v621 = vsub.s32 %v618, %v620
    %v622 = vrot.slane %v614, %v621
    %v624 = vunpack.c.l.s4 1934713408
    %v625 = vunpack.c.0.s8 %v624
    %v626 = vlaneseq
    %v627 = vshrl.u32 %v626, 7
    %v628 = vsub.s32 %v625, %v627
    %v629 = vrot.slane %v615, %v628
    %v630 = vcombine.low %v605, %v613
    %v631 = vcombine.high %v605, %v613
    %v633 = vunpack.c.l.s4 1934713408
    %v634 = vunpack.c.0.s8 %v633
    %v635 = vlaneseq
    %v636 = vshrl.u32 %v635, 7
    %v637 = vsub.s32 %v634, %v636
    %v638 = vrot.slane %v630, %v637
    %v640 = vunpack.c.l.s4 1934713408
    %v641 = vunpack.c.0.s8 %v640
    %v642 = vlaneseq
    %v643 = vshrl.u32 %v642, 7
    %v644 = vsub.s32 %v641, %v643
    %v645 = vrot.slane %v631, %v644
    %v646 = vcombine.low %v622, %v638
    %v647 = vcombine.high %v622, %v638
    %v648 = vcombine.low %v629, %v645
    %v649 = vcombine.high %v629, %v645
    %651 = vrot.lane.b32.xlu0 %v189, 120
    %v652 = vpop.permute.xlu0 %651
    %653 = vrot.lane.b32.xlu0 %v189, 112
    %v654 = vpop.permute.xlu0 %653
    %655 = vrot.lane.b32.xlu0 %v189, 104
    %v656 = vpop.permute.xlu0 %655
    %657 = vrot.lane.b32.xlu0 %v189, 64
    %v658 = vpop.permute.xlu0 %657
    %659 = vrot.lane.b32.xlu0 %v652, 64
    %v660 = vpop.permute.xlu0 %659
    %661 = vrot.lane.b32.xlu0 %v654, 64
    %v662 = vpop.permute.xlu0 %661
    %663 = vrot.lane.b32.xlu0 %v656, 64
    %v664 = vpop.permute.xlu0 %663
    %v669 = vcombine.low %v658, %v662
    %v670 = vcombine.high %v658, %v662
    %v672 = vunpack.c.l.s4 1983009808
    %v673 = vunpack.c.0.s8 %v672
    %v674 = vlaneseq
    %v675 = vshrl.u32 %v674, 7
    %v676 = vsub.s32 %v673, %v675
    %v677 = vrot.slane %v669, %v676
    %v679 = vunpack.c.l.s4 1983009808
    %v680 = vunpack.c.0.s8 %v679
    %v681 = vlaneseq
    %v682 = vshrl.u32 %v681, 7
    %v683 = vsub.s32 %v680, %v682
    %v684 = vrot.slane %v670, %v683
    %v685 = vcombine.low %v660, %v664
    %v686 = vcombine.high %v660, %v664
    %v688 = vunpack.c.l.s4 1983009808
    %v689 = vunpack.c.0.s8 %v688
    %v690 = vlaneseq
    %v691 = vshrl.u32 %v690, 7
    %v692 = vsub.s32 %v689, %v691
    %v693 = vrot.slane %v685, %v692
    %v695 = vunpack.c.l.s4 1983009808
    %v696 = vunpack.c.0.s8 %v695
    %v697 = vlaneseq
    %v698 = vshrl.u32 %v697, 7
    %v699 = vsub.s32 %v696, %v698
    %v700 = vrot.slane %v686, %v699
    %v701 = vcombine.low %v677, %v693
    %v702 = vcombine.high %v677, %v693
    %v704 = vunpack.c.l.s4 1934713408
    %v705 = vunpack.c.0.s8 %v704
    %v706 = vlaneseq
    %v707 = vshrl.u32 %v706, 7
    %v708 = vsub.s32 %v705, %v707
    %v709 = vrot.slane %v701, %v708
    %v711 = vunpack.c.l.s4 1934713408
    %v712 = vunpack.c.0.s8 %v711
    %v713 = vlaneseq
    %v714 = vshrl.u32 %v713, 7
    %v715 = vsub.s32 %v712, %v714
    %v716 = vrot.slane %v702, %v715
    %v717 = vcombine.low %v684, %v700
    %v718 = vcombine.high %v684, %v700
    %v720 = vunpack.c.l.s4 1934713408
    %v721 = vunpack.c.0.s8 %v720
    %v722 = vlaneseq
    %v723 = vshrl.u32 %v722, 7
    %v724 = vsub.s32 %v721, %v723
    %v725 = vrot.slane %v717, %v724
    %v727 = vunpack.c.l.s4 1934713408
    %v728 = vunpack.c.0.s8 %v727
    %v729 = vlaneseq
    %v730 = vshrl.u32 %v729, 7
    %v731 = vsub.s32 %v728, %v730
    %v732 = vrot.slane %v718, %v731
    %v733 = vcombine.high %v709, 0.0
    %v734 = vcombine.high %v716, 0.0
    %v735 = vcombine.high %v725, 0.0
    %v736 = vcombine.high %v732, 0.0
    %v737 = vcombine.low %v709, %v716
    %v739 = vunpack.c.l.s4 1983009808
    %v740 = vunpack.c.0.s8 %v739
    %v741 = vlaneseq
    %v742 = vshrl.u32 %v741, 7
    %v743 = vsub.s32 %v740, %v742
    %v744 = vrot.slane %v737, %v743
    %v745 = vcombine.low %v733, %v734
    %v747 = vunpack.c.l.s4 1983009808
    %v748 = vunpack.c.0.s8 %v747
    %v749 = vlaneseq
    %v750 = vshrl.u32 %v749, 7
    %v751 = vsub.s32 %v748, %v750
    %v752 = vrot.slane %v745, %v751
    %v753 = vcombine.low %v725, %v732
    %v755 = vunpack.c.l.s4 1983009808
    %v756 = vunpack.c.0.s8 %v755
    %v757 = vlaneseq
    %v758 = vshrl.u32 %v757, 7
    %v759 = vsub.s32 %v756, %v758
    %v760 = vrot.slane %v753, %v759
    %v761 = vcombine.low %v735, %v736
    %v763 = vunpack.c.l.s4 1983009808
    %v764 = vunpack.c.0.s8 %v763
    %v765 = vlaneseq
    %v766 = vshrl.u32 %v765, 7
    %v767 = vsub.s32 %v764, %v766
    %v768 = vrot.slane %v761, %v767
    %v769 = vcombine.low %v744, %v752
    %v770 = vcombine.high %v744, %v752
    %v772 = vunpack.c.l.s4 1934713408
    %v773 = vunpack.c.0.s8 %v772
    %v774 = vlaneseq
    %v775 = vshrl.u32 %v774, 7
    %v776 = vsub.s32 %v773, %v775
    %v777 = vrot.slane %v769, %v776
    %v779 = vunpack.c.l.s4 1934713408
    %v780 = vunpack.c.0.s8 %v779
    %v781 = vlaneseq
    %v782 = vshrl.u32 %v781, 7
    %v783 = vsub.s32 %v780, %v782
    %v784 = vrot.slane %v770, %v783
    %v785 = vcombine.low %v760, %v768
    %v786 = vcombine.high %v760, %v768
    %v788 = vunpack.c.l.s4 1934713408
    %v789 = vunpack.c.0.s8 %v788
    %v790 = vlaneseq
    %v791 = vshrl.u32 %v790, 7
    %v792 = vsub.s32 %v789, %v791
    %v793 = vrot.slane %v785, %v792
    %v795 = vunpack.c.l.s4 1934713408
    %v796 = vunpack.c.0.s8 %v795
    %v797 = vlaneseq
    %v798 = vshrl.u32 %v797, 7
    %v799 = vsub.s32 %v796, %v798
    %v800 = vrot.slane %v786, %v799
    %v801 = vcombine.low %v777, %v793
    %v802 = vcombine.high %v777, %v793
    %v803 = vcombine.low %v784, %v800
    %v804 = vcombine.high %v784, %v800
    %vm805 = vcmask 64512
    %v807 = vsel %vm805, %v491, 0
    %v810 = vsel %vm805, %v646, 0
    %812 = vmatprep.subr.mxu0 0.0
    %813 = vmatpush1.xpose.msra.mxu0 %v810
    %814 = vmatprep.subr.mxu0 0.0
    %815 = vmatpush1.xpose.msra.mxu0 0.0
    %816 = vmatprep.subr.mxu0 0.0
    %817 = vmatpush1.xpose.msra.mxu0 0.0
    %818 = vmatprep.subr.mxu0 0.0
    %819 = vmatpush1.xpose.msra.mxu0 0.0
    %820 = vmatprep.subr.mxu0 0.0
    %821 = vmatpush1.xpose.msra.mxu0 0.0
    %822 = vmatprep.subr.mxu0 0.0
    %823 = vmatpush1.xpose.msra.mxu0 0.0
    %824 = vmatprep.subr.mxu0 0.0
    %825 = vmatpush1.xpose.msra.mxu0 0.0
    %826 = vmatprep.subr.mxu0 0.0
    %827 = vmatpush1.xpose.msra.mxu0 0.0
    %828 = vmatprep.subr.mxu0 0.0
    %829 = vmatpush1.xpose.msra.mxu0 0.0
    %830 = vmatprep.subr.mxu0 0.0
    %831 = vmatpush1.xpose.msra.mxu0 0.0
    %832 = vmatprep.subr.mxu0 0.0
    %833 = vmatpush1.xpose.msra.mxu0 0.0
    %834 = vmatprep.subr.mxu0 0.0
    %835 = vmatpush1.xpose.msra.mxu0 0.0
    %836 = vmatprep.subr.mxu0 0.0
    %837 = vmatpush1.xpose.msra.mxu0 0.0
    %838 = vmatprep.subr.mxu0 0.0
    %839 = vmatpush1.xpose.msra.mxu0 0.0
    %840 = vmatprep.subr.mxu0 0.0
    %841 = vmatpush1.xpose.msra.mxu0 0.0
    %842 = vmatprep.subr.mxu0 0.0
    %843 = vmatpush1.xpose.msra.mxu0 0.0
    %844 = vmatprep.subr.mxu0 0.0
    %845 = vmatpush1.xpose.msra.mxu0 0.0
    %846 = vmatprep.subr.mxu0 0.0
    %847 = vmatpush1.xpose.msra.mxu0 0.0
    %848 = vmatprep.subr.mxu0 0.0
    %849 = vmatpush1.xpose.msra.mxu0 0.0
    %850 = vmatprep.subr.mxu0 0.0
    %851 = vmatpush1.xpose.msra.mxu0 0.0
    %852 = vmatprep.subr.mxu0 0.0
    %853 = vmatpush1.xpose.msra.mxu0 0.0
    %854 = vmatprep.subr.mxu0 0.0
    %855 = vmatpush1.xpose.msra.mxu0 0.0
    %856 = vmatprep.subr.mxu0 0.0
    %857 = vmatpush1.xpose.msra.mxu0 0.0
    %858 = vmatprep.subr.mxu0 0.0
    %859 = vmatpush1.xpose.msra.mxu0 0.0
    %860 = vmatprep.subr.mxu0 0.0
    %861 = vmatpush1.xpose.msra.mxu0 0.0
    %862 = vmatprep.subr.mxu0 0.0
    %863 = vmatpush1.xpose.msra.mxu0 0.0
    %864 = vmatprep.subr.mxu0 0.0
    %865 = vmatpush1.xpose.msra.mxu0 0.0
    %866 = vmatprep.subr.mxu0 0.0
    %867 = vmatpush1.xpose.msra.mxu0 0.0
    %868 = vmatprep.subr.mxu0 0.0
    %869 = vmatpush1.xpose.msra.mxu0 0.0
    %870 = vmatprep.subr.mxu0 0.0
    %871 = vmatpush1.xpose.msra.mxu0 0.0
    %872 = vmatprep.subr.mxu0 0.0
    %873 = vmatpush1.xpose.msra.mxu0 0.0
    %874 = vmatprep.subr.mxu0 0.0
    %875 = vmatpush1.xpose.msra.mxu0 0.0
    %876 = vmatprep.mubr.f32.mxu0 0.0
    %877 = vmatmul.mubr.f32.gmra.mrb[0].mxu0 %v807
    %v878 = vpop.f32.mrb[0].mxu0
    %v879 = vadd.f32 0.0, %v878
    %v880 = vpop.f32.mrb[0].mxu0
    %881 = vdwg.mxu0
    %v883 = vsel %vm805, %v492, 0
    %v886 = vsel %vm805, %v647, 0
    %888 = vmatprep.subr.mxu0 0.0
    %889 = vmatpush1.xpose.msra.mxu0 %v886
    %890 = vmatprep.subr.mxu0 0.0
    %891 = vmatpush1.xpose.msra.mxu0 0.0
    %892 = vmatprep.subr.mxu0 0.0
    %893 = vmatpush1.xpose.msra.mxu0 0.0
    %894 = vmatprep.subr.mxu0 0.0
    %895 = vmatpush1.xpose.msra.mxu0 0.0
    %896 = vmatprep.subr.mxu0 0.0
    %897 = vmatpush1.xpose.msra.mxu0 0.0
    %898 = vmatprep.subr.mxu0 0.0
    %899 = vmatpush1.xpose.msra.mxu0 0.0
    %900 = vmatprep.subr.mxu0 0.0
    %901 = vmatpush1.xpose.msra.mxu0 0.0
    %902 = vmatprep.subr.mxu0 0.0
    %903 = vmatpush1.xpose.msra.mxu0 0.0
    %904 = vmatprep.subr.mxu0 0.0
    %905 = vmatpush1.xpose.msra.mxu0 0.0
    %906 = vmatprep.subr.mxu0 0.0
    %907 = vmatpush1.xpose.msra.mxu0 0.0
    %908 = vmatprep.subr.mxu0 0.0
    %909 = vmatpush1.xpose.msra.mxu0 0.0
    %910 = vmatprep.subr.mxu0 0.0
    %911 = vmatpush1.xpose.msra.mxu0 0.0
    %912 = vmatprep.subr.mxu0 0.0
    %913 = vmatpush1.xpose.msra.mxu0 0.0
    %914 = vmatprep.subr.mxu0 0.0
    %915 = vmatpush1.xpose.msra.mxu0 0.0
    %916 = vmatprep.subr.mxu0 0.0
    %917 = vmatpush1.xpose.msra.mxu0 0.0
    %918 = vmatprep.subr.mxu0 0.0
    %919 = vmatpush1.xpose.msra.mxu0 0.0
    %920 = vmatprep.subr.mxu0 0.0
    %921 = vmatpush1.xpose.msra.mxu0 0.0
    %922 = vmatprep.subr.mxu0 0.0
    %923 = vmatpush1.xpose.msra.mxu0 0.0
    %924 = vmatprep.subr.mxu0 0.0
    %925 = vmatpush1.xpose.msra.mxu0 0.0
    %926 = vmatprep.subr.mxu0 0.0
    %927 = vmatpush1.xpose.msra.mxu0 0.0
    %928 = vmatprep.subr.mxu0 0.0
    %929 = vmatpush1.xpose.msra.mxu0 0.0
    %930 = vmatprep.subr.mxu0 0.0
    %931 = vmatpush1.xpose.msra.mxu0 0.0
    %932 = vmatprep.subr.mxu0 0.0
    %933 = vmatpush1.xpose.msra.mxu0 0.0
    %934 = vmatprep.subr.mxu0 0.0
    %935 = vmatpush1.xpose.msra.mxu0 0.0
    %936 = vmatprep.subr.mxu0 0.0
    %937 = vmatpush1.xpose.msra.mxu0 0.0
    %938 = vmatprep.subr.mxu0 0.0
    %939 = vmatpush1.xpose.msra.mxu0 0.0
    %940 = vmatprep.subr.mxu0 0.0
    %941 = vmatpush1.xpose.msra.mxu0 0.0
    %942 = vmatprep.subr.mxu0 0.0
    %943 = vmatpush1.xpose.msra.mxu0 0.0
    %944 = vmatprep.subr.mxu0 0.0
    %945 = vmatpush1.xpose.msra.mxu0 0.0
    %946 = vmatprep.subr.mxu0 0.0
    %947 = vmatpush1.xpose.msra.mxu0 0.0
    %948 = vmatprep.subr.mxu0 0.0
    %949 = vmatpush1.xpose.msra.mxu0 0.0
    %950 = vmatprep.subr.mxu0 0.0
    %951 = vmatpush1.xpose.msra.mxu0 0.0
    %952 = vmatprep.mubr.f32.mxu0 0.0
    %953 = vmatmul.mubr.f32.gmra.mrb[0].mxu0 %v883
    %v954 = vpop.f32.mrb[0].mxu0
    %v955 = vadd.f32 0.0, %v954
    %v956 = vpop.f32.mrb[0].mxu0
    %957 = vdwg.mxu0
    %v959 = vsel %vm805, %v493, 0
    %v962 = vsel %vm805, %v648, 0
    %964 = vmatprep.subr.mxu0 0.0
    %965 = vmatpush1.xpose.msra.mxu0 %v962
    %966 = vmatprep.subr.mxu0 0.0
    %967 = vmatpush1.xpose.msra.mxu0 0.0
    %968 = vmatprep.subr.mxu0 0.0
    %969 = vmatpush1.xpose.msra.mxu0 0.0
    %970 = vmatprep.subr.mxu0 0.0
    %971 = vmatpush1.xpose.msra.mxu0 0.0
    %972 = vmatprep.subr.mxu0 0.0
    %973 = vmatpush1.xpose.msra.mxu0 0.0
    %974 = vmatprep.subr.mxu0 0.0
    %975 = vmatpush1.xpose.msra.mxu0 0.0
    %976 = vmatprep.subr.mxu0 0.0
    %977 = vmatpush1.xpose.msra.mxu0 0.0
    %978 = vmatprep.subr.mxu0 0.0
    %979 = vmatpush1.xpose.msra.mxu0 0.0
    %980 = vmatprep.subr.mxu0 0.0
    %981 = vmatpush1.xpose.msra.mxu0 0.0
    %982 = vmatprep.subr.mxu0 0.0
    %983 = vmatpush1.xpose.msra.mxu0 0.0
    %984 = vmatprep.subr.mxu0 0.0
    %985 = vmatpush1.xpose.msra.mxu0 0.0
    %986 = vmatprep.subr.mxu0 0.0
    %987 = vmatpush1.xpose.msra.mxu0 0.0
    %988 = vmatprep.subr.mxu0 0.0
    %989 = vmatpush1.xpose.msra.mxu0 0.0
    %990 = vmatprep.subr.mxu0 0.0
    %991 = vmatpush1.xpose.msra.mxu0 0.0
    %992 = vmatprep.subr.mxu0 0.0
    %993 = vmatpush1.xpose.msra.mxu0 0.0
    %994 = vmatprep.subr.mxu0 0.0
    %995 = vmatpush1.xpose.msra.mxu0 0.0
    %996 = vmatprep.subr.mxu0 0.0
    %997 = vmatpush1.xpose.msra.mxu0 0.0
    %998 = vmatprep.subr.mxu0 0.0
    %999 = vmatpush1.xpose.msra.mxu0 0.0
    %1000 = vmatprep.subr.mxu0 0.0
    %1001 = vmatpush1.xpose.msra.mxu0 0.0
    %1002 = vmatprep.subr.mxu0 0.0
    %1003 = vmatpush1.xpose.msra.mxu0 0.0
    %1004 = vmatprep.subr.mxu0 0.0
    %1005 = vmatpush1.xpose.msra.mxu0 0.0
    %1006 = vmatprep.subr.mxu0 0.0
    %1007 = vmatpush1.xpose.msra.mxu0 0.0
    %1008 = vmatprep.subr.mxu0 0.0
    %1009 = vmatpush1.xpose.msra.mxu0 0.0
    %1010 = vmatprep.subr.mxu0 0.0
    %1011 = vmatpush1.xpose.msra.mxu0 0.0
    %1012 = vmatprep.subr.mxu0 0.0
    %1013 = vmatpush1.xpose.msra.mxu0 0.0
    %1014 = vmatprep.subr.mxu0 0.0
    %1015 = vmatpush1.xpose.msra.mxu0 0.0
    %1016 = vmatprep.subr.mxu0 0.0
    %1017 = vmatpush1.xpose.msra.mxu0 0.0
    %1018 = vmatprep.subr.mxu0 0.0
    %1019 = vmatpush1.xpose.msra.mxu0 0.0
    %1020 = vmatprep.subr.mxu0 0.0
    %1021 = vmatpush1.xpose.msra.mxu0 0.0
    %1022 = vmatprep.subr.mxu0 0.0
    %1023 = vmatpush1.xpose.msra.mxu0 0.0
    %1024 = vmatprep.subr.mxu0 0.0
    %1025 = vmatpush1.xpose.msra.mxu0 0.0
    %1026 = vmatprep.subr.mxu0 0.0
    %1027 = vmatpush1.xpose.msra.mxu0 0.0
    %1028 = vmatprep.mubr.f32.mxu0 0.0
    %1029 = vmatmul.mubr.f32.gmra.mrb[0].mxu0 %v959
    %v1030 = vpop.f32.mrb[0].mxu0
    %v1031 = vadd.f32 0.0, %v1030
    %v1032 = vpop.f32.mrb[0].mxu0
    %1033 = vdwg.mxu0
    %v1035 = vsel %vm805, %v494, 0
    %v1038 = vsel %vm805, %v649, 0
    %1040 = vmatprep.subr.mxu0 0.0
    %1041 = vmatpush1.xpose.msra.mxu0 %v1038
    %1042 = vmatprep.subr.mxu0 0.0
    %1043 = vmatpush1.xpose.msra.mxu0 0.0
    %1044 = vmatprep.subr.mxu0 0.0
    %1045 = vmatpush1.xpose.msra.mxu0 0.0
    %1046 = vmatprep.subr.mxu0 0.0
    %1047 = vmatpush1.xpose.msra.mxu0 0.0
    %1048 = vmatprep.subr.mxu0 0.0
    %1049 = vmatpush1.xpose.msra.mxu0 0.0
    %1050 = vmatprep.subr.mxu0 0.0
    %1051 = vmatpush1.xpose.msra.mxu0 0.0
    %1052 = vmatprep.subr.mxu0 0.0
    %1053 = vmatpush1.xpose.msra.mxu0 0.0
    %1054 = vmatprep.subr.mxu0 0.0
    %1055 = vmatpush1.xpose.msra.mxu0 0.0
    %1056 = vmatprep.subr.mxu0 0.0
    %1057 = vmatpush1.xpose.msra.mxu0 0.0
    %1058 = vmatprep.subr.mxu0 0.0
    %1059 = vmatpush1.xpose.msra.mxu0 0.0
    %1060 = vmatprep.subr.mxu0 0.0
    %1061 = vmatpush1.xpose.msra.mxu0 0.0
    %1062 = vmatprep.subr.mxu0 0.0
    %1063 = vmatpush1.xpose.msra.mxu0 0.0
    %1064 = vmatprep.subr.mxu0 0.0
    %1065 = vmatpush1.xpose.msra.mxu0 0.0
    %1066 = vmatprep.subr.mxu0 0.0
    %1067 = vmatpush1.xpose.msra.mxu0 0.0
    %1068 = vmatprep.subr.mxu0 0.0
    %1069 = vmatpush1.xpose.msra.mxu0 0.0
    %1070 = vmatprep.subr.mxu0 0.0
    %1071 = vmatpush1.xpose.msra.mxu0 0.0
    %1072 = vmatprep.subr.mxu0 0.0
    %1073 = vmatpush1.xpose.msra.mxu0 0.0
    %1074 = vmatprep.subr.mxu0 0.0
    %1075 = vmatpush1.xpose.msra.mxu0 0.0
    %1076 = vmatprep.subr.mxu0 0.0
    %1077 = vmatpush1.xpose.msra.mxu0 0.0
    %1078 = vmatprep.subr.mxu0 0.0
    %1079 = vmatpush1.xpose.msra.mxu0 0.0
    %1080 = vmatprep.subr.mxu0 0.0
    %1081 = vmatpush1.xpose.msra.mxu0 0.0
    %1082 = vmatprep.subr.mxu0 0.0
    %1083 = vmatpush1.xpose.msra.mxu0 0.0
    %1084 = vmatprep.subr.mxu0 0.0
    %1085 = vmatpush1.xpose.msra.mxu0 0.0
    %1086 = vmatprep.subr.mxu0 0.0
    %1087 = vmatpush1.xpose.msra.mxu0 0.0
    %1088 = vmatprep.subr.mxu0 0.0
    %1089 = vmatpush1.xpose.msra.mxu0 0.0
    %1090 = vmatprep.subr.mxu0 0.0
    %1091 = vmatpush1.xpose.msra.mxu0 0.0
    %1092 = vmatprep.subr.mxu0 0.0
    %1093 = vmatpush1.xpose.msra.mxu0 0.0
    %1094 = vmatprep.subr.mxu0 0.0
    %1095 = vmatpush1.xpose.msra.mxu0 0.0
    %1096 = vmatprep.subr.mxu0 0.0
    %1097 = vmatpush1.xpose.msra.mxu0 0.0
    %1098 = vmatprep.subr.mxu0 0.0
    %1099 = vmatpush1.xpose.msra.mxu0 0.0
    %1100 = vmatprep.subr.mxu0 0.0
    %1101 = vmatpush1.xpose.msra.mxu0 0.0
    %1102 = vmatprep.subr.mxu0 0.0
    %1103 = vmatpush1.xpose.msra.mxu0 0.0
    %1104 = vmatprep.mubr.f32.mxu0 0.0
    %1105 = vmatmul.mubr.f32.gmra.mrb[0].mxu0 %v1035
    %v1106 = vpop.f32.mrb[0].mxu0
    %v1107 = vadd.f32 0.0, %v1106
    %v1108 = vpop.f32.mrb[0].mxu0
    %1109 = vdwg.mxu0
    %v1110 = vsel %vm805, %v879, -inf
    %1111 = vmax.xlane.f32.xlu0 %v1110
    %v1112 = vpop.xlane.xlu0 %1111
    %v1113 = vsel %vm805, %v955, -inf
    %1114 = vmax.xlane.f32.xlu0 %v1113
    %v1115 = vpop.xlane.xlu0 %1114
    %v1116 = vsel %vm805, %v1031, -inf
    %1117 = vmax.xlane.f32.xlu0 %v1116
    %v1118 = vpop.xlane.xlu0 %1117
    %v1119 = vsel %vm805, %v1107, -inf
    %1120 = vmax.xlane.f32.xlu0 %v1119
    %v1121 = vpop.xlane.xlu0 %1120
    %v1122 = vsub.f32 %v879, %v1112
    %v1123 = vsub.f32 %v955, %v1115
    %v1124 = vsub.f32 %v1031, %v1118
    %v1125 = vsub.f32 %v1107, %v1121
    %v1126 = vmul.f32 %v1122, 1.442695
    %v1127 = vpow.pop %v1126
    %v1128 = vmul.f32 %v1123, 1.442695
    %v1129 = vpow.pop %v1128
    %v1130 = vmul.f32 %v1124, 1.442695
    %v1131 = vpow.pop %v1130
    %v1132 = vmul.f32 %v1125, 1.442695
    %v1133 = vpow.pop %v1132
    %v1134 = vsel %vm805, %v1127, 0.0
    %1135 = vadd.xlane.f32.xlu0 %v1134
    %v1136 = vpop.xlane.xlu0 %1135
    %v1137 = vsel %vm805, %v1129, 0.0
    %1138 = vadd.xlane.f32.xlu0 %v1137
    %v1139 = vpop.xlane.xlu0 %1138
    %v1140 = vsel %vm805, %v1131, 0.0
    %1141 = vadd.xlane.f32.xlu0 %v1140
    %v1142 = vpop.xlane.xlu0 %1141
    %v1143 = vsel %vm805, %v1133, 0.0
    %1144 = vadd.xlane.f32.xlu0 %v1143
    %v1145 = vpop.xlane.xlu0 %1144
    %v1146 = vrcp.pop %v1136
    %v1147 = vrcp.pop %v1139
    %v1148 = vrcp.pop %v1142
    %v1149 = vrcp.pop %v1145
    %v1150 = vmul.f32 %v1127, %v1146
    %v1151 = vmul.f32 %v1129, %v1147
    %v1152 = vmul.f32 %v1131, %v1148
    %v1153 = vmul.f32 %v1133, %v1149
    %v1155 = vsel %vm805, %v1150, 0
    %1157 = vmatprep.subr.mxu0 0.0
    %1158 = vmatpush1.msra.mxu0 %v801
    %1159 = vmatprep.subr.mxu0 0.0
    %1160 = vmatpush1.msra.mxu0 0.0
    %1161 = vmatprep.subr.mxu0 0.0
    %1162 = vmatpush1.msra.mxu0 0.0
    %1163 = vmatprep.subr.mxu0 0.0
    %1164 = vmatpush1.msra.mxu0 0.0
    %1165 = vmatprep.subr.mxu0 0.0
    %1166 = vmatpush1.msra.mxu0 0.0
    %1167 = vmatprep.subr.mxu0 0.0
    %1168 = vmatpush1.msra.mxu0 0.0
    %1169 = vmatprep.subr.mxu0 0.0
    %1170 = vmatpush1.msra.mxu0 0.0
    %1171 = vmatprep.subr.mxu0 0.0
    %1172 = vmatpush1.msra.mxu0 0.0
    %1173 = vmatprep.subr.mxu0 0.0
    %1174 = vmatpush1.msra.mxu0 0.0
    %1175 = vmatprep.subr.mxu0 0.0
    %1176 = vmatpush1.msra.mxu0 0.0
    %1177 = vmatprep.subr.mxu0 0.0
    %1178 = vmatpush1.msra.mxu0 0.0
    %1179 = vmatprep.subr.mxu0 0.0
    %1180 = vmatpush1.msra.mxu0 0.0
    %1181 = vmatprep.subr.mxu0 0.0
    %1182 = vmatpush1.msra.mxu0 0.0
    %1183 = vmatprep.subr.mxu0 0.0
    %1184 = vmatpush1.msra.mxu0 0.0
    %1185 = vmatprep.subr.mxu0 0.0
    %1186 = vmatpush1.msra.mxu0 0.0
    %1187 = vmatprep.subr.mxu0 0.0
    %1188 = vmatpush1.msra.mxu0 0.0
    %1189 = vmatprep.subr.mxu0 0.0
    %1190 = vmatpush1.msra.mxu0 0.0
    %1191 = vmatprep.subr.mxu0 0.0
    %1192 = vmatpush1.msra.mxu0 0.0
    %1193 = vmatprep.subr.mxu0 0.0
    %1194 = vmatpush1.msra.mxu0 0.0
    %1195 = vmatprep.subr.mxu0 0.0
    %1196 = vmatpush1.msra.mxu0 0.0
    %1197 = vmatprep.subr.mxu0 0.0
    %1198 = vmatpush1.msra.mxu0 0.0
    %1199 = vmatprep.subr.mxu0 0.0
    %1200 = vmatpush1.msra.mxu0 0.0
    %1201 = vmatprep.subr.mxu0 0.0
    %1202 = vmatpush1.msra.mxu0 0.0
    %1203 = vmatprep.subr.mxu0 0.0
    %1204 = vmatpush1.msra.mxu0 0.0
    %1205 = vmatprep.subr.mxu0 0.0
    %1206 = vmatpush1.msra.mxu0 0.0
    %1207 = vmatprep.subr.mxu0 0.0
    %1208 = vmatpush1.msra.mxu0 0.0
    %1209 = vmatprep.subr.mxu0 0.0
    %1210 = vmatpush1.msra.mxu0 0.0
    %1211 = vmatprep.subr.mxu0 0.0
    %1212 = vmatpush1.msra.mxu0 0.0
    %1213 = vmatprep.subr.mxu0 0.0
    %1214 = vmatpush1.msra.mxu0 0.0
    %1215 = vmatprep.subr.mxu0 0.0
    %1216 = vmatpush1.msra.mxu0 0.0
    %1217 = vmatprep.subr.mxu0 0.0
    %1218 = vmatpush1.msra.mxu0 0.0
    %1219 = vmatprep.subr.mxu0 0.0
    %1220 = vmatpush1.msra.mxu0 0.0
    %1221 = vmatprep.mubr.f32.mxu0 0.0
    %1222 = vmatmul.mubr.f32.gmra.mrb[0].mxu0 %v1155
    %v1223 = vpop.f32.mrb[0].mxu0
    %v1224 = vadd.f32 0.0, %v1223
    %v1225 = vpop.f32.mrb[0].mxu0
    %1226 = vdwg.mxu0
    %v1228 = vsel %vm805, %v1151, 0
    %1230 = vmatprep.subr.mxu0 0.0
    %1231 = vmatpush1.msra.mxu0 %v802
    %1232 = vmatprep.subr.mxu0 0.0
    %1233 = vmatpush1.msra.mxu0 0.0
    %1234 = vmatprep.subr.mxu0 0.0
    %1235 = vmatpush1.msra.mxu0 0.0
    %1236 = vmatprep.subr.mxu0 0.0
    %1237 = vmatpush1.msra.mxu0 0.0
    %1238 = vmatprep.subr.mxu0 0.0
    %1239 = vmatpush1.msra.mxu0 0.0
    %1240 = vmatprep.subr.mxu0 0.0
    %1241 = vmatpush1.msra.mxu0 0.0
    %1242 = vmatprep.subr.mxu0 0.0
    %1243 = vmatpush1.msra.mxu0 0.0
    %1244 = vmatprep.subr.mxu0 0.0
    %1245 = vmatpush1.msra.mxu0 0.0
    %1246 = vmatprep.subr.mxu0 0.0
    %1247 = vmatpush1.msra.mxu0 0.0
    %1248 = vmatprep.subr.mxu0 0.0
    %1249 = vmatpush1.msra.mxu0 0.0
    %1250 = vmatprep.subr.mxu0 0.0
    %1251 = vmatpush1.msra.mxu0 0.0
    %1252 = vmatprep.subr.mxu0 0.0
    %1253 = vmatpush1.msra.mxu0 0.0
    %1254 = vmatprep.subr.mxu0 0.0
    %1255 = vmatpush1.msra.mxu0 0.0
    %1256 = vmatprep.subr.mxu0 0.0
    %1257 = vmatpush1.msra.mxu0 0.0
    %1258 = vmatprep.subr.mxu0 0.0
    %1259 = vmatpush1.msra.mxu0 0.0
    %1260 = vmatprep.subr.mxu0 0.0
    %1261 = vmatpush1.msra.mxu0 0.0
    %1262 = vmatprep.subr.mxu0 0.0
    %1263 = vmatpush1.msra.mxu0 0.0
    %1264 = vmatprep.subr.mxu0 0.0
    %1265 = vmatpush1.msra.mxu0 0.0
    %1266 = vmatprep.subr.mxu0 0.0
    %1267 = vmatpush1.msra.mxu0 0.0
    %1268 = vmatprep.subr.mxu0 0.0
    %1269 = vmatpush1.msra.mxu0 0.0
    %1270 = vmatprep.subr.mxu0 0.0
    %1271 = vmatpush1.msra.mxu0 0.0
    %1272 = vmatprep.subr.mxu0 0.0
    %1273 = vmatpush1.msra.mxu0 0.0
    %1274 = vmatprep.subr.mxu0 0.0
    %1275 = vmatpush1.msra.mxu0 0.0
    %1276 = vmatprep.subr.mxu0 0.0
    %1277 = vmatpush1.msra.mxu0 0.0
    %1278 = vmatprep.subr.mxu0 0.0
    %1279 = vmatpush1.msra.mxu0 0.0
    %1280 = vmatprep.subr.mxu0 0.0
    %1281 = vmatpush1.msra.mxu0 0.0
    %1282 = vmatprep.subr.mxu0 0.0
    %1283 = vmatpush1.msra.mxu0 0.0
    %1284 = vmatprep.subr.mxu0 0.0
    %1285 = vmatpush1.msra.mxu0 0.0
    %1286 = vmatprep.subr.mxu0 0.0
    %1287 = vmatpush1.msra.mxu0 0.0
    %1288 = vmatprep.subr.mxu0 0.0
    %1289 = vmatpush1.msra.mxu0 0.0
    %1290 = vmatprep.subr.mxu0 0.0
    %1291 = vmatpush1.msra.mxu0 0.0
    %1292 = vmatprep.subr.mxu0 0.0
    %1293 = vmatpush1.msra.mxu0 0.0
    %1294 = vmatprep.mubr.f32.mxu0 0.0
    %1295 = vmatmul.mubr.f32.gmra.mrb[0].mxu0 %v1228
    %v1296 = vpop.f32.mrb[0].mxu0
    %v1297 = vadd.f32 0.0, %v1296
    %v1298 = vpop.f32.mrb[0].mxu0
    %1299 = vdwg.mxu0
    %v1301 = vsel %vm805, %v1152, 0
    %1303 = vmatprep.subr.mxu0 0.0
    %1304 = vmatpush1.msra.mxu0 %v803
    %1305 = vmatprep.subr.mxu0 0.0
    %1306 = vmatpush1.msra.mxu0 0.0
    %1307 = vmatprep.subr.mxu0 0.0
    %1308 = vmatpush1.msra.mxu0 0.0
    %1309 = vmatprep.subr.mxu0 0.0
    %1310 = vmatpush1.msra.mxu0 0.0
    %1311 = vmatprep.subr.mxu0 0.0
    %1312 = vmatpush1.msra.mxu0 0.0
    %1313 = vmatprep.subr.mxu0 0.0
    %1314 = vmatpush1.msra.mxu0 0.0
    %1315 = vmatprep.subr.mxu0 0.0
    %1316 = vmatpush1.msra.mxu0 0.0
    %1317 = vmatprep.subr.mxu0 0.0
    %1318 = vmatpush1.msra.mxu0 0.0
    %1319 = vmatprep.subr.mxu0 0.0
    %1320 = vmatpush1.msra.mxu0 0.0
    %1321 = vmatprep.subr.mxu0 0.0
    %1322 = vmatpush1.msra.mxu0 0.0
    %1323 = vmatprep.subr.mxu0 0.0
    %1324 = vmatpush1.msra.mxu0 0.0
    %1325 = vmatprep.subr.mxu0 0.0
    %1326 = vmatpush1.msra.mxu0 0.0
    %1327 = vmatprep.subr.mxu0 0.0
    %1328 = vmatpush1.msra.mxu0 0.0
    %1329 = vmatprep.subr.mxu0 0.0
    %1330 = vmatpush1.msra.mxu0 0.0
    %1331 = vmatprep.subr.mxu0 0.0
    %1332 = vmatpush1.msra.mxu0 0.0
    %1333 = vmatprep.subr.mxu0 0.0
    %1334 = vmatpush1.msra.mxu0 0.0
    %1335 = vmatprep.subr.mxu0 0.0
    %1336 = vmatpush1.msra.mxu0 0.0
    %1337 = vmatprep.subr.mxu0 0.0
    %1338 = vmatpush1.msra.mxu0 0.0
    %1339 = vmatprep.subr.mxu0 0.0
    %1340 = vmatpush1.msra.mxu0 0.0
    %1341 = vmatprep.subr.mxu0 0.0
    %1342 = vmatpush1.msra.mxu0 0.0
    %1343 = vmatprep.subr.mxu0 0.0
    %1344 = vmatpush1.msra.mxu0 0.0
    %1345 = vmatprep.subr.mxu0 0.0
    %1346 = vmatpush1.msra.mxu0 0.0
    %1347 = vmatprep.subr.mxu0 0.0
    %1348 = vmatpush1.msra.mxu0 0.0
    %1349 = vmatprep.subr.mxu0 0.0
    %1350 = vmatpush1.msra.mxu0 0.0
    %1351 = vmatprep.subr.mxu0 0.0
    %1352 = vmatpush1.msra.mxu0 0.0
    %1353 = vmatprep.subr.mxu0 0.0
    %1354 = vmatpush1.msra.mxu0 0.0
    %1355 = vmatprep.subr.mxu0 0.0
    %1356 = vmatpush1.msra.mxu0 0.0
    %1357 = vmatprep.subr.mxu0 0.0
    %1358 = vmatpush1.msra.mxu0 0.0
    %1359 = vmatprep.subr.mxu0 0.0
    %1360 = vmatpush1.msra.mxu0 0.0
    %1361 = vmatprep.subr.mxu0 0.0
    %1362 = vmatpush1.msra.mxu0 0.0
    %1363 = vmatprep.subr.mxu0 0.0
    %1364 = vmatpush1.msra.mxu0 0.0
    %1365 = vmatprep.subr.mxu0 0.0
    %1366 = vmatpush1.msra.mxu0 0.0
    %1367 = vmatprep.mubr.f32.mxu0 0.0
    %1368 = vmatmul.mubr.f32.gmra.mrb[0].mxu0 %v1301
    %v1369 = vpop.f32.mrb[0].mxu0
    %v1370 = vadd.f32 0.0, %v1369
    %v1371 = vpop.f32.mrb[0].mxu0
    %1372 = vdwg.mxu0
    %v1374 = vsel %vm805, %v1153, 0
    %1376 = vmatprep.subr.mxu0 0.0
    %1377 = vmatpush1.msra.mxu0 %v804
    %1378 = vmatprep.subr.mxu0 0.0
    %1379 = vmatpush1.msra.mxu0 0.0
    %1380 = vmatprep.subr.mxu0 0.0
    %1381 = vmatpush1.msra.mxu0 0.0
    %1382 = vmatprep.subr.mxu0 0.0
    %1383 = vmatpush1.msra.mxu0 0.0
    %1384 = vmatprep.subr.mxu0 0.0
    %1385 = vmatpush1.msra.mxu0 0.0
    %1386 = vmatprep.subr.mxu0 0.0
    %1387 = vmatpush1.msra.mxu0 0.0
    %1388 = vmatprep.subr.mxu0 0.0
    %1389 = vmatpush1.msra.mxu0 0.0
    %1390 = vmatprep.subr.mxu0 0.0
    %1391 = vmatpush1.msra.mxu0 0.0
    %1392 = vmatprep.subr.mxu0 0.0
    %1393 = vmatpush1.msra.mxu0 0.0
    %1394 = vmatprep.subr.mxu0 0.0
    %1395 = vmatpush1.msra.mxu0 0.0
    %1396 = vmatprep.subr.mxu0 0.0
    %1397 = vmatpush1.msra.mxu0 0.0
    %1398 = vmatprep.subr.mxu0 0.0
    %1399 = vmatpush1.msra.mxu0 0.0
    %1400 = vmatprep.subr.mxu0 0.0
    %1401 = vmatpush1.msra.mxu0 0.0
    %1402 = vmatprep.subr.mxu0 0.0
    %1403 = vmatpush1.msra.mxu0 0.0
    %1404 = vmatprep.subr.mxu0 0.0
    %1405 = vmatpush1.msra.mxu0 0.0
    %1406 = vmatprep.subr.mxu0 0.0
    %1407 = vmatpush1.msra.mxu0 0.0
    %1408 = vmatprep.subr.mxu0 0.0
    %1409 = vmatpush1.msra.mxu0 0.0
    %1410 = vmatprep.subr.mxu0 0.0
    %1411 = vmatpush1.msra.mxu0 0.0
    %1412 = vmatprep.subr.mxu0 0.0
    %1413 = vmatpush1.msra.mxu0 0.0
    %1414 = vmatprep.subr.mxu0 0.0
    %1415 = vmatpush1.msra.mxu0 0.0
    %1416 = vmatprep.subr.mxu0 0.0
    %1417 = vmatpush1.msra.mxu0 0.0
    %1418 = vmatprep.subr.mxu0 0.0
    %1419 = vmatpush1.msra.mxu0 0.0
    %1420 = vmatprep.subr.mxu0 0.0
    %1421 = vmatpush1.msra.mxu0 0.0
    %1422 = vmatprep.subr.mxu0 0.0
    %1423 = vmatpush1.msra.mxu0 0.0
    %1424 = vmatprep.subr.mxu0 0.0
    %1425 = vmatpush1.msra.mxu0 0.0
    %1426 = vmatprep.subr.mxu0 0.0
    %1427 = vmatpush1.msra.mxu0 0.0
    %1428 = vmatprep.subr.mxu0 0.0
    %1429 = vmatpush1.msra.mxu0 0.0
    %1430 = vmatprep.subr.mxu0 0.0
    %1431 = vmatpush1.msra.mxu0 0.0
    %1432 = vmatprep.subr.mxu0 0.0
    %1433 = vmatpush1.msra.mxu0 0.0
    %1434 = vmatprep.subr.mxu0 0.0
    %1435 = vmatpush1.msra.mxu0 0.0
    %1436 = vmatprep.subr.mxu0 0.0
    %1437 = vmatpush1.msra.mxu0 0.0
    %1438 = vmatprep.subr.mxu0 0.0
    %1439 = vmatpush1.msra.mxu0 0.0
    %1440 = vmatprep.mubr.f32.mxu0 0.0
    %1441 = vmatmul.mubr.f32.gmra.mrb[0].mxu0 %v1374
    %v1442 = vpop.f32.mrb[0].mxu0
    %v1443 = vadd.f32 0.0, %v1442
    %v1444 = vpop.f32.mrb[0].mxu0
    %1445 = vdwg.mxu0
    %v1446 = vcombine.low %v1224, %v1370
    %v1447 = vcombine.high %v1224, %v1370
    %v1449 = vunpack.c.l.s4 1983009808
    %v1450 = vunpack.c.0.s8 %v1449
    %v1451 = vlaneseq
    %v1452 = vshrl.u32 %v1451, 7
    %v1453 = vsub.s32 %v1450, %v1452
    %v1454 = vrot.slane %v1446, %v1453
    %v1456 = vunpack.c.l.s4 1983009808
    %v1457 = vunpack.c.0.s8 %v1456
    %v1458 = vlaneseq
    %v1459 = vshrl.u32 %v1458, 7
    %v1460 = vsub.s32 %v1457, %v1459
    %v1461 = vrot.slane %v1447, %v1460
    %v1462 = vcombine.low %v1297, %v1443
    %v1463 = vcombine.high %v1297, %v1443
    %v1465 = vunpack.c.l.s4 1983009808
    %v1466 = vunpack.c.0.s8 %v1465
    %v1467 = vlaneseq
    %v1468 = vshrl.u32 %v1467, 7
    %v1469 = vsub.s32 %v1466, %v1468
    %v1470 = vrot.slane %v1462, %v1469
    %v1472 = vunpack.c.l.s4 1983009808
    %v1473 = vunpack.c.0.s8 %v1472
    %v1474 = vlaneseq
    %v1475 = vshrl.u32 %v1474, 7
    %v1476 = vsub.s32 %v1473, %v1475
    %v1477 = vrot.slane %v1463, %v1476
    %v1478 = vcombine.low %v1454, %v1470
    %v1479 = vcombine.high %v1454, %v1470
    %v1481 = vunpack.c.l.s4 1934713408
    %v1482 = vunpack.c.0.s8 %v1481
    %v1483 = vlaneseq
    %v1484 = vshrl.u32 %v1483, 7
    %v1485 = vsub.s32 %v1482, %v1484
    %v1486 = vrot.slane %v1478, %v1485
    %v1488 = vunpack.c.l.s4 1934713408
    %v1489 = vunpack.c.0.s8 %v1488
    %v1490 = vlaneseq
    %v1491 = vshrl.u32 %v1490, 7
    %v1492 = vsub.s32 %v1489, %v1491
    %v1493 = vrot.slane %v1479, %v1492
    %v1494 = vcombine.low %v1461, %v1477
    %v1495 = vcombine.high %v1461, %v1477
    %v1497 = vunpack.c.l.s4 1934713408
    %v1498 = vunpack.c.0.s8 %v1497
    %v1499 = vlaneseq
    %v1500 = vshrl.u32 %v1499, 7
    %v1501 = vsub.s32 %v1498, %v1500
    %v1502 = vrot.slane %v1494, %v1501
    %v1504 = vunpack.c.l.s4 1934713408
    %v1505 = vunpack.c.0.s8 %v1504
    %v1506 = vlaneseq
    %v1507 = vshrl.u32 %v1506, 7
    %v1508 = vsub.s32 %v1505, %v1507
    %v1509 = vrot.slane %v1495, %v1508
    %v1510 = vcombine.high %v1486, 0.0
    %v1511 = vcombine.high %v1493, 0.0
    %v1512 = vcombine.high %v1502, 0.0
    %v1513 = vcombine.high %v1509, 0.0
    %v1514 = vcombine.low %v1486, %v1493
    %v1516 = vunpack.c.l.s4 1983009808
    %v1517 = vunpack.c.0.s8 %v1516
    %v1518 = vlaneseq
    %v1519 = vshrl.u32 %v1518, 7
    %v1520 = vsub.s32 %v1517, %v1519
    %v1521 = vrot.slane %v1514, %v1520
    %v1522 = vcombine.low %v1510, %v1511
    %v1524 = vunpack.c.l.s4 1983009808
    %v1525 = vunpack.c.0.s8 %v1524
    %v1526 = vlaneseq
    %v1527 = vshrl.u32 %v1526, 7
    %v1528 = vsub.s32 %v1525, %v1527
    %v1529 = vrot.slane %v1522, %v1528
    %v1530 = vcombine.low %v1502, %v1509
    %v1532 = vunpack.c.l.s4 1983009808
    %v1533 = vunpack.c.0.s8 %v1532
    %v1534 = vlaneseq
    %v1535 = vshrl.u32 %v1534, 7
    %v1536 = vsub.s32 %v1533, %v1535
    %v1537 = vrot.slane %v1530, %v1536
    %v1538 = vcombine.low %v1512, %v1513
    %v1540 = vunpack.c.l.s4 1983009808
    %v1541 = vunpack.c.0.s8 %v1540
    %v1542 = vlaneseq
    %v1543 = vshrl.u32 %v1542, 7
    %v1544 = vsub.s32 %v1541, %v1543
    %v1545 = vrot.slane %v1538, %v1544
    %v1546 = vcombine.low %v1521, %v1529
    %v1547 = vcombine.high %v1521, %v1529
    %v1549 = vunpack.c.l.s4 1934713408
    %v1550 = vunpack.c.0.s8 %v1549
    %v1551 = vlaneseq
    %v1552 = vshrl.u32 %v1551, 7
    %v1553 = vsub.s32 %v1550, %v1552
    %v1554 = vrot.slane %v1546, %v1553
    %v1556 = vunpack.c.l.s4 1934713408
    %v1557 = vunpack.c.0.s8 %v1556
    %v1558 = vlaneseq
    %v1559 = vshrl.u32 %v1558, 7
    %v1560 = vsub.s32 %v1557, %v1559
    %v1561 = vrot.slane %v1547, %v1560
    %v1562 = vcombine.low %v1537, %v1545
    %v1563 = vcombine.high %v1537, %v1545
    %v1565 = vunpack.c.l.s4 1934713408
    %v1566 = vunpack.c.0.s8 %v1565
    %v1567 = vlaneseq
    %v1568 = vshrl.u32 %v1567, 7
    %v1569 = vsub.s32 %v1566, %v1568
    %v1570 = vrot.slane %v1562, %v1569
    %v1572 = vunpack.c.l.s4 1934713408
    %v1573 = vunpack.c.0.s8 %v1572
    %v1574 = vlaneseq
    %v1575 = vshrl.u32 %v1574, 7
    %v1576 = vsub.s32 %v1573, %v1575
    %v1577 = vrot.slane %v1563, %v1576
    %v1578 = vcombine.low %v1554, %v1570
    %v1579 = vcombine.high %v1554, %v1570
    %v1580 = vcombine.low %v1561, %v1577
    %v1581 = vcombine.high %v1561, %v1577
    %1583 = vrot.lane.b32.xlu0 %v1579, 8
    %v1584 = vpop.permute.xlu0 %1583
    %1587 = vrot.lane.b32.xlu0 %v1580, 16
    %v1588 = vpop.permute.xlu0 %1587
    %1591 = vrot.lane.b32.xlu0 %v1581, 24
    %v1592 = vpop.permute.xlu0 %1591
    %v1594 = vsel %vm805, %v1578, %v1584
    %vm1595 = vcmask 130048
    %v1596 = vsel %vm1595, %v1594, %v1588
    %vm1597 = vcmask 195584
    %v1598 = vsel %vm1597, %v1596, %v1592
    %1599 = vst.msk [vmem:[#allocation2] sm:$0xff] %vm55, %v1598
    %1601 = vrot.lane.b32.xlu0 %v348, 120
    %v1602 = vpop.permute.xlu0 %1601
    %1604 = vrot.lane.b32.xlu0 %v348, 112
    %v1605 = vpop.permute.xlu0 %1604
    %1607 = vrot.lane.b32.xlu0 %v348, 104
    %v1608 = vpop.permute.xlu0 %1607
    %v1610 = vcombine.low %v348, %v1605
    %v1611 = vcombine.high %v348, %v1605
    %v1613 = vunpack.c.l.s4 1983009808
    %v1614 = vunpack.c.0.s8 %v1613
    %v1615 = vlaneseq
    %v1616 = vshrl.u32 %v1615, 7
    %v1617 = vsub.s32 %v1614, %v1616
    %v1618 = vrot.slane %v1610, %v1617
    %v1620 = vunpack.c.l.s4 1983009808
    %v1621 = vunpack.c.0.s8 %v1620
    %v1622 = vlaneseq
    %v1623 = vshrl.u32 %v1622, 7
    %v1624 = vsub.s32 %v1621, %v1623
    %v1625 = vrot.slane %v1611, %v1624
    %v1626 = vcombine.low %v1602, %v1608
    %v1627 = vcombine.high %v1602, %v1608
    %v1629 = vunpack.c.l.s4 1983009808
    %v1630 = vunpack.c.0.s8 %v1629
    %v1631 = vlaneseq
    %v1632 = vshrl.u32 %v1631, 7
    %v1633 = vsub.s32 %v1630, %v1632
    %v1634 = vrot.slane %v1626, %v1633
    %v1636 = vunpack.c.l.s4 1983009808
    %v1637 = vunpack.c.0.s8 %v1636
    %v1638 = vlaneseq
    %v1639 = vshrl.u32 %v1638, 7
    %v1640 = vsub.s32 %v1637, %v1639
    %v1641 = vrot.slane %v1627, %v1640
    %v1642 = vcombine.low %v1618, %v1634
    %v1643 = vcombine.high %v1618, %v1634
    %v1645 = vunpack.c.l.s4 1934713408
    %v1646 = vunpack.c.0.s8 %v1645
    %v1647 = vlaneseq
    %v1648 = vshrl.u32 %v1647, 7
    %v1649 = vsub.s32 %v1646, %v1648
    %v1650 = vrot.slane %v1642, %v1649
    %v1652 = vunpack.c.l.s4 1934713408
    %v1653 = vunpack.c.0.s8 %v1652
    %v1654 = vlaneseq
    %v1655 = vshrl.u32 %v1654, 7
    %v1656 = vsub.s32 %v1653, %v1655
    %v1657 = vrot.slane %v1643, %v1656
    %v1658 = vcombine.low %v1625, %v1641
    %v1659 = vcombine.high %v1625, %v1641
    %v1661 = vunpack.c.l.s4 1934713408
    %v1662 = vunpack.c.0.s8 %v1661
    %v1663 = vlaneseq
    %v1664 = vshrl.u32 %v1663, 7
    %v1665 = vsub.s32 %v1662, %v1664
    %v1666 = vrot.slane %v1658, %v1665
    %v1668 = vunpack.c.l.s4 1934713408
    %v1669 = vunpack.c.0.s8 %v1668
    %v1670 = vlaneseq
    %v1671 = vshrl.u32 %v1670, 7
    %v1672 = vsub.s32 %v1669, %v1671
    %v1673 = vrot.slane %v1659, %v1672
    %v1674 = vcombine.high %v1650, 0.0
    %v1675 = vcombine.high %v1657, 0.0
    %v1676 = vcombine.high %v1666, 0.0
    %v1677 = vcombine.high %v1673, 0.0
    %v1678 = vcombine.low %v1650, %v1657
    %v1680 = vunpack.c.l.s4 1983009808
    %v1681 = vunpack.c.0.s8 %v1680
    %v1682 = vlaneseq
    %v1683 = vshrl.u32 %v1682, 7
    %v1684 = vsub.s32 %v1681, %v1683
    %v1685 = vrot.slane %v1678, %v1684
    %v1686 = vcombine.low %v1674, %v1675
    %v1688 = vunpack.c.l.s4 1983009808
    %v1689 = vunpack.c.0.s8 %v1688
    %v1690 = vlaneseq
    %v1691 = vshrl.u32 %v1690, 7
    %v1692 = vsub.s32 %v1689, %v1691
    %v1693 = vrot.slane %v1686, %v1692
    %v1694 = vcombine.low %v1666, %v1673
    %v1696 = vunpack.c.l.s4 1983009808
    %v1697 = vunpack.c.0.s8 %v1696
    %v1698 = vlaneseq
    %v1699 = vshrl.u32 %v1698, 7
    %v1700 = vsub.s32 %v1697, %v1699
    %v1701 = vrot.slane %v1694, %v1700
    %v1702 = vcombine.low %v1676, %v1677
    %v1704 = vunpack.c.l.s4 1983009808
    %v1705 = vunpack.c.0.s8 %v1704
    %v1706 = vlaneseq
    %v1707 = vshrl.u32 %v1706, 7
    %v1708 = vsub.s32 %v1705, %v1707
    %v1709 = vrot.slane %v1702, %v1708
    %v1710 = vcombine.low %v1685, %v1693
    %v1711 = vcombine.high %v1685, %v1693
    %v1713 = vunpack.c.l.s4 1934713408
    %v1714 = vunpack.c.0.s8 %v1713
    %v1715 = vlaneseq
    %v1716 = vshrl.u32 %v1715, 7
    %v1717 = vsub.s32 %v1714, %v1716
    %v1718 = vrot.slane %v1710, %v1717
    %v1720 = vunpack.c.l.s4 1934713408
    %v1721 = vunpack.c.0.s8 %v1720
    %v1722 = vlaneseq
    %v1723 = vshrl.u32 %v1722, 7
    %v1724 = vsub.s32 %v1721, %v1723
    %v1725 = vrot.slane %v1711, %v1724
    %v1726 = vcombine.low %v1701, %v1709
    %v1727 = vcombine.high %v1701, %v1709
    %v1729 = vunpack.c.l.s4 1934713408
    %v1730 = vunpack.c.0.s8 %v1729
    %v1731 = vlaneseq
    %v1732 = vshrl.u32 %v1731, 7
    %v1733 = vsub.s32 %v1730, %v1732
    %v1734 = vrot.slane %v1726, %v1733
    %v1736 = vunpack.c.l.s4 1934713408
    %v1737 = vunpack.c.0.s8 %v1736
    %v1738 = vlaneseq
    %v1739 = vshrl.u32 %v1738, 7
    %v1740 = vsub.s32 %v1737, %v1739
    %v1741 = vrot.slane %v1727, %v1740
    %v1742 = vcombine.low %v1718, %v1734
    %v1743 = vcombine.high %v1718, %v1734
    %v1744 = vcombine.low %v1725, %v1741
    %v1745 = vcombine.high %v1725, %v1741
    %1747 = vrot.lane.b32.xlu0 %v346, 120
    %v1748 = vpop.permute.xlu0 %1747
    %1749 = vrot.lane.b32.xlu0 %v346, 112
    %v1750 = vpop.permute.xlu0 %1749
    %1751 = vrot.lane.b32.xlu0 %v346, 104
    %v1752 = vpop.permute.xlu0 %1751
    %1753 = vrot.lane.b32.xlu0 %v346, 96
    %v1754 = vpop.permute.xlu0 %1753
    %1755 = vrot.lane.b32.xlu0 %v1748, 96
    %v1756 = vpop.permute.xlu0 %1755
    %1757 = vrot.lane.b32.xlu0 %v1750, 96
    %v1758 = vpop.permute.xlu0 %1757
    %1759 = vrot.lane.b32.xlu0 %v1752, 96
    %v1760 = vpop.permute.xlu0 %1759
    %v1765 = vcombine.low %v1754, %v1758
    %v1766 = vcombine.high %v1754, %v1758
    %v1768 = vunpack.c.l.s4 1983009808
    %v1769 = vunpack.c.0.s8 %v1768
    %v1770 = vlaneseq
    %v1771 = vshrl.u32 %v1770, 7
    %v1772 = vsub.s32 %v1769, %v1771
    %v1773 = vrot.slane %v1765, %v1772
    %v1775 = vunpack.c.l.s4 1983009808
    %v1776 = vunpack.c.0.s8 %v1775
    %v1777 = vlaneseq
    %v1778 = vshrl.u32 %v1777, 7
    %v1779 = vsub.s32 %v1776, %v1778
    %v1780 = vrot.slane %v1766, %v1779
    %v1781 = vcombine.low %v1756, %v1760
    %v1782 = vcombine.high %v1756, %v1760
    %v1784 = vunpack.c.l.s4 1983009808
    %v1785 = vunpack.c.0.s8 %v1784
    %v1786 = vlaneseq
    %v1787 = vshrl.u32 %v1786, 7
    %v1788 = vsub.s32 %v1785, %v1787
    %v1789 = vrot.slane %v1781, %v1788
    %v1791 = vunpack.c.l.s4 1983009808
    %v1792 = vunpack.c.0.s8 %v1791
    %v1793 = vlaneseq
    %v1794 = vshrl.u32 %v1793, 7
    %v1795 = vsub.s32 %v1792, %v1794
    %v1796 = vrot.slane %v1782, %v1795
    %v1797 = vcombine.low %v1773, %v1789
    %v1798 = vcombine.high %v1773, %v1789
    %v1800 = vunpack.c.l.s4 1934713408
    %v1801 = vunpack.c.0.s8 %v1800
    %v1802 = vlaneseq
    %v1803 = vshrl.u32 %v1802, 7
    %v1804 = vsub.s32 %v1801, %v1803
    %v1805 = vrot.slane %v1797, %v1804
    %v1807 = vunpack.c.l.s4 1934713408
    %v1808 = vunpack.c.0.s8 %v1807
    %v1809 = vlaneseq
    %v1810 = vshrl.u32 %v1809, 7
    %v1811 = vsub.s32 %v1808, %v1810
    %v1812 = vrot.slane %v1798, %v1811
    %v1813 = vcombine.low %v1780, %v1796
    %v1814 = vcombine.high %v1780, %v1796
    %v1816 = vunpack.c.l.s4 1934713408
    %v1817 = vunpack.c.0.s8 %v1816
    %v1818 = vlaneseq
    %v1819 = vshrl.u32 %v1818, 7
    %v1820 = vsub.s32 %v1817, %v1819
    %v1821 = vrot.slane %v1813, %v1820
    %v1823 = vunpack.c.l.s4 1934713408
    %v1824 = vunpack.c.0.s8 %v1823
    %v1825 = vlaneseq
    %v1826 = vshrl.u32 %v1825, 7
    %v1827 = vsub.s32 %v1824, %v1826
    %v1828 = vrot.slane %v1814, %v1827
    %v1829 = vcombine.high %v1805, 0.0
    %v1830 = vcombine.high %v1812, 0.0
    %v1831 = vcombine.high %v1821, 0.0
    %v1832 = vcombine.high %v1828, 0.0
    %v1833 = vcombine.low %v1805, %v1812
    %v1835 = vunpack.c.l.s4 1983009808
    %v1836 = vunpack.c.0.s8 %v1835
    %v1837 = vlaneseq
    %v1838 = vshrl.u32 %v1837, 7
    %v1839 = vsub.s32 %v1836, %v1838
    %v1840 = vrot.slane %v1833, %v1839
    %v1841 = vcombine.low %v1829, %v1830
    %v1843 = vunpack.c.l.s4 1983009808
    %v1844 = vunpack.c.0.s8 %v1843
    %v1845 = vlaneseq
    %v1846 = vshrl.u32 %v1845, 7
    %v1847 = vsub.s32 %v1844, %v1846
    %v1848 = vrot.slane %v1841, %v1847
    %v1849 = vcombine.low %v1821, %v1828
    %v1851 = vunpack.c.l.s4 1983009808
    %v1852 = vunpack.c.0.s8 %v1851
    %v1853 = vlaneseq
    %v1854 = vshrl.u32 %v1853, 7
    %v1855 = vsub.s32 %v1852, %v1854
    %v1856 = vrot.slane %v1849, %v1855
    %v1857 = vcombine.low %v1831, %v1832
    %v1859 = vunpack.c.l.s4 1983009808
    %v1860 = vunpack.c.0.s8 %v1859
    %v1861 = vlaneseq
    %v1862 = vshrl.u32 %v1861, 7
    %v1863 = vsub.s32 %v1860, %v1862
    %v1864 = vrot.slane %v1857, %v1863
    %v1865 = vcombine.low %v1840, %v1848
    %v1866 = vcombine.high %v1840, %v1848
    %v1868 = vunpack.c.l.s4 1934713408
    %v1869 = vunpack.c.0.s8 %v1868
    %v1870 = vlaneseq
    %v1871 = vshrl.u32 %v1870, 7
    %v1872 = vsub.s32 %v1869, %v1871
    %v1873 = vrot.slane %v1865, %v1872
    %v1875 = vunpack.c.l.s4 1934713408
    %v1876 = vunpack.c.0.s8 %v1875
    %v1877 = vlaneseq
    %v1878 = vshrl.u32 %v1877, 7
    %v1879 = vsub.s32 %v1876, %v1878
    %v1880 = vrot.slane %v1866, %v1879
    %v1881 = vcombine.low %v1856, %v1864
    %v1882 = vcombine.high %v1856, %v1864
    %v1884 = vunpack.c.l.s4 1934713408
    %v1885 = vunpack.c.0.s8 %v1884
    %v1886 = vlaneseq
    %v1887 = vshrl.u32 %v1886, 7
    %v1888 = vsub.s32 %v1885, %v1887
    %v1889 = vrot.slane %v1881, %v1888
    %v1891 = vunpack.c.l.s4 1934713408
    %v1892 = vunpack.c.0.s8 %v1891
    %v1893 = vlaneseq
    %v1894 = vshrl.u32 %v1893, 7
    %v1895 = vsub.s32 %v1892, %v1894
    %v1896 = vrot.slane %v1882, %v1895
    %v1897 = vcombine.low %v1873, %v1889
    %v1898 = vcombine.high %v1873, %v1889
    %v1899 = vcombine.low %v1880, %v1896
    %v1900 = vcombine.high %v1880, %v1896
    %1902 = vrot.lane.b32.xlu0 %v195, 120
    %v1903 = vpop.permute.xlu0 %1902
    %1904 = vrot.lane.b32.xlu0 %v195, 112
    %v1905 = vpop.permute.xlu0 %1904
    %1906 = vrot.lane.b32.xlu0 %v195, 104
    %v1907 = vpop.permute.xlu0 %1906
    %1908 = vrot.lane.b32.xlu0 %v195, 64
    %v1909 = vpop.permute.xlu0 %1908
    %1910 = vrot.lane.b32.xlu0 %v1903, 64
    %v1911 = vpop.permute.xlu0 %1910
    %1912 = vrot.lane.b32.xlu0 %v1905, 64
    %v1913 = vpop.permute.xlu0 %1912
    %1914 = vrot.lane.b32.xlu0 %v1907, 64
    %v1915 = vpop.permute.xlu0 %1914
    %v1920 = vcombine.low %v1909, %v1913
    %v1921 = vcombine.high %v1909, %v1913
    %v1923 = vunpack.c.l.s4 1983009808
    %v1924 = vunpack.c.0.s8 %v1923
    %v1925 = vlaneseq
    %v1926 = vshrl.u32 %v1925, 7
    %v1927 = vsub.s32 %v1924, %v1926
    %v1928 = vrot.slane %v1920, %v1927
    %v1930 = vunpack.c.l.s4 1983009808
    %v1931 = vunpack.c.0.s8 %v1930
    %v1932 = vlaneseq
    %v1933 = vshrl.u32 %v1932, 7
    %v1934 = vsub.s32 %v1931, %v1933
    %v1935 = vrot.slane %v1921, %v1934
    %v1936 = vcombine.low %v1911, %v1915
    %v1937 = vcombine.high %v1911, %v1915
    %v1939 = vunpack.c.l.s4 1983009808
    %v1940 = vunpack.c.0.s8 %v1939
    %v1941 = vlaneseq
    %v1942 = vshrl.u32 %v1941, 7
    %v1943 = vsub.s32 %v1940, %v1942
    %v1944 = vrot.slane %v1936, %v1943
    %v1946 = vunpack.c.l.s4 1983009808
    %v1947 = vunpack.c.0.s8 %v1946
    %v1948 = vlaneseq
    %v1949 = vshrl.u32 %v1948, 7
    %v1950 = vsub.s32 %v1947, %v1949
    %v1951 = vrot.slane %v1937, %v1950
    %v1952 = vcombine.low %v1928, %v1944
    %v1953 = vcombine.high %v1928, %v1944
    %v1955 = vunpack.c.l.s4 1934713408
    %v1956 = vunpack.c.0.s8 %v1955
    %v1957 = vlaneseq
    %v1958 = vshrl.u32 %v1957, 7
    %v1959 = vsub.s32 %v1956, %v1958
    %v1960 = vrot.slane %v1952, %v1959
    %v1962 = vunpack.c.l.s4 1934713408
    %v1963 = vunpack.c.0.s8 %v1962
    %v1964 = vlaneseq
    %v1965 = vshrl.u32 %v1964, 7
    %v1966 = vsub.s32 %v1963, %v1965
    %v1967 = vrot.slane %v1953, %v1966
    %v1968 = vcombine.low %v1935, %v1951
    %v1969 = vcombine.high %v1935, %v1951
    %v1971 = vunpack.c.l.s4 1934713408
    %v1972 = vunpack.c.0.s8 %v1971
    %v1973 = vlaneseq
    %v1974 = vshrl.u32 %v1973, 7
    %v1975 = vsub.s32 %v1972, %v1974
    %v1976 = vrot.slane %v1968, %v1975
    %v1978 = vunpack.c.l.s4 1934713408
    %v1979 = vunpack.c.0.s8 %v1978
    %v1980 = vlaneseq
    %v1981 = vshrl.u32 %v1980, 7
    %v1982 = vsub.s32 %v1979, %v1981
    %v1983 = vrot.slane %v1969, %v1982
    %v1984 = vcombine.high %v1960, 0.0
    %v1985 = vcombine.high %v1967, 0.0
    %v1986 = vcombine.high %v1976, 0.0
    %v1987 = vcombine.high %v1983, 0.0
    %v1988 = vcombine.low %v1960, %v1967
    %v1990 = vunpack.c.l.s4 1983009808
    %v1991 = vunpack.c.0.s8 %v1990
    %v1992 = vlaneseq
    %v1993 = vshrl.u32 %v1992, 7
    %v1994 = vsub.s32 %v1991, %v1993
    %v1995 = vrot.slane %v1988, %v1994
    %v1996 = vcombine.low %v1984, %v1985
    %v1998 = vunpack.c.l.s4 1983009808
    %v1999 = vunpack.c.0.s8 %v1998
    %v2000 = vlaneseq
    %v2001 = vshrl.u32 %v2000, 7
    %v2002 = vsub.s32 %v1999, %v2001
    %v2003 = vrot.slane %v1996, %v2002
    %v2004 = vcombine.low %v1976, %v1983
    %v2006 = vunpack.c.l.s4 1983009808
    %v2007 = vunpack.c.0.s8 %v2006
    %v2008 = vlaneseq
    %v2009 = vshrl.u32 %v2008, 7
    %v2010 = vsub.s32 %v2007, %v2009
    %v2011 = vrot.slane %v2004, %v2010
    %v2012 = vcombine.low %v1986, %v1987
    %v2014 = vunpack.c.l.s4 1983009808
    %v2015 = vunpack.c.0.s8 %v2014
    %v2016 = vlaneseq
    %v2017 = vshrl.u32 %v2016, 7
    %v2018 = vsub.s32 %v2015, %v2017
    %v2019 = vrot.slane %v2012, %v2018
    %v2020 = vcombine.low %v1995, %v2003
    %v2021 = vcombine.high %v1995, %v2003
    %v2023 = vunpack.c.l.s4 1934713408
    %v2024 = vunpack.c.0.s8 %v2023
    %v2025 = vlaneseq
    %v2026 = vshrl.u32 %v2025, 7
    %v2027 = vsub.s32 %v2024, %v2026
    %v2028 = vrot.slane %v2020, %v2027
    %v2030 = vunpack.c.l.s4 1934713408
    %v2031 = vunpack.c.0.s8 %v2030
    %v2032 = vlaneseq
    %v2033 = vshrl.u32 %v2032, 7
    %v2034 = vsub.s32 %v2031, %v2033
    %v2035 = vrot.slane %v2021, %v2034
    %v2036 = vcombine.low %v2011, %v2019
    %v2037 = vcombine.high %v2011, %v2019
    %v2039 = vunpack.c.l.s4 1934713408
    %v2040 = vunpack.c.0.s8 %v2039
    %v2041 = vlaneseq
    %v2042 = vshrl.u32 %v2041, 7
    %v2043 = vsub.s32 %v2040, %v2042
    %v2044 = vrot.slane %v2036, %v2043
    %v2046 = vunpack.c.l.s4 1934713408
    %v2047 = vunpack.c.0.s8 %v2046
    %v2048 = vlaneseq
    %v2049 = vshrl.u32 %v2048, 7
    %v2050 = vsub.s32 %v2047, %v2049
    %v2051 = vrot.slane %v2037, %v2050
    %v2052 = vcombine.low %v2028, %v2044
    %v2053 = vcombine.high %v2028, %v2044
    %v2054 = vcombine.low %v2035, %v2051
    %v2055 = vcombine.high %v2035, %v2051
    %v2057 = vsel %vm805, %v1742, 0
    %v2060 = vsel %vm805, %v1897, 0
    %2062 = vmatprep.subr.mxu0 0.0
    %2063 = vmatpush1.xpose.msra.mxu0 %v2060
    %2064 = vmatprep.subr.mxu0 0.0
    %2065 = vmatpush1.xpose.msra.mxu0 0.0
    %2066 = vmatprep.subr.mxu0 0.0
    %2067 = vmatpush1.xpose.msra.mxu0 0.0
    %2068 = vmatprep.subr.mxu0 0.0
    %2069 = vmatpush1.xpose.msra.mxu0 0.0
    %2070 = vmatprep.subr.mxu0 0.0
    %2071 = vmatpush1.xpose.msra.mxu0 0.0
    %2072 = vmatprep.subr.mxu0 0.0
    %2073 = vmatpush1.xpose.msra.mxu0 0.0
    %2074 = vmatprep.subr.mxu0 0.0
    %2075 = vmatpush1.xpose.msra.mxu0 0.0
    %2076 = vmatprep.subr.mxu0 0.0
    %2077 = vmatpush1.xpose.msra.mxu0 0.0
    %2078 = vmatprep.subr.mxu0 0.0
    %2079 = vmatpush1.xpose.msra.mxu0 0.0
    %2080 = vmatprep.subr.mxu0 0.0
    %2081 = vmatpush1.xpose.msra.mxu0 0.0
    %2082 = vmatprep.subr.mxu0 0.0
    %2083 = vmatpush1.xpose.msra.mxu0 0.0
    %2084 = vmatprep.subr.mxu0 0.0
    %2085 = vmatpush1.xpose.msra.mxu0 0.0
    %2086 = vmatprep.subr.mxu0 0.0
    %2087 = vmatpush1.xpose.msra.mxu0 0.0
    %2088 = vmatprep.subr.mxu0 0.0
    %2089 = vmatpush1.xpose.msra.mxu0 0.0
    %2090 = vmatprep.subr.mxu0 0.0
    %2091 = vmatpush1.xpose.msra.mxu0 0.0
    %2092 = vmatprep.subr.mxu0 0.0
    %2093 = vmatpush1.xpose.msra.mxu0 0.0
    %2094 = vmatprep.subr.mxu0 0.0
    %2095 = vmatpush1.xpose.msra.mxu0 0.0
    %2096 = vmatprep.subr.mxu0 0.0
    %2097 = vmatpush1.xpose.msra.mxu0 0.0
    %2098 = vmatprep.subr.mxu0 0.0
    %2099 = vmatpush1.xpose.msra.mxu0 0.0
    %2100 = vmatprep.subr.mxu0 0.0
    %2101 = vmatpush1.xpose.msra.mxu0 0.0
    %2102 = vmatprep.subr.mxu0 0.0
    %2103 = vmatpush1.xpose.msra.mxu0 0.0
    %2104 = vmatprep.subr.mxu0 0.0
    %2105 = vmatpush1.xpose.msra.mxu0 0.0
    %2106 = vmatprep.subr.mxu0 0.0
    %2107 = vmatpush1.xpose.msra.mxu0 0.0
    %2108 = vmatprep.subr.mxu0 0.0
    %2109 = vmatpush1.xpose.msra.mxu0 0.0
    %2110 = vmatprep.subr.mxu0 0.0
    %2111 = vmatpush1.xpose.msra.mxu0 0.0
    %2112 = vmatprep.subr.mxu0 0.0
    %2113 = vmatpush1.xpose.msra.mxu0 0.0
    %2114 = vmatprep.subr.mxu0 0.0
    %2115 = vmatpush1.xpose.msra.mxu0 0.0
    %2116 = vmatprep.subr.mxu0 0.0
    %2117 = vmatpush1.xpose.msra.mxu0 0.0
    %2118 = vmatprep.subr.mxu0 0.0
    %2119 = vmatpush1.xpose.msra.mxu0 0.0
    %2120 = vmatprep.subr.mxu0 0.0
    %2121 = vmatpush1.xpose.msra.mxu0 0.0
    %2122 = vmatprep.subr.mxu0 0.0
    %2123 = vmatpush1.xpose.msra.mxu0 0.0
    %2124 = vmatprep.subr.mxu0 0.0
    %2125 = vmatpush1.xpose.msra.mxu0 0.0
    %2126 = vmatprep.mubr.f32.mxu0 0.0
    %2127 = vmatmul.mubr.f32.gmra.mrb[0].mxu0 %v2057
    %v2128 = vpop.f32.mrb[0].mxu0
    %v2129 = vadd.f32 0.0, %v2128
    %v2130 = vpop.f32.mrb[0].mxu0
    %2131 = vdwg.mxu0
    %v2133 = vsel %vm805, %v1743, 0
    %v2136 = vsel %vm805, %v1898, 0
    %2138 = vmatprep.subr.mxu0 0.0
    %2139 = vmatpush1.xpose.msra.mxu0 %v2136
    %2140 = vmatprep.subr.mxu0 0.0
    %2141 = vmatpush1.xpose.msra.mxu0 0.0
    %2142 = vmatprep.subr.mxu0 0.0
    %2143 = vmatpush1.xpose.msra.mxu0 0.0
    %2144 = vmatprep.subr.mxu0 0.0
    %2145 = vmatpush1.xpose.msra.mxu0 0.0
    %2146 = vmatprep.subr.mxu0 0.0
    %2147 = vmatpush1.xpose.msra.mxu0 0.0
    %2148 = vmatprep.subr.mxu0 0.0
    %2149 = vmatpush1.xpose.msra.mxu0 0.0
    %2150 = vmatprep.subr.mxu0 0.0
    %2151 = vmatpush1.xpose.msra.mxu0 0.0
    %2152 = vmatprep.subr.mxu0 0.0
    %2153 = vmatpush1.xpose.msra.mxu0 0.0
    %2154 = vmatprep.subr.mxu0 0.0
    %2155 = vmatpush1.xpose.msra.mxu0 0.0
    %2156 = vmatprep.subr.mxu0 0.0
    %2157 = vmatpush1.xpose.msra.mxu0 0.0
    %2158 = vmatprep.subr.mxu0 0.0
    %2159 = vmatpush1.xpose.msra.mxu0 0.0
    %2160 = vmatprep.subr.mxu0 0.0
    %2161 = vmatpush1.xpose.msra.mxu0 0.0
    %2162 = vmatprep.subr.mxu0 0.0
    %2163 = vmatpush1.xpose.msra.mxu0 0.0
    %2164 = vmatprep.subr.mxu0 0.0
    %2165 = vmatpush1.xpose.msra.mxu0 0.0
    %2166 = vmatprep.subr.mxu0 0.0
    %2167 = vmatpush1.xpose.msra.mxu0 0.0
    %2168 = vmatprep.subr.mxu0 0.0
    %2169 = vmatpush1.xpose.msra.mxu0 0.0
    %2170 = vmatprep.subr.mxu0 0.0
    %2171 = vmatpush1.xpose.msra.mxu0 0.0
    %2172 = vmatprep.subr.mxu0 0.0
    %2173 = vmatpush1.xpose.msra.mxu0 0.0
    %2174 = vmatprep.subr.mxu0 0.0
    %2175 = vmatpush1.xpose.msra.mxu0 0.0
    %2176 = vmatprep.subr.mxu0 0.0
    %2177 = vmatpush1.xpose.msra.mxu0 0.0
    %2178 = vmatprep.subr.mxu0 0.0
    %2179 = vmatpush1.xpose.msra.mxu0 0.0
    %2180 = vmatprep.subr.mxu0 0.0
    %2181 = vmatpush1.xpose.msra.mxu0 0.0
    %2182 = vmatprep.subr.mxu0 0.0
    %2183 = vmatpush1.xpose.msra.mxu0 0.0
    %2184 = vmatprep.subr.mxu0 0.0
    %2185 = vmatpush1.xpose.msra.mxu0 0.0
    %2186 = vmatprep.subr.mxu0 0.0
    %2187 = vmatpush1.xpose.msra.mxu0 0.0
    %2188 = vmatprep.subr.mxu0 0.0
    %2189 = vmatpush1.xpose.msra.mxu0 0.0
    %2190 = vmatprep.subr.mxu0 0.0
    %2191 = vmatpush1.xpose.msra.mxu0 0.0
    %2192 = vmatprep.subr.mxu0 0.0
    %2193 = vmatpush1.xpose.msra.mxu0 0.0
    %2194 = vmatprep.subr.mxu0 0.0
    %2195 = vmatpush1.xpose.msra.mxu0 0.0
    %2196 = vmatprep.subr.mxu0 0.0
    %2197 = vmatpush1.xpose.msra.mxu0 0.0
    %2198 = vmatprep.subr.mxu0 0.0
    %2199 = vmatpush1.xpose.msra.mxu0 0.0
    %2200 = vmatprep.subr.mxu0 0.0
    %2201 = vmatpush1.xpose.msra.mxu0 0.0
    %2202 = vmatprep.mubr.f32.mxu0 0.0
    %2203 = vmatmul.mubr.f32.gmra.mrb[0].mxu0 %v2133
    %v2204 = vpop.f32.mrb[0].mxu0
    %v2205 = vadd.f32 0.0, %v2204
    %v2206 = vpop.f32.mrb[0].mxu0
    %2207 = vdwg.mxu0
    %v2209 = vsel %vm805, %v1744, 0
    %v2212 = vsel %vm805, %v1899, 0
    %2214 = vmatprep.subr.mxu0 0.0
    %2215 = vmatpush1.xpose.msra.mxu0 %v2212
    %2216 = vmatprep.subr.mxu0 0.0
    %2217 = vmatpush1.xpose.msra.mxu0 0.0
    %2218 = vmatprep.subr.mxu0 0.0
    %2219 = vmatpush1.xpose.msra.mxu0 0.0
    %2220 = vmatprep.subr.mxu0 0.0
    %2221 = vmatpush1.xpose.msra.mxu0 0.0
    %2222 = vmatprep.subr.mxu0 0.0
    %2223 = vmatpush1.xpose.msra.mxu0 0.0
    %2224 = vmatprep.subr.mxu0 0.0
    %2225 = vmatpush1.xpose.msra.mxu0 0.0
    %2226 = vmatprep.subr.mxu0 0.0
    %2227 = vmatpush1.xpose.msra.mxu0 0.0
    %2228 = vmatprep.subr.mxu0 0.0
    %2229 = vmatpush1.xpose.msra.mxu0 0.0
    %2230 = vmatprep.subr.mxu0 0.0
    %2231 = vmatpush1.xpose.msra.mxu0 0.0
    %2232 = vmatprep.subr.mxu0 0.0
    %2233 = vmatpush1.xpose.msra.mxu0 0.0
    %2234 = vmatprep.subr.mxu0 0.0
    %2235 = vmatpush1.xpose.msra.mxu0 0.0
    %2236 = vmatprep.subr.mxu0 0.0
    %2237 = vmatpush1.xpose.msra.mxu0 0.0
    %2238 = vmatprep.subr.mxu0 0.0
    %2239 = vmatpush1.xpose.msra.mxu0 0.0
    %2240 = vmatprep.subr.mxu0 0.0
    %2241 = vmatpush1.xpose.msra.mxu0 0.0
    %2242 = vmatprep.subr.mxu0 0.0
    %2243 = vmatpush1.xpose.msra.mxu0 0.0
    %2244 = vmatprep.subr.mxu0 0.0
    %2245 = vmatpush1.xpose.msra.mxu0 0.0
    %2246 = vmatprep.subr.mxu0 0.0
    %2247 = vmatpush1.xpose.msra.mxu0 0.0
    %2248 = vmatprep.subr.mxu0 0.0
    %2249 = vmatpush1.xpose.msra.mxu0 0.0
    %2250 = vmatprep.subr.mxu0 0.0
    %2251 = vmatpush1.xpose.msra.mxu0 0.0
    %2252 = vmatprep.subr.mxu0 0.0
    %2253 = vmatpush1.xpose.msra.mxu0 0.0
    %2254 = vmatprep.subr.mxu0 0.0
    %2255 = vmatpush1.xpose.msra.mxu0 0.0
    %2256 = vmatprep.subr.mxu0 0.0
    %2257 = vmatpush1.xpose.msra.mxu0 0.0
    %2258 = vmatprep.subr.mxu0 0.0
    %2259 = vmatpush1.xpose.msra.mxu0 0.0
    %2260 = vmatprep.subr.mxu0 0.0
    %2261 = vmatpush1.xpose.msra.mxu0 0.0
    %2262 = vmatprep.subr.mxu0 0.0
    %2263 = vmatpush1.xpose.msra.mxu0 0.0
    %2264 = vmatprep.subr.mxu0 0.0
    %2265 = vmatpush1.xpose.msra.mxu0 0.0
    %2266 = vmatprep.subr.mxu0 0.0
    %2267 = vmatpush1.xpose.msra.mxu0 0.0
    %2268 = vmatprep.subr.mxu0 0.0
    %2269 = vmatpush1.xpose.msra.mxu0 0.0
    %2270 = vmatprep.subr.mxu0 0.0
    %2271 = vmatpush1.xpose.msra.mxu0 0.0
    %2272 = vmatprep.subr.mxu0 0.0
    %2273 = vmatpush1.xpose.msra.mxu0 0.0
    %2274 = vmatprep.subr.mxu0 0.0
    %2275 = vmatpush1.xpose.msra.mxu0 0.0
    %2276 = vmatprep.subr.mxu0 0.0
    %2277 = vmatpush1.xpose.msra.mxu0 0.0
    %2278 = vmatprep.mubr.f32.mxu0 0.0
    %2279 = vmatmul.mubr.f32.gmra.mrb[0].mxu0 %v2209
    %v2280 = vpop.f32.mrb[0].mxu0
    %v2281 = vadd.f32 0.0, %v2280
    %v2282 = vpop.f32.mrb[0].mxu0
    %2283 = vdwg.mxu0
    %v2285 = vsel %vm805, %v1745, 0
    %v2288 = vsel %vm805, %v1900, 0
    %2290 = vmatprep.subr.mxu0 0.0
    %2291 = vmatpush1.xpose.msra.mxu0 %v2288
    %2292 = vmatprep.subr.mxu0 0.0
    %2293 = vmatpush1.xpose.msra.mxu0 0.0
    %2294 = vmatprep.subr.mxu0 0.0
    %2295 = vmatpush1.xpose.msra.mxu0 0.0
    %2296 = vmatprep.subr.mxu0 0.0
    %2297 = vmatpush1.xpose.msra.mxu0 0.0
    %2298 = vmatprep.subr.mxu0 0.0
    %2299 = vmatpush1.xpose.msra.mxu0 0.0
    %2300 = vmatprep.subr.mxu0 0.0
    %2301 = vmatpush1.xpose.msra.mxu0 0.0
    %2302 = vmatprep.subr.mxu0 0.0
    %2303 = vmatpush1.xpose.msra.mxu0 0.0
    %2304 = vmatprep.subr.mxu0 0.0
    %2305 = vmatpush1.xpose.msra.mxu0 0.0
    %2306 = vmatprep.subr.mxu0 0.0
    %2307 = vmatpush1.xpose.msra.mxu0 0.0
    %2308 = vmatprep.subr.mxu0 0.0
    %2309 = vmatpush1.xpose.msra.mxu0 0.0
    %2310 = vmatprep.subr.mxu0 0.0
    %2311 = vmatpush1.xpose.msra.mxu0 0.0
    %2312 = vmatprep.subr.mxu0 0.0
    %2313 = vmatpush1.xpose.msra.mxu0 0.0
    %2314 = vmatprep.subr.mxu0 0.0
    %2315 = vmatpush1.xpose.msra.mxu0 0.0
    %2316 = vmatprep.subr.mxu0 0.0
    %2317 = vmatpush1.xpose.msra.mxu0 0.0
    %2318 = vmatprep.subr.mxu0 0.0
    %2319 = vmatpush1.xpose.msra.mxu0 0.0
    %2320 = vmatprep.subr.mxu0 0.0
    %2321 = vmatpush1.xpose.msra.mxu0 0.0
    %2322 = vmatprep.subr.mxu0 0.0
    %2323 = vmatpush1.xpose.msra.mxu0 0.0
    %2324 = vmatprep.subr.mxu0 0.0
    %2325 = vmatpush1.xpose.msra.mxu0 0.0
    %2326 = vmatprep.subr.mxu0 0.0
    %2327 = vmatpush1.xpose.msra.mxu0 0.0
    %2328 = vmatprep.subr.mxu0 0.0
    %2329 = vmatpush1.xpose.msra.mxu0 0.0
    %2330 = vmatprep.subr.mxu0 0.0
    %2331 = vmatpush1.xpose.msra.mxu0 0.0
    %2332 = vmatprep.subr.mxu0 0.0
    %2333 = vmatpush1.xpose.msra.mxu0 0.0
    %2334 = vmatprep.subr.mxu0 0.0
    %2335 = vmatpush1.xpose.msra.mxu0 0.0
    %2336 = vmatprep.subr.mxu0 0.0
    %2337 = vmatpush1.xpose.msra.mxu0 0.0
    %2338 = vmatprep.subr.mxu0 0.0
    %2339 = vmatpush1.xpose.msra.mxu0 0.0
    %2340 = vmatprep.subr.mxu0 0.0
    %2341 = vmatpush1.xpose.msra.mxu0 0.0
    %2342 = vmatprep.subr.mxu0 0.0
    %2343 = vmatpush1.xpose.msra.mxu0 0.0
    %2344 = vmatprep.subr.mxu0 0.0
    %2345 = vmatpush1.xpose.msra.mxu0 0.0
    %2346 = vmatprep.subr.mxu0 0.0
    %2347 = vmatpush1.xpose.msra.mxu0 0.0
    %2348 = vmatprep.subr.mxu0 0.0
    %2349 = vmatpush1.xpose.msra.mxu0 0.0
    %2350 = vmatprep.subr.mxu0 0.0
    %2351 = vmatpush1.xpose.msra.mxu0 0.0
    %2352 = vmatprep.subr.mxu0 0.0
    %2353 = vmatpush1.xpose.msra.mxu0 0.0
    %2354 = vmatprep.mubr.f32.mxu0 0.0
    %2355 = vmatmul.mubr.f32.gmra.mrb[0].mxu0 %v2285
    %v2356 = vpop.f32.mrb[0].mxu0
    %v2357 = vadd.f32 0.0, %v2356
    %v2358 = vpop.f32.mrb[0].mxu0
    %2359 = vdwg.mxu0
    %v2360 = vsel %vm805, %v2129, -inf
    %2361 = vmax.xlane.f32.xlu0 %v2360
    %v2362 = vpop.xlane.xlu0 %2361
    %v2363 = vsel %vm805, %v2205, -inf
    %2364 = vmax.xlane.f32.xlu0 %v2363
    %v2365 = vpop.xlane.xlu0 %2364
    %v2366 = vsel %vm805, %v2281, -inf
    %2367 = vmax.xlane.f32.xlu0 %v2366
    %v2368 = vpop.xlane.xlu0 %2367
    %v2369 = vsel %vm805, %v2357, -inf
    %2370 = vmax.xlane.f32.xlu0 %v2369
    %v2371 = vpop.xlane.xlu0 %2370
    %v2372 = vsub.f32 %v2129, %v2362
    %v2373 = vsub.f32 %v2205, %v2365
    %v2374 = vsub.f32 %v2281, %v2368
    %v2375 = vsub.f32 %v2357, %v2371
    %v2376 = vmul.f32 %v2372, 1.442695
    %v2377 = vpow.pop %v2376
    %v2378 = vmul.f32 %v2373, 1.442695
    %v2379 = vpow.pop %v2378
    %v2380 = vmul.f32 %v2374, 1.442695
    %v2381 = vpow.pop %v2380
    %v2382 = vmul.f32 %v2375, 1.442695
    %v2383 = vpow.pop %v2382
    %v2384 = vsel %vm805, %v2377, 0.0
    %2385 = vadd.xlane.f32.xlu0 %v2384
    %v2386 = vpop.xlane.xlu0 %2385
    %v2387 = vsel %vm805, %v2379, 0.0
    %2388 = vadd.xlane.f32.xlu0 %v2387
    %v2389 = vpop.xlane.xlu0 %2388
    %v2390 = vsel %vm805, %v2381, 0.0
    %2391 = vadd.xlane.f32.xlu0 %v2390
    %v2392 = vpop.xlane.xlu0 %2391
    %v2393 = vsel %vm805, %v2383, 0.0
    %2394 = vadd.xlane.f32.xlu0 %v2393
    %v2395 = vpop.xlane.xlu0 %2394
    %v2396 = vrcp.pop %v2386
    %v2397 = vrcp.pop %v2389
    %v2398 = vrcp.pop %v2392
    %v2399 = vrcp.pop %v2395
    %v2400 = vmul.f32 %v2377, %v2396
    %v2401 = vmul.f32 %v2379, %v2397
    %v2402 = vmul.f32 %v2381, %v2398
    %v2403 = vmul.f32 %v2383, %v2399
    %v2405 = vsel %vm805, %v2400, 0
    %2407 = vmatprep.subr.mxu0 0.0
    %2408 = vmatpush1.msra.mxu0 %v2052
    %2409 = vmatprep.subr.mxu0 0.0
    %2410 = vmatpush1.msra.mxu0 0.0
    %2411 = vmatprep.subr.mxu0 0.0
    %2412 = vmatpush1.msra.mxu0 0.0
    %2413 = vmatprep.subr.mxu0 0.0
    %2414 = vmatpush1.msra.mxu0 0.0
    %2415 = vmatprep.subr.mxu0 0.0
    %2416 = vmatpush1.msra.mxu0 0.0
    %2417 = vmatprep.subr.mxu0 0.0
    %2418 = vmatpush1.msra.mxu0 0.0
    %2419 = vmatprep.subr.mxu0 0.0
    %2420 = vmatpush1.msra.mxu0 0.0
    %2421 = vmatprep.subr.mxu0 0.0
    %2422 = vmatpush1.msra.mxu0 0.0
    %2423 = vmatprep.subr.mxu0 0.0
    %2424 = vmatpush1.msra.mxu0 0.0
    %2425 = vmatprep.subr.mxu0 0.0
    %2426 = vmatpush1.msra.mxu0 0.0
    %2427 = vmatprep.subr.mxu0 0.0
    %2428 = vmatpush1.msra.mxu0 0.0
    %2429 = vmatprep.subr.mxu0 0.0
    %2430 = vmatpush1.msra.mxu0 0.0
    %2431 = vmatprep.subr.mxu0 0.0
    %2432 = vmatpush1.msra.mxu0 0.0
    %2433 = vmatprep.subr.mxu0 0.0
    %2434 = vmatpush1.msra.mxu0 0.0
    %2435 = vmatprep.subr.mxu0 0.0
    %2436 = vmatpush1.msra.mxu0 0.0
    %2437 = vmatprep.subr.mxu0 0.0
    %2438 = vmatpush1.msra.mxu0 0.0
    %2439 = vmatprep.subr.mxu0 0.0
    %2440 = vmatpush1.msra.mxu0 0.0
    %2441 = vmatprep.subr.mxu0 0.0
    %2442 = vmatpush1.msra.mxu0 0.0
    %2443 = vmatprep.subr.mxu0 0.0
    %2444 = vmatpush1.msra.mxu0 0.0
    %2445 = vmatprep.subr.mxu0 0.0
    %2446 = vmatpush1.msra.mxu0 0.0
    %2447 = vmatprep.subr.mxu0 0.0
    %2448 = vmatpush1.msra.mxu0 0.0
    %2449 = vmatprep.subr.mxu0 0.0
    %2450 = vmatpush1.msra.mxu0 0.0
    %2451 = vmatprep.subr.mxu0 0.0
    %2452 = vmatpush1.msra.mxu0 0.0
    %2453 = vmatprep.subr.mxu0 0.0
    %2454 = vmatpush1.msra.mxu0 0.0
    %2455 = vmatprep.subr.mxu0 0.0
    %2456 = vmatpush1.msra.mxu0 0.0
    %2457 = vmatprep.subr.mxu0 0.0
    %2458 = vmatpush1.msra.mxu0 0.0
    %2459 = vmatprep.subr.mxu0 0.0
    %2460 = vmatpush1.msra.mxu0 0.0
    %2461 = vmatprep.subr.mxu0 0.0
    %2462 = vmatpush1.msra.mxu0 0.0
    %2463 = vmatprep.subr.mxu0 0.0
    %2464 = vmatpush1.msra.mxu0 0.0
    %2465 = vmatprep.subr.mxu0 0.0
    %2466 = vmatpush1.msra.mxu0 0.0
    %2467 = vmatprep.subr.mxu0 0.0
    %2468 = vmatpush1.msra.mxu0 0.0
    %2469 = vmatprep.subr.mxu0 0.0
    %2470 = vmatpush1.msra.mxu0 0.0
    %2471 = vmatprep.mubr.f32.mxu0 0.0
    %2472 = vmatmul.mubr.f32.gmra.mrb[0].mxu0 %v2405
    %v2473 = vpop.f32.mrb[0].mxu0
    %v2474 = vadd.f32 0.0, %v2473
    %v2475 = vpop.f32.mrb[0].mxu0
    %2476 = vdwg.mxu0
    %v2478 = vsel %vm805, %v2401, 0
    %2480 = vmatprep.subr.mxu0 0.0
    %2481 = vmatpush1.msra.mxu0 %v2053
    %2482 = vmatprep.subr.mxu0 0.0
    %2483 = vmatpush1.msra.mxu0 0.0
    %2484 = vmatprep.subr.mxu0 0.0
    %2485 = vmatpush1.msra.mxu0 0.0
    %2486 = vmatprep.subr.mxu0 0.0
    %2487 = vmatpush1.msra.mxu0 0.0
    %2488 = vmatprep.subr.mxu0 0.0
    %2489 = vmatpush1.msra.mxu0 0.0
    %2490 = vmatprep.subr.mxu0 0.0
    %2491 = vmatpush1.msra.mxu0 0.0
    %2492 = vmatprep.subr.mxu0 0.0
    %2493 = vmatpush1.msra.mxu0 0.0
    %2494 = vmatprep.subr.mxu0 0.0
    %2495 = vmatpush1.msra.mxu0 0.0
    %2496 = vmatprep.subr.mxu0 0.0
    %2497 = vmatpush1.msra.mxu0 0.0
    %2498 = vmatprep.subr.mxu0 0.0
    %2499 = vmatpush1.msra.mxu0 0.0
    %2500 = vmatprep.subr.mxu0 0.0
    %2501 = vmatpush1.msra.mxu0 0.0
    %2502 = vmatprep.subr.mxu0 0.0
    %2503 = vmatpush1.msra.mxu0 0.0
    %2504 = vmatprep.subr.mxu0 0.0
    %2505 = vmatpush1.msra.mxu0 0.0
    %2506 = vmatprep.subr.mxu0 0.0
    %2507 = vmatpush1.msra.mxu0 0.0
    %2508 = vmatprep.subr.mxu0 0.0
    %2509 = vmatpush1.msra.mxu0 0.0
    %2510 = vmatprep.subr.mxu0 0.0
    %2511 = vmatpush1.msra.mxu0 0.0
    %2512 = vmatprep.subr.mxu0 0.0
    %2513 = vmatpush1.msra.mxu0 0.0
    %2514 = vmatprep.subr.mxu0 0.0
    %2515 = vmatpush1.msra.mxu0 0.0
    %2516 = vmatprep.subr.mxu0 0.0
    %2517 = vmatpush1.msra.mxu0 0.0
    %2518 = vmatprep.subr.mxu0 0.0
    %2519 = vmatpush1.msra.mxu0 0.0
    %2520 = vmatprep.subr.mxu0 0.0
    %2521 = vmatpush1.msra.mxu0 0.0
    %2522 = vmatprep.subr.mxu0 0.0
    %2523 = vmatpush1.msra.mxu0 0.0
    %2524 = vmatprep.subr.mxu0 0.0
    %2525 = vmatpush1.msra.mxu0 0.0
    %2526 = vmatprep.subr.mxu0 0.0
    %2527 = vmatpush1.msra.mxu0 0.0
    %2528 = vmatprep.subr.mxu0 0.0
    %2529 = vmatpush1.msra.mxu0 0.0
    %2530 = vmatprep.subr.mxu0 0.0
    %2531 = vmatpush1.msra.mxu0 0.0
    %2532 = vmatprep.subr.mxu0 0.0
    %2533 = vmatpush1.msra.mxu0 0.0
    %2534 = vmatprep.subr.mxu0 0.0
    %2535 = vmatpush1.msra.mxu0 0.0
    %2536 = vmatprep.subr.mxu0 0.0
    %2537 = vmatpush1.msra.mxu0 0.0
    %2538 = vmatprep.subr.mxu0 0.0
    %2539 = vmatpush1.msra.mxu0 0.0
    %2540 = vmatprep.subr.mxu0 0.0
    %2541 = vmatpush1.msra.mxu0 0.0
    %2542 = vmatprep.subr.mxu0 0.0
    %2543 = vmatpush1.msra.mxu0 0.0
    %2544 = vmatprep.mubr.f32.mxu0 0.0
    %2545 = vmatmul.mubr.f32.gmra.mrb[0].mxu0 %v2478
    %v2546 = vpop.f32.mrb[0].mxu0
    %v2547 = vadd.f32 0.0, %v2546
    %v2548 = vpop.f32.mrb[0].mxu0
    %2549 = vdwg.mxu0
    %v2551 = vsel %vm805, %v2402, 0
    %2553 = vmatprep.subr.mxu0 0.0
    %2554 = vmatpush1.msra.mxu0 %v2054
    %2555 = vmatprep.subr.mxu0 0.0
    %2556 = vmatpush1.msra.mxu0 0.0
    %2557 = vmatprep.subr.mxu0 0.0
    %2558 = vmatpush1.msra.mxu0 0.0
    %2559 = vmatprep.subr.mxu0 0.0
    %2560 = vmatpush1.msra.mxu0 0.0
    %2561 = vmatprep.subr.mxu0 0.0
    %2562 = vmatpush1.msra.mxu0 0.0
    %2563 = vmatprep.subr.mxu0 0.0
    %2564 = vmatpush1.msra.mxu0 0.0
    %2565 = vmatprep.subr.mxu0 0.0
    %2566 = vmatpush1.msra.mxu0 0.0
    %2567 = vmatprep.subr.mxu0 0.0
    %2568 = vmatpush1.msra.mxu0 0.0
    %2569 = vmatprep.subr.mxu0 0.0
    %2570 = vmatpush1.msra.mxu0 0.0
    %2571 = vmatprep.subr.mxu0 0.0
    %2572 = vmatpush1.msra.mxu0 0.0
    %2573 = vmatprep.subr.mxu0 0.0
    %2574 = vmatpush1.msra.mxu0 0.0
    %2575 = vmatprep.subr.mxu0 0.0
    %2576 = vmatpush1.msra.mxu0 0.0
    %2577 = vmatprep.subr.mxu0 0.0
    %2578 = vmatpush1.msra.mxu0 0.0
    %2579 = vmatprep.subr.mxu0 0.0
    %2580 = vmatpush1.msra.mxu0 0.0
    %2581 = vmatprep.subr.mxu0 0.0
    %2582 = vmatpush1.msra.mxu0 0.0
    %2583 = vmatprep.subr.mxu0 0.0
    %2584 = vmatpush1.msra.mxu0 0.0
    %2585 = vmatprep.subr.mxu0 0.0
    %2586 = vmatpush1.msra.mxu0 0.0
    %2587 = vmatprep.subr.mxu0 0.0
    %2588 = vmatpush1.msra.mxu0 0.0
    %2589 = vmatprep.subr.mxu0 0.0
    %2590 = vmatpush1.msra.mxu0 0.0
    %2591 = vmatprep.subr.mxu0 0.0
    %2592 = vmatpush1.msra.mxu0 0.0
    %2593 = vmatprep.subr.mxu0 0.0
    %2594 = vmatpush1.msra.mxu0 0.0
    %2595 = vmatprep.subr.mxu0 0.0
    %2596 = vmatpush1.msra.mxu0 0.0
    %2597 = vmatprep.subr.mxu0 0.0
    %2598 = vmatpush1.msra.mxu0 0.0
    %2599 = vmatprep.subr.mxu0 0.0
    %2600 = vmatpush1.msra.mxu0 0.0
    %2601 = vmatprep.subr.mxu0 0.0
    %2602 = vmatpush1.msra.mxu0 0.0
    %2603 = vmatprep.subr.mxu0 0.0
    %2604 = vmatpush1.msra.mxu0 0.0
    %2605 = vmatprep.subr.mxu0 0.0
    %2606 = vmatpush1.msra.mxu0 0.0
    %2607 = vmatprep.subr.mxu0 0.0
    %2608 = vmatpush1.msra.mxu0 0.0
    %2609 = vmatprep.subr.mxu0 0.0
    %2610 = vmatpush1.msra.mxu0 0.0
    %2611 = vmatprep.subr.mxu0 0.0
    %2612 = vmatpush1.msra.mxu0 0.0
    %2613 = vmatprep.subr.mxu0 0.0
    %2614 = vmatpush1.msra.mxu0 0.0
    %2615 = vmatprep.subr.mxu0 0.0
    %2616 = vmatpush1.msra.mxu0 0.0
    %2617 = vmatprep.mubr.f32.mxu0 0.0
    %2618 = vmatmul.mubr.f32.gmra.mrb[0].mxu0 %v2551
    %v2619 = vpop.f32.mrb[0].mxu0
    %v2620 = vadd.f32 0.0, %v2619
    %v2621 = vpop.f32.mrb[0].mxu0
    %2622 = vdwg.mxu0
    %v2624 = vsel %vm805, %v2403, 0
    %2626 = vmatprep.subr.mxu0 0.0
    %2627 = vmatpush1.msra.mxu0 %v2055
    %2628 = vmatprep.subr.mxu0 0.0
    %2629 = vmatpush1.msra.mxu0 0.0
    %2630 = vmatprep.subr.mxu0 0.0
    %2631 = vmatpush1.msra.mxu0 0.0
    %2632 = vmatprep.subr.mxu0 0.0
    %2633 = vmatpush1.msra.mxu0 0.0
    %2634 = vmatprep.subr.mxu0 0.0
    %2635 = vmatpush1.msra.mxu0 0.0
    %2636 = vmatprep.subr.mxu0 0.0
    %2637 = vmatpush1.msra.mxu0 0.0
    %2638 = vmatprep.subr.mxu0 0.0
    %2639 = vmatpush1.msra.mxu0 0.0
    %2640 = vmatprep.subr.mxu0 0.0
    %2641 = vmatpush1.msra.mxu0 0.0
    %2642 = vmatprep.subr.mxu0 0.0
    %2643 = vmatpush1.msra.mxu0 0.0
    %2644 = vmatprep.subr.mxu0 0.0
    %2645 = vmatpush1.msra.mxu0 0.0
    %2646 = vmatprep.subr.mxu0 0.0
    %2647 = vmatpush1.msra.mxu0 0.0
    %2648 = vmatprep.subr.mxu0 0.0
    %2649 = vmatpush1.msra.mxu0 0.0
    %2650 = vmatprep.subr.mxu0 0.0
    %2651 = vmatpush1.msra.mxu0 0.0
    %2652 = vmatprep.subr.mxu0 0.0
    %2653 = vmatpush1.msra.mxu0 0.0
    %2654 = vmatprep.subr.mxu0 0.0
    %2655 = vmatpush1.msra.mxu0 0.0
    %2656 = vmatprep.subr.mxu0 0.0
    %2657 = vmatpush1.msra.mxu0 0.0
    %2658 = vmatprep.subr.mxu0 0.0
    %2659 = vmatpush1.msra.mxu0 0.0
    %2660 = vmatprep.subr.mxu0 0.0
    %2661 = vmatpush1.msra.mxu0 0.0
    %2662 = vmatprep.subr.mxu0 0.0
    %2663 = vmatpush1.msra.mxu0 0.0
    %2664 = vmatprep.subr.mxu0 0.0
    %2665 = vmatpush1.msra.mxu0 0.0
    %2666 = vmatprep.subr.mxu0 0.0
    %2667 = vmatpush1.msra.mxu0 0.0
    %2668 = vmatprep.subr.mxu0 0.0
    %2669 = vmatpush1.msra.mxu0 0.0
    %2670 = vmatprep.subr.mxu0 0.0
    %2671 = vmatpush1.msra.mxu0 0.0
    %2672 = vmatprep.subr.mxu0 0.0
    %2673 = vmatpush1.msra.mxu0 0.0
    %2674 = vmatprep.subr.mxu0 0.0
    %2675 = vmatpush1.msra.mxu0 0.0
    %2676 = vmatprep.subr.mxu0 0.0
    %2677 = vmatpush1.msra.mxu0 0.0
    %2678 = vmatprep.subr.mxu0 0.0
    %2679 = vmatpush1.msra.mxu0 0.0
    %2680 = vmatprep.subr.mxu0 0.0
    %2681 = vmatpush1.msra.mxu0 0.0
    %2682 = vmatprep.subr.mxu0 0.0
    %2683 = vmatpush1.msra.mxu0 0.0
    %2684 = vmatprep.subr.mxu0 0.0
    %2685 = vmatpush1.msra.mxu0 0.0
    %2686 = vmatprep.subr.mxu0 0.0
    %2687 = vmatpush1.msra.mxu0 0.0
    %2688 = vmatprep.subr.mxu0 0.0
    %2689 = vmatpush1.msra.mxu0 0.0
    %2690 = vmatprep.mubr.f32.mxu0 0.0
    %2691 = vmatmul.mubr.f32.gmra.mrb[0].mxu0 %v2624
    %v2692 = vpop.f32.mrb[0].mxu0
    %v2693 = vadd.f32 0.0, %v2692
    %v2694 = vpop.f32.mrb[0].mxu0
    %2695 = vdwg.mxu0
    %v2696 = vcombine.low %v2474, %v2620
    %v2697 = vcombine.high %v2474, %v2620
    %v2699 = vunpack.c.l.s4 1983009808
    %v2700 = vunpack.c.0.s8 %v2699
    %v2701 = vlaneseq
    %v2702 = vshrl.u32 %v2701, 7
    %v2703 = vsub.s32 %v2700, %v2702
    %v2704 = vrot.slane %v2696, %v2703
    %v2706 = vunpack.c.l.s4 1983009808
    %v2707 = vunpack.c.0.s8 %v2706
    %v2708 = vlaneseq
    %v2709 = vshrl.u32 %v2708, 7
    %v2710 = vsub.s32 %v2707, %v2709
    %v2711 = vrot.slane %v2697, %v2710
    %v2712 = vcombine.low %v2547, %v2693
    %v2713 = vcombine.high %v2547, %v2693
    %v2715 = vunpack.c.l.s4 1983009808
    %v2716 = vunpack.c.0.s8 %v2715
    %v2717 = vlaneseq
    %v2718 = vshrl.u32 %v2717, 7
    %v2719 = vsub.s32 %v2716, %v2718
    %v2720 = vrot.slane %v2712, %v2719
    %v2722 = vunpack.c.l.s4 1983009808
    %v2723 = vunpack.c.0.s8 %v2722
    %v2724 = vlaneseq
    %v2725 = vshrl.u32 %v2724, 7
    %v2726 = vsub.s32 %v2723, %v2725
    %v2727 = vrot.slane %v2713, %v2726
    %v2728 = vcombine.low %v2704, %v2720
    %v2729 = vcombine.high %v2704, %v2720
    %v2731 = vunpack.c.l.s4 1934713408
    %v2732 = vunpack.c.0.s8 %v2731
    %v2733 = vlaneseq
    %v2734 = vshrl.u32 %v2733, 7
    %v2735 = vsub.s32 %v2732, %v2734
    %v2736 = vrot.slane %v2728, %v2735
    %v2738 = vunpack.c.l.s4 1934713408
    %v2739 = vunpack.c.0.s8 %v2738
    %v2740 = vlaneseq
    %v2741 = vshrl.u32 %v2740, 7
    %v2742 = vsub.s32 %v2739, %v2741
    %v2743 = vrot.slane %v2729, %v2742
    %v2744 = vcombine.low %v2711, %v2727
    %v2745 = vcombine.high %v2711, %v2727
    %v2747 = vunpack.c.l.s4 1934713408
    %v2748 = vunpack.c.0.s8 %v2747
    %v2749 = vlaneseq
    %v2750 = vshrl.u32 %v2749, 7
    %v2751 = vsub.s32 %v2748, %v2750
    %v2752 = vrot.slane %v2744, %v2751
    %v2754 = vunpack.c.l.s4 1934713408
    %v2755 = vunpack.c.0.s8 %v2754
    %v2756 = vlaneseq
    %v2757 = vshrl.u32 %v2756, 7
    %v2758 = vsub.s32 %v2755, %v2757
    %v2759 = vrot.slane %v2745, %v2758
    %v2760 = vcombine.high %v2736, 0.0
    %v2761 = vcombine.high %v2743, 0.0
    %v2762 = vcombine.high %v2752, 0.0
    %v2763 = vcombine.high %v2759, 0.0
    %v2764 = vcombine.low %v2736, %v2743
    %v2766 = vunpack.c.l.s4 1983009808
    %v2767 = vunpack.c.0.s8 %v2766
    %v2768 = vlaneseq
    %v2769 = vshrl.u32 %v2768, 7
    %v2770 = vsub.s32 %v2767, %v2769
    %v2771 = vrot.slane %v2764, %v2770
    %v2772 = vcombine.low %v2760, %v2761
    %v2774 = vunpack.c.l.s4 1983009808
    %v2775 = vunpack.c.0.s8 %v2774
    %v2776 = vlaneseq
    %v2777 = vshrl.u32 %v2776, 7
    %v2778 = vsub.s32 %v2775, %v2777
    %v2779 = vrot.slane %v2772, %v2778
    %v2780 = vcombine.low %v2752, %v2759
    %v2782 = vunpack.c.l.s4 1983009808
    %v2783 = vunpack.c.0.s8 %v2782
    %v2784 = vlaneseq
    %v2785 = vshrl.u32 %v2784, 7
    %v2786 = vsub.s32 %v2783, %v2785
    %v2787 = vrot.slane %v2780, %v2786
    %v2788 = vcombine.low %v2762, %v2763
    %v2790 = vunpack.c.l.s4 1983009808
    %v2791 = vunpack.c.0.s8 %v2790
    %v2792 = vlaneseq
    %v2793 = vshrl.u32 %v2792, 7
    %v2794 = vsub.s32 %v2791, %v2793
    %v2795 = vrot.slane %v2788, %v2794
    %v2796 = vcombine.low %v2771, %v2779
    %v2797 = vcombine.high %v2771, %v2779
    %v2799 = vunpack.c.l.s4 1934713408
    %v2800 = vunpack.c.0.s8 %v2799
    %v2801 = vlaneseq
    %v2802 = vshrl.u32 %v2801, 7
    %v2803 = vsub.s32 %v2800, %v2802
    %v2804 = vrot.slane %v2796, %v2803
    %v2806 = vunpack.c.l.s4 1934713408
    %v2807 = vunpack.c.0.s8 %v2806
    %v2808 = vlaneseq
    %v2809 = vshrl.u32 %v2808, 7
    %v2810 = vsub.s32 %v2807, %v2809
    %v2811 = vrot.slane %v2797, %v2810
    %v2812 = vcombine.low %v2787, %v2795
    %v2813 = vcombine.high %v2787, %v2795
    %v2815 = vunpack.c.l.s4 1934713408
    %v2816 = vunpack.c.0.s8 %v2815
    %v2817 = vlaneseq
    %v2818 = vshrl.u32 %v2817, 7
    %v2819 = vsub.s32 %v2816, %v2818
    %v2820 = vrot.slane %v2812, %v2819
    %v2822 = vunpack.c.l.s4 1934713408
    %v2823 = vunpack.c.0.s8 %v2822
    %v2824 = vlaneseq
    %v2825 = vshrl.u32 %v2824, 7
    %v2826 = vsub.s32 %v2823, %v2825
    %v2827 = vrot.slane %v2813, %v2826
    %v2828 = vcombine.low %v2804, %v2820
    %v2829 = vcombine.high %v2804, %v2820
    %v2830 = vcombine.low %v2811, %v2827
    %v2831 = vcombine.high %v2811, %v2827
    %2833 = vrot.lane.b32.xlu0 %v2829, 8
    %v2834 = vpop.permute.xlu0 %2833
    %2837 = vrot.lane.b32.xlu0 %v2830, 16
    %v2838 = vpop.permute.xlu0 %2837
    %2841 = vrot.lane.b32.xlu0 %v2831, 24
    %v2842 = vpop.permute.xlu0 %2841
    %v2844 = vsel %vm805, %v2828, %v2834
    %v2845 = vsel %vm1595, %v2844, %v2838
    %v2846 = vsel %vm1597, %v2845, %v2842
    %s2847 = scalar_lea.vmem [#allocation2], 8
    %2848 = vst.msk [vmem:[%s2847] sm:$0xff] %vm55, %v2846
    // Predicated region
    $region22: #{tpu_custom_call.1} parent=1 // pred_check
      _
    $region23: #{tpu_custom_call.1} parent=1 // pred_check_branch
      %2850 = sbr.rel (0) target = $region25
    $region24: #{tpu_custom_call.1} parent=1 // pred_region
      %s2852 = ssub.s32 256, 256
      %2853 = vsyncadd [#allocation3], %s2852
      %s2854 = sshll.u32 [#allocation2], 4
      %s2855 = int_to_ptr.vmem [resolvable:$true] %s2854
      %2860 = dma.vmem_to_hbm [thread:$0]  %s2855, 256, %s5, [#allocation3], 128, 128, 8
    $region25: #{tpu_custom_call.1} parent=1 // pred_fallthru
      _
    // Predicated region
    $region26: #{tpu_custom_call.1} parent=1 // pred_check
      _
    $region27: #{tpu_custom_call.1} parent=1 // pred_check_branch
      %2862 = sbr.rel (0) target = $region29
    $region28: #{tpu_custom_call.1} parent=1 // pred_region
      %2863 = dma.done [#allocation3], 256
    $region29: #{tpu_custom_call.1} parent=1 // pred_fallthru
      _
    %2864 = vsyncpa [#allocation3], 1

// kernel: tpu_custom_call.1
$region0: #{tpu_custom_call.1}
  #allocation0 [shape = 'u32[]', space=smem, size = 0x4, offset = 0x4, fixed_abs, tag = 'smem constant byte address 0x4 - core index']
  #allocation1 [shape = 'u32[144,128]{1,0:T(1,128)}', space=vmem, size = 0x12000, scoped, tag = 'internal scratch']
  %s0 = inlined_call_operand.vmem [shape: f32[2,8,32], index: 0, kind: input, shape index: {}]
  %s1 = inlined_call_operand.vmem [shape: f32[160,32], index: 1, kind: input, shape index: {}]
  %s2 = inlined_call_operand.vmem [shape: f32[1,160], index: 2, kind: input, shape index: {}]
  %s3 = inlined_call_operand.vmem [shape: f32[64,32], index: 3, kind: input, shape index: {}]
  %s4 = inlined_call_operand.vmem [shape: f32[1,64], index: 4, kind: input, shape index: {}]
  %s5 = inlined_call_operand.hbm [shape: f32[2,8,32], index: 5, kind: output, shape index: {}]
  %s6 = sld [smem:[#allocation0]]
  $region30: #{tpu_custom_call.1} parent=0
    _
  %s8 = ssub.s32 1, %s6
  %s9 = scalar_select 0, %s8, %s6
  $region1: #{tpu_custom_call.1} parent=0
    #allocation2 [shape = 'u8[8192]{0}', space=vmem, size = 0x2000, scoped, tag = 'output window, operand 0, single buffered']
    #allocation3 [shape = 's32[1]{0}', space=sflag, size = 0x4, scoped, tag = 'scoped memory for tpu_custom_call.1']
    %10 = vsyncpa [#allocation3], 0
    // Predicated region
    $region2: #{tpu_custom_call.1} parent=1 // pred_check
      _
    $region3: #{tpu_custom_call.1} parent=1 // pred_check_branch
      %12 = sbr.rel (0) target = $region5
    $region4: #{tpu_custom_call.1} parent=1 // pred_region
      _
    $region5: #{tpu_custom_call.1} parent=1 // pred_fallthru
      _
    // Predicated region
    $region6: #{tpu_custom_call.1} parent=1 // pred_check
      _
    $region7: #{tpu_custom_call.1} parent=1 // pred_check_branch
      %14 = sbr.rel (0) target = $region9
    $region8: #{tpu_custom_call.1} parent=1 // pred_region
      _
    $region9: #{tpu_custom_call.1} parent=1 // pred_fallthru
      _
    // Predicated region
    $region10: #{tpu_custom_call.1} parent=1 // pred_check
      _
    $region11: #{tpu_custom_call.1} parent=1 // pred_check_branch
      %16 = sbr.rel (0) target = $region13
    $region12: #{tpu_custom_call.1} parent=1 // pred_region
      _
    $region13: #{tpu_custom_call.1} parent=1 // pred_fallthru
      _
    // Predicated region
    $region14: #{tpu_custom_call.1} parent=1 // pred_check
      _
    $region15: #{tpu_custom_call.1} parent=1 // pred_check_branch
      %18 = sbr.rel (0) target = $region17
    $region16: #{tpu_custom_call.1} parent=1 // pred_region
      _
    $region17: #{tpu_custom_call.1} parent=1 // pred_fallthru
      _
    // Predicated region
    $region18: #{tpu_custom_call.1} parent=1 // pred_check
      _
    $region19: #{tpu_custom_call.1} parent=1 // pred_check_branch
      %20 = sbr.rel (0) target = $region21
    $region20: #{tpu_custom_call.1} parent=1 // pred_region
      _
    $region21: #{tpu_custom_call.1} parent=1 // pred_fallthru
      _
    %v21 = vld [vmem:[%s0] sm:$0xff]
    %v22 = vld [vmem:[%s0 + $0x8] sm:$0xff]
    %v23 = vld [vmem:[%s1] sm:$0xff]
    %v24 = vld [vmem:[%s1 + $0x8] sm:$0xff]
    %v25 = vld [vmem:[%s1 + $0x10] sm:$0xff]
    %v26 = vld [vmem:[%s1 + $0x18] sm:$0xff]
    %v27 = vld [vmem:[%s1 + $0x20] sm:$0xff]
    %v28 = vld [vmem:[%s1 + $0x28] sm:$0xff]
    %v29 = vld [vmem:[%s1 + $0x30] sm:$0xff]
    %v30 = vld [vmem:[%s1 + $0x38] sm:$0xff]
    %v31 = vld [vmem:[%s1 + $0x40] sm:$0xff]
    %v32 = vld [vmem:[%s1 + $0x48] sm:$0xff]
    %v33 = vld [vmem:[%s1 + $0x50] sm:$0xff]
    %v34 = vld [vmem:[%s1 + $0x58] sm:$0xff]
    %v35 = vld [vmem:[%s1 + $0x60] sm:$0xff]
    %v36 = vld [vmem:[%s1 + $0x68] sm:$0xff]
    %v37 = vld [vmem:[%s1 + $0x70] sm:$0xff]
    %v38 = vld [vmem:[%s1 + $0x78] sm:$0xff]
    %v39 = vld [vmem:[%s1 + $0x80] sm:$0xff]
    %v40 = vld [vmem:[%s1 + $0x88] sm:$0xff]
    %v41 = vld [vmem:[%s1 + $0x90] sm:$0xff]
    %v42 = vld [vmem:[%s1 + $0x98] sm:$0xff]
    %v43 = vld [vmem:[%s2] sm:$0x3]
    %v45 = vlaneseq
    %v46 = vshrl.u32 %v45, 7
    %v47 = vsub.s32 0, %v46
    %v48 = vrot.slane %v43, %v47
    %v49 = vlaneseq
    %v50 = vshrl.u32 %v49, 7
    %v51 = vsub.s32 1, %v50
    %v52 = vrot.slane %v43, %v51
    %vm55 = vcmask 261120
    %v57 = vsel %vm55, %v21, 0
    %v60 = vsel %vm55, %v22, 0
    %v63 = vsel %vm55, %v23, 0
    %v66 = vsel %vm55, %v24, 0
    %v69 = vsel %vm55, %v25, 0
    %v72 = vsel %vm55, %v26, 0
    %v75 = vsel %vm55, %v27, 0
    %v78 = vsel %vm55, %v28, 0
    %v81 = vsel %vm55, %v29, 0
    %v84 = vsel %vm55, %v30, 0
    %v87 = vsel %vm55, %v31, 0
    %v90 = vsel %vm55, %v32, 0
    %v93 = vsel %vm55, %v33, 0
    %v96 = vsel %vm55, %v34, 0
    %v99 = vsel %vm55, %v35, 0
    %v102 = vsel %vm55, %v36, 0
    %v105 = vsel %vm55, %v37, 0
    %v108 = vsel %vm55, %v38, 0
    %v111 = vsel %vm55, %v39, 0
    %v114 = vsel %vm55, %v40, 0
    %v117 = vsel %vm55, %v41, 0
    %v120 = vsel %vm55, %v42, 0
    %122 = vmatprep.subr.mxu0 0.0
    %123 = vmatpush1.xpose.msra.mxu0 %v63
    %124 = vmatprep.subr.mxu0 0.0
    %125 = vmatpush1.xpose.msra.mxu0 %v66
    %126 = vmatprep.subr.mxu0 0.0
    %127 = vmatpush1.xpose.msra.mxu0 %v69
    %128 = vmatprep.subr.mxu0 0.0
    %129 = vmatpush1.xpose.msra.mxu0 %v72
    %130 = vmatprep.subr.mxu0 0.0
    %131 = vmatpush1.xpose.msra.mxu0 %v75
    %132 = vmatprep.subr.mxu0 0.0
    %133 = vmatpush1.xpose.msra.mxu0 %v78
    %134 = vmatprep.subr.mxu0 0.0
    %135 = vmatpush1.xpose.msra.mxu0 %v81
    %136 = vmatprep.subr.mxu0 0.0
    %137 = vmatpush1.xpose.msra.mxu0 %v84
    %138 = vmatprep.subr.mxu0 0.0
    %139 = vmatpush1.xpose.msra.mxu0 %v87
    %140 = vmatprep.subr.mxu0 0.0
    %141 = vmatpush1.xpose.msra.mxu0 %v90
    %142 = vmatprep.subr.mxu0 0.0
    %143 = vmatpush1.xpose.msra.mxu0 %v93
    %144 = vmatprep.subr.mxu0 0.0
    %145 = vmatpush1.xpose.msra.mxu0 %v96
    %146 = vmatprep.subr.mxu0 0.0
    %147 = vmatpush1.xpose.msra.mxu0 %v99
    %148 = vmatprep.subr.mxu0 0.0
    %149 = vmatpush1.xpose.msra.mxu0 %v102
    %150 = vmatprep.subr.mxu0 0.0
    %151 = vmatpush1.xpose.msra.mxu0 %v105
    %152 = vmatprep.subr.mxu0 0.0
    %153 = vmatpush1.xpose.msra.mxu0 %v108
    %154 = vmatprep.subr.mxu0 0.0
    %155 = vmatpush1.xpose.msra.mxu0 %v111
    %156 = vmatprep.subr.mxu0 0.0
    %157 = vmatpush1.xpose.msra.mxu0 %v114
    %158 = vmatprep.subr.mxu0 0.0
    %159 = vmatpush1.xpose.msra.mxu0 %v117
    %160 = vmatprep.subr.mxu0 0.0
    %161 = vmatpush1.xpose.msra.mxu0 %v120
    %162 = vmatprep.subr.mxu0 0.0
    %163 = vmatpush1.xpose.msra.mxu0 0.0
    %164 = vmatprep.subr.mxu0 0.0
    %165 = vmatpush1.xpose.msra.mxu0 0.0
    %166 = vmatprep.subr.mxu0 0.0
    %167 = vmatpush1.xpose.msra.mxu0 0.0
    %168 = vmatprep.subr.mxu0 0.0
    %169 = vmatpush1.xpose.msra.mxu0 0.0
    %170 = vmatprep.subr.mxu0 0.0
    %171 = vmatpush1.xpose.msra.mxu0 0.0
    %172 = vmatprep.subr.mxu0 0.0
    %173 = vmatpush1.xpose.msra.mxu0 0.0
    %174 = vmatprep.subr.mxu0 0.0
    %175 = vmatpush1.xpose.msra.mxu0 0.0
    %176 = vmatprep.subr.mxu0 0.0
    %177 = vmatpush1.xpose.msra.mxu0 0.0
    %178 = vmatprep.subr.mxu0 0.0
    %179 = vmatpush1.xpose.msra.mxu0 0.0
    %180 = vmatprep.subr.mxu0 0.0
    %181 = vmatpush1.xpose.msra.mxu0 0.0
    %182 = vmatprep.subr.mxu0 0.0
    %183 = vmatpush1.xpose.msra.mxu0 0.0
    %184 = vmatprep.subr.mxu0 0.0
    %185 = vmatpush1.xpose.msra.mxu0 0.0
    %186 = vmatprep.mubr.f32.mxu0 0.0
    %187 = vmatmul.mubr.f32.gmra.mrb[0].mxu0 %v57
    %v188 = vpop.f32.mrb[0].mxu0
    %v189 = vadd.f32 %v48, %v188
    %v190 = vpop.f32.mrb[0].mxu0
    %v191 = vadd.f32 %v52, %v190
    %192 = vmatprep.mubr.f32.mxu0 0.0
    %193 = vmatmul.mubr.f32.gmra.mrb[0].mxu0 %v60
    %v194 = vpop.f32.mrb[0].mxu0
    %v195 = vadd.f32 %v48, %v194
    %v196 = vpop.f32.mrb[0].mxu0
    %v197 = vadd.f32 %v52, %v196
    %198 = vdwg.mxu0
    %201 = vrot.lane.b32.xlu0 %v191, 96
    %v202 = vpop.permute.xlu0 %201
    %203 = vrot.lane.b32.xlu0 %v197, 96
    %v204 = vpop.permute.xlu0 %203
    %v207 = vmul.f32 %v189, %v202
    %v208 = vmul.f32 %v195, %v204
    %v209 = vld [vmem:[%s3] sm:$0xff]
    %v210 = vld [vmem:[%s3 + $0x8] sm:$0xff]
    %v211 = vld [vmem:[%s3 + $0x10] sm:$0xff]
    %v212 = vld [vmem:[%s3 + $0x18] sm:$0xff]
    %v213 = vld [vmem:[%s3 + $0x20] sm:$0xff]
    %v214 = vld [vmem:[%s3 + $0x28] sm:$0xff]
    %v215 = vld [vmem:[%s3 + $0x30] sm:$0xff]
    %v216 = vld [vmem:[%s3 + $0x38] sm:$0xff]
    %v217 = vld [vmem:[%s4] sm:$0x1]
    %v219 = vlaneseq
    %v220 = vshrl.u32 %v219, 7
    %v221 = vsub.s32 0, %v220
    %v222 = vrot.slane %v217, %v221
    %226 = vrot.lane.b32.xlu0 %v207, 32
    %v227 = vpop.permute.xlu0 %226
    %228 = vrot.lane.b32.xlu0 %v208, 32
    %v229 = vpop.permute.xlu0 %228
    %v230 = vsel %vm55, %v227, 0
    %v232 = vsel %vm55, %v229, 0
    %v235 = vsel %vm55, %v209, 0
    %v238 = vsel %vm55, %v210, 0
    %v241 = vsel %vm55, %v211, 0
    %v244 = vsel %vm55, %v212, 0
    %v247 = vsel %vm55, %v213, 0
    %v250 = vsel %vm55, %v214, 0
    %v253 = vsel %vm55, %v215, 0
    %v256 = vsel %vm55, %v216, 0
    %258 = vmatprep.subr.mxu0 0.0
    %259 = vmatpush1.xpose.msra.mxu0 %v235
    %260 = vmatprep.subr.mxu0 0.0
    %261 = vmatpush1.xpose.msra.mxu0 %v238
    %262 = vmatprep.subr.mxu0 0.0
    %263 = vmatpush1.xpose.msra.mxu0 %v241
    %264 = vmatprep.subr.mxu0 0.0
    %265 = vmatpush1.xpose.msra.mxu0 %v244
    %266 = vmatprep.subr.mxu0 0.0
    %267 = vmatpush1.xpose.msra.mxu0 %v247
    %268 = vmatprep.subr.mxu0 0.0
    %269 = vmatpush1.xpose.msra.mxu0 %v250
    %270 = vmatprep.subr.mxu0 0.0
    %271 = vmatpush1.xpose.msra.mxu0 %v253
    %272 = vmatprep.subr.mxu0 0.0
    %273 = vmatpush1.xpose.msra.mxu0 %v256
    %274 = vmatprep.subr.mxu0 0.0
    %275 = vmatpush1.xpose.msra.mxu0 0.0
    %276 = vmatprep.subr.mxu0 0.0
    %277 = vmatpush1.xpose.msra.mxu0 0.0
    %278 = vmatprep.subr.mxu0 0.0
    %279 = vmatpush1.xpose.msra.mxu0 0.0
    %280 = vmatprep.subr.mxu0 0.0
    %281 = vmatpush1.xpose.msra.mxu0 0.0
    %282 = vmatprep.subr.mxu0 0.0
    %283 = vmatpush1.xpose.msra.mxu0 0.0
    %284 = vmatprep.subr.mxu0 0.0
    %285 = vmatpush1.xpose.msra.mxu0 0.0
    %286 = vmatprep.subr.mxu0 0.0
    %287 = vmatpush1.xpose.msra.mxu0 0.0
    %288 = vmatprep.subr.mxu0 0.0
    %289 = vmatpush1.xpose.msra.mxu0 0.0
    %290 = vmatprep.subr.mxu0 0.0
    %291 = vmatpush1.xpose.msra.mxu0 0.0
    %292 = vmatprep.subr.mxu0 0.0
    %293 = vmatpush1.xpose.msra.mxu0 0.0
    %294 = vmatprep.subr.mxu0 0.0
    %295 = vmatpush1.xpose.msra.mxu0 0.0
    %296 = vmatprep.subr.mxu0 0.0
    %297 = vmatpush1.xpose.msra.mxu0 0.0
    %298 = vmatprep.subr.mxu0 0.0
    %299 = vmatpush1.xpose.msra.mxu0 0.0
    %300 = vmatprep.subr.mxu0 0.0
    %301 = vmatpush1.xpose.msra.mxu0 0.0
    %302 = vmatprep.subr.mxu0 0.0
    %303 = vmatpush1.xpose.msra.mxu0 0.0
    %304 = vmatprep.subr.mxu0 0.0
    %305 = vmatpush1.xpose.msra.mxu0 0.0
    %306 = vmatprep.subr.mxu0 0.0
    %307 = vmatpush1.xpose.msra.mxu0 0.0
    %308 = vmatprep.subr.mxu0 0.0
    %309 = vmatpush1.xpose.msra.mxu0 0.0
    %310 = vmatprep.subr.mxu0 0.0
    %311 = vmatpush1.xpose.msra.mxu0 0.0
    %312 = vmatprep.subr.mxu0 0.0
    %313 = vmatpush1.xpose.msra.mxu0 0.0
    %314 = vmatprep.subr.mxu0 0.0
    %315 = vmatpush1.xpose.msra.mxu0 0.0
    %316 = vmatprep.subr.mxu0 0.0
    %317 = vmatpush1.xpose.msra.mxu0 0.0
    %318 = vmatprep.subr.mxu0 0.0
    %319 = vmatpush1.xpose.msra.mxu0 0.0
    %320 = vmatprep.subr.mxu0 0.0
    %321 = vmatpush1.xpose.msra.mxu0 0.0
    %322 = vmatprep.mubr.f32.mxu0 0.0
    %323 = vmatmul.mubr.f32.gmra.mrb[0].mxu0 %v230
    %v324 = vpop.f32.mrb[0].mxu0
    %v325 = vadd.f32 %v222, %v324
    %v326 = vpop.f32.mrb[0].mxu0
    %327 = vmatprep.mubr.f32.mxu0 0.0
    %328 = vmatmul.mubr.f32.gmra.mrb[0].mxu0 %v232
    %v329 = vpop.f32.mrb[0].mxu0
    %v330 = vadd.f32 %v222, %v329
    %v331 = vpop.f32.mrb[0].mxu0
    %332 = vdwg.mxu0
    %v333 = vxor.u32 %v325, 2147483648
    %v334 = vxor.u32 %v330, 2147483648
    %v335 = vmul.f32 %v333, 1.442695
    %v336 = vpow.pop %v335
    %v337 = vmul.f32 %v334, 1.442695
    %v338 = vpow.pop %v337
    %v339 = vadd.f32 %v336, 1.0
    %v340 = vadd.f32 %v338, 1.0
    %v341 = vrcp.pop %v339
    %v342 = vmul.f32 1.0, %v341
    %v343 = vrcp.pop %v340
    %v344 = vmul.f32 1.0, %v343
    %v345 = vmul.f32 %v189, %v342
    %v346 = vmul.f32 %v195, %v344
    %v347 = vmul.f32 %v345, 0.35355338
    %v348 = vmul.f32 %v346, 0.35355338
    %350 = vrot.lane.b32.xlu0 %v347, 120
    %v351 = vpop.permute.xlu0 %350
    %353 = vrot.lane.b32.xlu0 %v347, 112
    %v354 = vpop.permute.xlu0 %353
    %356 = vrot.lane.b32.xlu0 %v347, 104
    %v357 = vpop.permute.xlu0 %356
    %v359 = vcombine.low %v347, %v354
    %v360 = vcombine.high %v347, %v354
    %v362 = vunpack.c.l.s4 1983009808
    %v363 = vunpack.c.0.s8 %v362
    %v364 = vlaneseq
    %v365 = vshrl.u32 %v364, 7
    %v366 = vsub.s32 %v363, %v365
    %v367 = vrot.slane %v359, %v366
    %v369 = vunpack.c.l.s4 1983009808
    %v370 = vunpack.c.0.s8 %v369
    %v371 = vlaneseq
    %v372 = vshrl.u32 %v371, 7
    %v373 = vsub.s32 %v370, %v372
    %v374 = vrot.slane %v360, %v373
    %v375 = vcombine.low %v351, %v357
    %v376 = vcombine.high %v351, %v357
    %v378 = vunpack.c.l.s4 1983009808
    %v379 = vunpack.c.0.s8 %v378
    %v380 = vlaneseq
    %v381 = vshrl.u32 %v380, 7
    %v382 = vsub.s32 %v379, %v381
    %v383 = vrot.slane %v375, %v382
    %v385 = vunpack.c.l.s4 1983009808
    %v386 = vunpack.c.0.s8 %v385
    %v387 = vlaneseq
    %v388 = vshrl.u32 %v387, 7
    %v389 = vsub.s32 %v386, %v388
    %v390 = vrot.slane %v376, %v389
    %v391 = vcombine.low %v367, %v383
    %v392 = vcombine.high %v367, %v383
    %v394 = vunpack.c.l.s4 1934713408
    %v395 = vunpack.c.0.s8 %v394
    %v396 = vlaneseq
    %v397 = vshrl.u32 %v396, 7
    %v398 = vsub.s32 %v395, %v397
    %v399 = vrot.slane %v391, %v398
    %v401 = vunpack.c.l.s4 1934713408
    %v402 = vunpack.c.0.s8 %v401
    %v403 = vlaneseq
    %v404 = vshrl.u32 %v403, 7
    %v405 = vsub.s32 %v402, %v404
    %v406 = vrot.slane %v392, %v405
    %v407 = vcombine.low %v374, %v390
    %v408 = vcombine.high %v374, %v390
    %v410 = vunpack.c.l.s4 1934713408
    %v411 = vunpack.c.0.s8 %v410
    %v412 = vlaneseq
    %v413 = vshrl.u32 %v412, 7
    %v414 = vsub.s32 %v411, %v413
    %v415 = vrot.slane %v407, %v414
    %v417 = vunpack.c.l.s4 1934713408
    %v418 = vunpack.c.0.s8 %v417
    %v419 = vlaneseq
    %v420 = vshrl.u32 %v419, 7
    %v421 = vsub.s32 %v418, %v420
    %v422 = vrot.slane %v408, %v421
    %v423 = vcombine.high %v399, 0.0
    %v424 = vcombine.high %v406, 0.0
    %v425 = vcombine.high %v415, 0.0
    %v426 = vcombine.high %v422, 0.0
    %v427 = vcombine.low %v399, %v406
    %v429 = vunpack.c.l.s4 1983009808
    %v430 = vunpack.c.0.s8 %v429
    %v431 = vlaneseq
    %v432 = vshrl.u32 %v431, 7
    %v433 = vsub.s32 %v430, %v432
    %v434 = vrot.slane %v427, %v433
    %v435 = vcombine.low %v423, %v424
    %v437 = vunpack.c.l.s4 1983009808
    %v438 = vunpack.c.0.s8 %v437
    %v439 = vlaneseq
    %v440 = vshrl.u32 %v439, 7
    %v441 = vsub.s32 %v438, %v440
    %v442 = vrot.slane %v435, %v441
    %v443 = vcombine.low %v415, %v422
    %v445 = vunpack.c.l.s4 1983009808
    %v446 = vunpack.c.0.s8 %v445
    %v447 = vlaneseq
    %v448 = vshrl.u32 %v447, 7
    %v449 = vsub.s32 %v446, %v448
    %v450 = vrot.slane %v443, %v449
    %v451 = vcombine.low %v425, %v426
    %v453 = vunpack.c.l.s4 1983009808
    %v454 = vunpack.c.0.s8 %v453
    %v455 = vlaneseq
    %v456 = vshrl.u32 %v455, 7
    %v457 = vsub.s32 %v454, %v456
    %v458 = vrot.slane %v451, %v457
    %v459 = vcombine.low %v434, %v442
    %v460 = vcombine.high %v434, %v442
    %v462 = vunpack.c.l.s4 1934713408
    %v463 = vunpack.c.0.s8 %v462
    %v464 = vlaneseq
    %v465 = vshrl.u32 %v464, 7
    %v466 = vsub.s32 %v463, %v465
    %v467 = vrot.slane %v459, %v466
    %v469 = vunpack.c.l.s4 1934713408
    %v470 = vunpack.c.0.s8 %v469
    %v471 = vlaneseq
    %v472 = vshrl.u32 %v471, 7
    %v473 = vsub.s32 %v470, %v472
    %v474 = vrot.slane %v460, %v473
    %v475 = vcombine.low %v450, %v458
    %v476 = vcombine.high %v450, %v458
    %v478 = vunpack.c.l.s4 1934713408
    %v479 = vunpack.c.0.s8 %v478
    %v480 = vlaneseq
    %v481 = vshrl.u32 %v480, 7
    %v482 = vsub.s32 %v479, %v481
    %v483 = vrot.slane %v475, %v482
    %v485 = vunpack.c.l.s4 1934713408
    %v486 = vunpack.c.0.s8 %v485
    %v487 = vlaneseq
    %v488 = vshrl.u32 %v487, 7
    %v489 = vsub.s32 %v486, %v488
    %v490 = vrot.slane %v476, %v489
    %v491 = vcombine.low %v467, %v483
    %v492 = vcombine.high %v467, %v483
    %v493 = vcombine.low %v474, %v490
    %v494 = vcombine.high %v474, %v490
    %496 = vrot.lane.b32.xlu0 %v345, 120
    %v497 = vpop.permute.xlu0 %496
    %498 = vrot.lane.b32.xlu0 %v345, 112
    %v499 = vpop.permute.xlu0 %498
    %500 = vrot.lane.b32.xlu0 %v345, 104
    %v501 = vpop.permute.xlu0 %500
    %502 = vrot.lane.b32.xlu0 %v345, 96
    %v503 = vpop.permute.xlu0 %502
    %504 = vrot.lane.b32.xlu0 %v497, 96
    %v505 = vpop.permute.xlu0 %504
    %506 = vrot.lane.b32.xlu0 %v499, 96
    %v507 = vpop.permute.xlu0 %506
    %508 = vrot.lane.b32.xlu0 %v501, 96
    %v509 = vpop.permute.xlu0 %508
    %v514 = vcombine.low %v503, %v507
    %v515 = vcombine.high %v503, %v507
    %v517 = vunpack.c.l.s4 1983009808
    %v518 = vunpack.c.0.s8 %v517
    %v519 = vlaneseq
    %v520 = vshrl.u32 %v519, 7
    %v521 = vsub.s32 %v518, %v520
    %v522 = vrot.slane %v514, %v521
    %v524 = vunpack.c.l.s4 1983009808
    %v525 = vunpack.c.0.s8 %v524
    %v526 = vlaneseq
    %v527 = vshrl.u32 %v526, 7
    %v528 = vsub.s32 %v525, %v527
    %v529 = vrot.slane %v515, %v528
    %v530 = vcombine.low %v505, %v509
    %v531 = vcombine.high %v505, %v509
    %v533 = vunpack.c.l.s4 1983009808
    %v534 = vunpack.c.0.s8 %v533
    %v535 = vlaneseq
    %v536 = vshrl.u32 %v535, 7
    %v537 = vsub.s32 %v534, %v536
    %v538 = vrot.slane %v530, %v537
    %v540 = vunpack.c.l.s4 1983009808
    %v541 = vunpack.c.0.s8 %v540
    %v542 = vlaneseq
    %v543 = vshrl.u32 %v542, 7
    %v544 = vsub.s32 %v541, %v543
    %v545 = vrot.slane %v531, %v544
    %v546 = vcombine.low %v522, %v538
    %v547 = vcombine.high %v522, %v538
    %v549 = vunpack.c.l.s4 1934713408
    %v550 = vunpack.c.0.s8 %v549
    %v551 = vlaneseq
    %v552 = vshrl.u32 %v551, 7
    %v553 = vsub.s32 %v550, %v552
    %v554 = vrot.slane %v546, %v553
    %v556 = vunpack.c.l.s4 1934713408
    %v557 = vunpack.c.0.s8 %v556
    %v558 = vlaneseq
    %v559 = vshrl.u32 %v558, 7
    %v560 = vsub.s32 %v557, %v559
    %v561 = vrot.slane %v547, %v560
    %v562 = vcombine.low %v529, %v545
    %v563 = vcombine.high %v529, %v545
    %v565 = vunpack.c.l.s4 1934713408
    %v566 = vunpack.c.0.s8 %v565
    %v567 = vlaneseq
    %v568 = vshrl.u32 %v567, 7
    %v569 = vsub.s32 %v566, %v568
    %v570 = vrot.slane %v562, %v569
    %v572 = vunpack.c.l.s4 1934713408
    %v573 = vunpack.c.0.s8 %v572
    %v574 = vlaneseq
    %v575 = vshrl.u32 %v574, 7
    %v576 = vsub.s32 %v573, %v575
    %v577 = vrot.slane %v563, %v576
    %v578 = vcombine.high %v554, 0.0
    %v579 = vcombine.high %v561, 0.0
    %v580 = vcombine.high %v570, 0.0
    %v581 = vcombine.high %v577, 0.0
    %v582 = vcombine.low %v554, %v561
    %v584 = vunpack.c.l.s4 1983009808
    %v585 = vunpack.c.0.s8 %v584
    %v586 = vlaneseq
    %v587 = vshrl.u32 %v586, 7
    %v588 = vsub.s32 %v585, %v587
    %v589 = vrot.slane %v582, %v588
    %v590 = vcombine.low %v578, %v579
    %v592 = vunpack.c.l.s4 1983009808
    %v593 = vunpack.c.0.s8 %v592
    %v594 = vlaneseq
    %v595 = vshrl.u32 %v594, 7
    %v596 = vsub.s32 %v593, %v595
    %v597 = vrot.slane %v590, %v596
    %v598 = vcombine.low %v570, %v577
    %v600 = vunpack.c.l.s4 1983009808
    %v601 = vunpack.c.0.s8 %v600
    %v602 = vlaneseq
    %v603 = vshrl.u32 %v602, 7
    %v604 = vsub.s32 %v601, %v603
    %v605 = vrot.slane %v598, %v604
    %v606 = vcombine.low %v580, %v581
    %v608 = vunpack.c.l.s4 1983009808
    %v609 = vunpack.c.0.s8 %v608
    %v610 = vlaneseq
    %v611 = vshrl.u32 %v610, 7
    %v612 = vsub.s32 %v609, %v611
    %v613 = vrot.slane %v606, %v612
    %v614 = vcombine.low %v589, %v597
    %v615 = vcombine.high %v589, %v597
    %v617 = vunpack.c.l.s4 1934713408
    %v618 = vunpack.c.0.s8 %v617
    %v619 = vlaneseq
    %v620 = vshrl.u32 %v619, 7
    %v621 = vsub.s32 %v618, %v620
    %v622 = vrot.slane %v614, %v621
    %v624 = vunpack.c.l.s4 1934713408
    %v625 = vunpack.c.0.s8 %v624
    %v626 = vlaneseq
    %v627 = vshrl.u32 %v626, 7
    %v628 = vsub.s32 %v625, %v627
    %v629 = vrot.slane %v615, %v628
    %v630 = vcombine.low %v605, %v613
    %v631 = vcombine.high %v605, %v613
    %v633 = vunpack.c.l.s4 1934713408
    %v634 = vunpack.c.0.s8 %v633
    %v635 = vlaneseq
    %v636 = vshrl.u32 %v635, 7
    %v637 = vsub.s32 %v634, %v636
    %v638 = vrot.slane %v630, %v637
    %v640 = vunpack.c.l.s4 1934713408
    %v641 = vunpack.c.0.s8 %v640
    %v642 = vlaneseq
    %v643 = vshrl.u32 %v642, 7
    %v644 = vsub.s32 %v641, %v643
    %v645 = vrot.slane %v631, %v644
    %v646 = vcombine.low %v622, %v638
    %v647 = vcombine.high %v622, %v638
    %v648 = vcombine.low %v629, %v645
    %v649 = vcombine.high %v629, %v645
    %651 = vrot.lane.b32.xlu0 %v189, 120
    %v652 = vpop.permute.xlu0 %651
    %653 = vrot.lane.b32.xlu0 %v189, 112
    %v654 = vpop.permute.xlu0 %653
    %655 = vrot.lane.b32.xlu0 %v189, 104
    %v656 = vpop.permute.xlu0 %655
    %657 = vrot.lane.b32.xlu0 %v189, 64
    %v658 = vpop.permute.xlu0 %657
    %659 = vrot.lane.b32.xlu0 %v652, 64
    %v660 = vpop.permute.xlu0 %659
    %661 = vrot.lane.b32.xlu0 %v654, 64
    %v662 = vpop.permute.xlu0 %661
    %663 = vrot.lane.b32.xlu0 %v656, 64
    %v664 = vpop.permute.xlu0 %663
    %v669 = vcombine.low %v658, %v662
    %v670 = vcombine.high %v658, %v662
    %v672 = vunpack.c.l.s4 1983009808
    %v673 = vunpack.c.0.s8 %v672
    %v674 = vlaneseq
    %v675 = vshrl.u32 %v674, 7
    %v676 = vsub.s32 %v673, %v675
    %v677 = vrot.slane %v669, %v676
    %v679 = vunpack.c.l.s4 1983009808
    %v680 = vunpack.c.0.s8 %v679
    %v681 = vlaneseq
    %v682 = vshrl.u32 %v681, 7
    %v683 = vsub.s32 %v680, %v682
    %v684 = vrot.slane %v670, %v683
    %v685 = vcombine.low %v660, %v664
    %v686 = vcombine.high %v660, %v664
    %v688 = vunpack.c.l.s4 1983009808
    %v689 = vunpack.c.0.s8 %v688
    %v690 = vlaneseq
    %v691 = vshrl.u32 %v690, 7
    %v692 = vsub.s32 %v689, %v691
    %v693 = vrot.slane %v685, %v692
    %v695 = vunpack.c.l.s4 1983009808
    %v696 = vunpack.c.0.s8 %v695
    %v697 = vlaneseq
    %v698 = vshrl.u32 %v697, 7
    %v699 = vsub.s32 %v696, %v698
    %v700 = vrot.slane %v686, %v699
    %v701 = vcombine.low %v677, %v693
    %v702 = vcombine.high %v677, %v693
    %v704 = vunpack.c.l.s4 1934713408
    %v705 = vunpack.c.0.s8 %v704
    %v706 = vlaneseq
    %v707 = vshrl.u32 %v706, 7
    %v708 = vsub.s32 %v705, %v707
    %v709 = vrot.slane %v701, %v708
    %v711 = vunpack.c.l.s4 1934713408
    %v712 = vunpack.c.0.s8 %v711
    %v713 = vlaneseq
    %v714 = vshrl.u32 %v713, 7
    %v715 = vsub.s32 %v712, %v714
    %v716 = vrot.slane %v702, %v715
    %v717 = vcombine.low %v684, %v700
    %v718 = vcombine.high %v684, %v700
    %v720 = vunpack.c.l.s4 1934713408
    %v721 = vunpack.c.0.s8 %v720
    %v722 = vlaneseq
    %v723 = vshrl.u32 %v722, 7
    %v724 = vsub.s32 %v721, %v723
    %v725 = vrot.slane %v717, %v724
    %v727 = vunpack.c.l.s4 1934713408
    %v728 = vunpack.c.0.s8 %v727
    %v729 = vlaneseq
    %v730 = vshrl.u32 %v729, 7
    %v731 = vsub.s32 %v728, %v730
    %v732 = vrot.slane %v718, %v731
    %v733 = vcombine.high %v709, 0.0
    %v734 = vcombine.high %v716, 0.0
    %v735 = vcombine.high %v725, 0.0
    %v736 = vcombine.high %v732, 0.0
    %v737 = vcombine.low %v709, %v716
    %v739 = vunpack.c.l.s4 1983009808
    %v740 = vunpack.c.0.s8 %v739
    %v741 = vlaneseq
    %v742 = vshrl.u32 %v741, 7
    %v743 = vsub.s32 %v740, %v742
    %v744 = vrot.slane %v737, %v743
    %v745 = vcombine.low %v733, %v734
    %v747 = vunpack.c.l.s4 1983009808
    %v748 = vunpack.c.0.s8 %v747
    %v749 = vlaneseq
    %v750 = vshrl.u32 %v749, 7
    %v751 = vsub.s32 %v748, %v750
    %v752 = vrot.slane %v745, %v751
    %v753 = vcombine.low %v725, %v732
    %v755 = vunpack.c.l.s4 1983009808
    %v756 = vunpack.c.0.s8 %v755
    %v757 = vlaneseq
    %v758 = vshrl.u32 %v757, 7
    %v759 = vsub.s32 %v756, %v758
    %v760 = vrot.slane %v753, %v759
    %v761 = vcombine.low %v735, %v736
    %v763 = vunpack.c.l.s4 1983009808
    %v764 = vunpack.c.0.s8 %v763
    %v765 = vlaneseq
    %v766 = vshrl.u32 %v765, 7
    %v767 = vsub.s32 %v764, %v766
    %v768 = vrot.slane %v761, %v767
    %v769 = vcombine.low %v744, %v752
    %v770 = vcombine.high %v744, %v752
    %v772 = vunpack.c.l.s4 1934713408
    %v773 = vunpack.c.0.s8 %v772
    %v774 = vlaneseq
    %v775 = vshrl.u32 %v774, 7
    %v776 = vsub.s32 %v773, %v775
    %v777 = vrot.slane %v769, %v776
    %v779 = vunpack.c.l.s4 1934713408
    %v780 = vunpack.c.0.s8 %v779
    %v781 = vlaneseq
    %v782 = vshrl.u32 %v781, 7
    %v783 = vsub.s32 %v780, %v782
    %v784 = vrot.slane %v770, %v783
    %v785 = vcombine.low %v760, %v768
    %v786 = vcombine.high %v760, %v768
    %v788 = vunpack.c.l.s4 1934713408
    %v789 = vunpack.c.0.s8 %v788
    %v790 = vlaneseq
    %v791 = vshrl.u32 %v790, 7
    %v792 = vsub.s32 %v789, %v791
    %v793 = vrot.slane %v785, %v792
    %v795 = vunpack.c.l.s4 1934713408
    %v796 = vunpack.c.0.s8 %v795
    %v797 = vlaneseq
    %v798 = vshrl.u32 %v797, 7
    %v799 = vsub.s32 %v796, %v798
    %v800 = vrot.slane %v786, %v799
    %v801 = vcombine.low %v777, %v793
    %v802 = vcombine.high %v777, %v793
    %v803 = vcombine.low %v784, %v800
    %v804 = vcombine.high %v784, %v800
    %vm805 = vcmask 64512
    %v807 = vsel %vm805, %v491, 0
    %v810 = vsel %vm805, %v646, 0
    %812 = vmatprep.subr.mxu0 0.0
    %813 = vmatpush1.xpose.msra.mxu0 %v810
    %814 = vmatprep.subr.mxu0 0.0
    %815 = vmatpush1.xpose.msra.mxu0 0.0
    %816 = vmatprep.subr.mxu0 0.0
    %817 = vmatpush1.xpose.msra.mxu0 0.0
    %818 = vmatprep.subr.mxu0 0.0
    %819 = vmatpush1.xpose.msra.mxu0 0.0
    %820 = vmatprep.subr.mxu0 0.0
    %821 = vmatpush1.xpose.msra.mxu0 0.0
    %822 = vmatprep.subr.mxu0 0.0
    %823 = vmatpush1.xpose.msra.mxu0 0.0
    %824 = vmatprep.subr.mxu0 0.0
    %825 = vmatpush1.xpose.msra.mxu0 0.0
    %826 = vmatprep.subr.mxu0 0.0
    %827 = vmatpush1.xpose.msra.mxu0 0.0
    %828 = vmatprep.subr.mxu0 0.0
    %829 = vmatpush1.xpose.msra.mxu0 0.0
    %830 = vmatprep.subr.mxu0 0.0
    %831 = vmatpush1.xpose.msra.mxu0 0.0
    %832 = vmatprep.subr.mxu0 0.0
    %833 = vmatpush1.xpose.msra.mxu0 0.0
    %834 = vmatprep.subr.mxu0 0.0
    %835 = vmatpush1.xpose.msra.mxu0 0.0
    %836 = vmatprep.subr.mxu0 0.0
    %837 = vmatpush1.xpose.msra.mxu0 0.0
    %838 = vmatprep.subr.mxu0 0.0
    %839 = vmatpush1.xpose.msra.mxu0 0.0
    %840 = vmatprep.subr.mxu0 0.0
    %841 = vmatpush1.xpose.msra.mxu0 0.0
    %842 = vmatprep.subr.mxu0 0.0
    %843 = vmatpush1.xpose.msra.mxu0 0.0
    %844 = vmatprep.subr.mxu0 0.0
    %845 = vmatpush1.xpose.msra.mxu0 0.0
    %846 = vmatprep.subr.mxu0 0.0
    %847 = vmatpush1.xpose.msra.mxu0 0.0
    %848 = vmatprep.subr.mxu0 0.0
    %849 = vmatpush1.xpose.msra.mxu0 0.0
    %850 = vmatprep.subr.mxu0 0.0
    %851 = vmatpush1.xpose.msra.mxu0 0.0
    %852 = vmatprep.subr.mxu0 0.0
    %853 = vmatpush1.xpose.msra.mxu0 0.0
    %854 = vmatprep.subr.mxu0 0.0
    %855 = vmatpush1.xpose.msra.mxu0 0.0
    %856 = vmatprep.subr.mxu0 0.0
    %857 = vmatpush1.xpose.msra.mxu0 0.0
    %858 = vmatprep.subr.mxu0 0.0
    %859 = vmatpush1.xpose.msra.mxu0 0.0
    %860 = vmatprep.subr.mxu0 0.0
    %861 = vmatpush1.xpose.msra.mxu0 0.0
    %862 = vmatprep.subr.mxu0 0.0
    %863 = vmatpush1.xpose.msra.mxu0 0.0
    %864 = vmatprep.subr.mxu0 0.0
    %865 = vmatpush1.xpose.msra.mxu0 0.0
    %866 = vmatprep.subr.mxu0 0.0
    %867 = vmatpush1.xpose.msra.mxu0 0.0
    %868 = vmatprep.subr.mxu0 0.0
    %869 = vmatpush1.xpose.msra.mxu0 0.0
    %870 = vmatprep.subr.mxu0 0.0
    %871 = vmatpush1.xpose.msra.mxu0 0.0
    %872 = vmatprep.subr.mxu0 0.0
    %873 = vmatpush1.xpose.msra.mxu0 0.0
    %874 = vmatprep.subr.mxu0 0.0
    %875 = vmatpush1.xpose.msra.mxu0 0.0
    %876 = vmatprep.mubr.f32.mxu0 0.0
    %877 = vmatmul.mubr.f32.gmra.mrb[0].mxu0 %v807
    %v878 = vpop.f32.mrb[0].mxu0
    %v879 = vadd.f32 0.0, %v878
    %v880 = vpop.f32.mrb[0].mxu0
    %881 = vdwg.mxu0
    %v883 = vsel %vm805, %v492, 0
    %v886 = vsel %vm805, %v647, 0
    %888 = vmatprep.subr.mxu0 0.0
    %889 = vmatpush1.xpose.msra.mxu0 %v886
    %890 = vmatprep.subr.mxu0 0.0
    %891 = vmatpush1.xpose.msra.mxu0 0.0
    %892 = vmatprep.subr.mxu0 0.0
    %893 = vmatpush1.xpose.msra.mxu0 0.0
    %894 = vmatprep.subr.mxu0 0.0
    %895 = vmatpush1.xpose.msra.mxu0 0.0
    %896 = vmatprep.subr.mxu0 0.0
    %897 = vmatpush1.xpose.msra.mxu0 0.0
    %898 = vmatprep.subr.mxu0 0.0
    %899 = vmatpush1.xpose.msra.mxu0 0.0
    %900 = vmatprep.subr.mxu0 0.0
    %901 = vmatpush1.xpose.msra.mxu0 0.0
    %902 = vmatprep.subr.mxu0 0.0
    %903 = vmatpush1.xpose.msra.mxu0 0.0
    %904 = vmatprep.subr.mxu0 0.0
    %905 = vmatpush1.xpose.msra.mxu0 0.0
    %906 = vmatprep.subr.mxu0 0.0
    %907 = vmatpush1.xpose.msra.mxu0 0.0
    %908 = vmatprep.subr.mxu0 0.0
    %909 = vmatpush1.xpose.msra.mxu0 0.0
    %910 = vmatprep.subr.mxu0 0.0
    %911 = vmatpush1.xpose.msra.mxu0 0.0
    %912 = vmatprep.subr.mxu0 0.0
    %913 = vmatpush1.xpose.msra.mxu0 0.0
    %914 = vmatprep.subr.mxu0 0.0
    %915 = vmatpush1.xpose.msra.mxu0 0.0
    %916 = vmatprep.subr.mxu0 0.0
    %917 = vmatpush1.xpose.msra.mxu0 0.0
    %918 = vmatprep.subr.mxu0 0.0
    %919 = vmatpush1.xpose.msra.mxu0 0.0
    %920 = vmatprep.subr.mxu0 0.0
    %921 = vmatpush1.xpose.msra.mxu0 0.0
    %922 = vmatprep.subr.mxu0 0.0
    %923 = vmatpush1.xpose.msra.mxu0 0.0
    %924 = vmatprep.subr.mxu0 0.0
    %925 = vmatpush1.xpose.msra.mxu0 0.0
    %926 = vmatprep.subr.mxu0 0.0
    %927 = vmatpush1.xpose.msra.mxu0 0.0
    %928 = vmatprep.subr.mxu0 0.0
    %929 = vmatpush1.xpose.msra.mxu0 0.0
    %930 = vmatprep.subr.mxu0 0.0
    %931 = vmatpush1.xpose.msra.mxu0 0.0
    %932 = vmatprep.subr.mxu0 0.0
    %933 = vmatpush1.xpose.msra.mxu0 0.0
    %934 = vmatprep.subr.mxu0 0.0
    %935 = vmatpush1.xpose.msra.mxu0 0.0
    %936 = vmatprep.subr.mxu0 0.0
    %937 = vmatpush1.xpose.msra.mxu0 0.0
    %938 = vmatprep.subr.mxu0 0.0
    %939 = vmatpush1.xpose.msra.mxu0 0.0
    %940 = vmatprep.subr.mxu0 0.0
    %941 = vmatpush1.xpose.msra.mxu0 0.0
    %942 = vmatprep.subr.mxu0 0.0
    %943 = vmatpush1.xpose.msra.mxu0 0.0
    %944 = vmatprep.subr.mxu0 0.0
    %945 = vmatpush1.xpose.msra.mxu0 0.0
    %946 = vmatprep.subr.mxu0 0.0
    %947 = vmatpush1.xpose.msra.mxu0 0.0
    %948 = vmatprep.subr.mxu0 0.0
    %949 = vmatpush1.xpose.msra.mxu0 0.0
    %950 = vmatprep.subr.mxu0 0.0
    %951 = vmatpush1.xpose.msra.mxu0 0.0
    %952 = vmatprep.mubr.f32.mxu0 0.0
    %953 = vmatmul.mubr.f32.gmra.mrb[0].mxu0 %v883
    %v954 = vpop.f32.mrb[0].mxu0
    %v955 = vadd.f32 0.0, %v954
    %v956 = vpop.f32.mrb[0].mxu0
    %957 = vdwg.mxu0
    %v959 = vsel %vm805, %v493, 0
    %v962 = vsel %vm805, %v648, 0
    %964 = vmatprep.subr.mxu0 0.0
    %965 = vmatpush1.xpose.msra.mxu0 %v962
    %966 = vmatprep.subr.mxu0 0.0
    %967 = vmatpush1.xpose.msra.mxu0 0.0
    %968 = vmatprep.subr.mxu0 0.0
    %969 = vmatpush1.xpose.msra.mxu0 0.0
    %970 = vmatprep.subr.mxu0 0.0
    %971 = vmatpush1.xpose.msra.mxu0 0.0
    %972 = vmatprep.subr.mxu0 0.0
    %973 = vmatpush1.xpose.msra.mxu0 0.0
    %974 = vmatprep.subr.mxu0 0.0
    %975 = vmatpush1.xpose.msra.mxu0 0.0
    %976 = vmatprep.subr.mxu0 0.0
    %977 = vmatpush1.xpose.msra.mxu0 0.0
    %978 = vmatprep.subr.mxu0 0.0
    %979 = vmatpush1.xpose.msra.mxu0 0.0
    %980 = vmatprep.subr.mxu0 0.0
    %981 = vmatpush1.xpose.msra.mxu0 0.0
    %982 = vmatprep.subr.mxu0 0.0
    %983 = vmatpush1.xpose.msra.mxu0 0.0
    %984 = vmatprep.subr.mxu0 0.0
    %985 = vmatpush1.xpose.msra.mxu0 0.0
    %986 = vmatprep.subr.mxu0 0.0
    %987 = vmatpush1.xpose.msra.mxu0 0.0
    %988 = vmatprep.subr.mxu0 0.0
    %989 = vmatpush1.xpose.msra.mxu0 0.0
    %990 = vmatprep.subr.mxu0 0.0
    %991 = vmatpush1.xpose.msra.mxu0 0.0
    %992 = vmatprep.subr.mxu0 0.0
    %993 = vmatpush1.xpose.msra.mxu0 0.0
    %994 = vmatprep.subr.mxu0 0.0
    %995 = vmatpush1.xpose.msra.mxu0 0.0
    %996 = vmatprep.subr.mxu0 0.0
    %997 = vmatpush1.xpose.msra.mxu0 0.0
    %998 = vmatprep.subr.mxu0 0.0
    %999 = vmatpush1.xpose.msra.mxu0 0.0
    %1000 = vmatprep.subr.mxu0 0.0
    %1001 = vmatpush1.xpose.msra.mxu0 0.0
    %1002 = vmatprep.subr.mxu0 0.0
    %1003 = vmatpush1.xpose.msra.mxu0 0.0
    %1004 = vmatprep.subr.mxu0 0.0
    %1005 = vmatpush1.xpose.msra.mxu0 0.0
    %1006 = vmatprep.subr.mxu0 0.0
    %1007 = vmatpush1.xpose.msra.mxu0 0.0
    %1008 = vmatprep.subr.mxu0 0.0
    %1009 = vmatpush1.xpose.msra.mxu0 0.0
    %1010 = vmatprep.subr.mxu0 0.0
    %1011 = vmatpush1.xpose.msra.mxu0 0.0
    %1012 = vmatprep.subr.mxu0 0.0
    %1013 = vmatpush1.xpose.msra.mxu0 0.0
    %1014 = vmatprep.subr.mxu0 0.0
    %1015 = vmatpush1.xpose.msra.mxu0 0.0
    %1016 = vmatprep.subr.mxu0 0.0
    %1017 = vmatpush1.xpose.msra.mxu0 0.0
    %1018 = vmatprep.subr.mxu0 0.0
    %1019 = vmatpush1.xpose.msra.mxu0 0.0
    %1020 = vmatprep.subr.mxu0 0.0
    %1021 = vmatpush1.xpose.msra.mxu0 0.0
    %1022 = vmatprep.subr.mxu0 0.0
    %1023 = vmatpush1.xpose.msra.mxu0 0.0
    %1024 = vmatprep.subr.mxu0 0.0
    %1025 = vmatpush1.xpose.msra.mxu0 0.0
    %1026 = vmatprep.subr.mxu0 0.0
    %1027 = vmatpush1.xpose.msra.mxu0 0.0
    %1028 = vmatprep.mubr.f32.mxu0 0.0
    %1029 = vmatmul.mubr.f32.gmra.mrb[0].mxu0 %v959
    %v1030 = vpop.f32.mrb[0].mxu0
    %v1031 = vadd.f32 0.0, %v1030
    %v1032 = vpop.f32.mrb[0].mxu0
    %1033 = vdwg.mxu0
    %v1035 = vsel %vm805, %v494, 0
    %v1038 = vsel %vm805, %v649, 0
    %1040 = vmatprep.subr.mxu0 0.0
    %1041 = vmatpush1.xpose.msra.mxu0 %v1038
    %1042 = vmatprep.subr.mxu0 0.0
    %1043 = vmatpush1.xpose.msra.mxu0 0.0
    %1044 = vmatprep.subr.mxu0 0.0
    %1045 = vmatpush1.xpose.msra.mxu0 0.0
    %1046 = vmatprep.subr.mxu0 0.0
    %1047 = vmatpush1.xpose.msra.mxu0 0.0
    %1048 = vmatprep.subr.mxu0 0.0
    %1049 = vmatpush1.xpose.msra.mxu0 0.0
    %1050 = vmatprep.subr.mxu0 0.0
    %1051 = vmatpush1.xpose.msra.mxu0 0.0
    %1052 = vmatprep.subr.mxu0 0.0
    %1053 = vmatpush1.xpose.msra.mxu0 0.0
    %1054 = vmatprep.subr.mxu0 0.0
    %1055 = vmatpush1.xpose.msra.mxu0 0.0
    %1056 = vmatprep.subr.mxu0 0.0
    %1057 = vmatpush1.xpose.msra.mxu0 0.0
    %1058 = vmatprep.subr.mxu0 0.0
    %1059 = vmatpush1.xpose.msra.mxu0 0.0
    %1060 = vmatprep.subr.mxu0 0.0
    %1061 = vmatpush1.xpose.msra.mxu0 0.0
    %1062 = vmatprep.subr.mxu0 0.0
    %1063 = vmatpush1.xpose.msra.mxu0 0.0
    %1064 = vmatprep.subr.mxu0 0.0
    %1065 = vmatpush1.xpose.msra.mxu0 0.0
    %1066 = vmatprep.subr.mxu0 0.0
    %1067 = vmatpush1.xpose.msra.mxu0 0.0
    %1068 = vmatprep.subr.mxu0 0.0
    %1069 = vmatpush1.xpose.msra.mxu0 0.0
    %1070 = vmatprep.subr.mxu0 0.0
    %1071 = vmatpush1.xpose.msra.mxu0 0.0
    %1072 = vmatprep.subr.mxu0 0.0
    %1073 = vmatpush1.xpose.msra.mxu0 0.0
    %1074 = vmatprep.subr.mxu0 0.0
    %1075 = vmatpush1.xpose.msra.mxu0 0.0
    %1076 = vmatprep.subr.mxu0 0.0
    %1077 = vmatpush1.xpose.msra.mxu0 0.0
    %1078 = vmatprep.subr.mxu0 0.0
    %1079 = vmatpush1.xpose.msra.mxu0 0.0
    %1080 = vmatprep.subr.mxu0 0.0
    %1081 = vmatpush1.xpose.msra.mxu0 0.0
    %1082 = vmatprep.subr.mxu0 0.0
    %1083 = vmatpush1.xpose.msra.mxu0 0.0
    %1084 = vmatprep.subr.mxu0 0.0
    %1085 = vmatpush1.xpose.msra.mxu0 0.0
    %1086 = vmatprep.subr.mxu0 0.0
    %1087 = vmatpush1.xpose.msra.mxu0 0.0
    %1088 = vmatprep.subr.mxu0 0.0
    %1089 = vmatpush1.xpose.msra.mxu0 0.0
    %1090 = vmatprep.subr.mxu0 0.0
    %1091 = vmatpush1.xpose.msra.mxu0 0.0
    %1092 = vmatprep.subr.mxu0 0.0
    %1093 = vmatpush1.xpose.msra.mxu0 0.0
    %1094 = vmatprep.subr.mxu0 0.0
    %1095 = vmatpush1.xpose.msra.mxu0 0.0
    %1096 = vmatprep.subr.mxu0 0.0
    %1097 = vmatpush1.xpose.msra.mxu0 0.0
    %1098 = vmatprep.subr.mxu0 0.0
    %1099 = vmatpush1.xpose.msra.mxu0 0.0
    %1100 = vmatprep.subr.mxu0 0.0
    %1101 = vmatpush1.xpose.msra.mxu0 0.0
    %1102 = vmatprep.subr.mxu0 0.0
    %1103 = vmatpush1.xpose.msra.mxu0 0.0
    %1104 = vmatprep.mubr.f32.mxu0 0.0
    %1105 = vmatmul.mubr.f32.gmra.mrb[0].mxu0 %v1035
    %v1106 = vpop.f32.mrb[0].mxu0
    %v1107 = vadd.f32 0.0, %v1106
    %v1108 = vpop.f32.mrb[0].mxu0
    %1109 = vdwg.mxu0
    %v1110 = vsel %vm805, %v879, -inf
    %1111 = vmax.xlane.f32.xlu0 %v1110
    %v1112 = vpop.xlane.xlu0 %1111
    %v1113 = vsel %vm805, %v955, -inf
    %1114 = vmax.xlane.f32.xlu0 %v1113
    %v1115 = vpop.xlane.xlu0 %1114
    %v1116 = vsel %vm805, %v1031, -inf
    %1117 = vmax.xlane.f32.xlu0 %v1116
    %v1118 = vpop.xlane.xlu0 %1117
    %v1119 = vsel %vm805, %v1107, -inf
    %1120 = vmax.xlane.f32.xlu0 %v1119
    %v1121 = vpop.xlane.xlu0 %1120
    %v1122 = vsub.f32 %v879, %v1112
    %v1123 = vsub.f32 %v955, %v1115
    %v1124 = vsub.f32 %v1031, %v1118
    %v1125 = vsub.f32 %v1107, %v1121
    %v1126 = vmul.f32 %v1122, 1.442695
    %v1127 = vpow.pop %v1126
    %v1128 = vmul.f32 %v1123, 1.442695
    %v1129 = vpow.pop %v1128
    %v1130 = vmul.f32 %v1124, 1.442695
    %v1131 = vpow.pop %v1130
    %v1132 = vmul.f32 %v1125, 1.442695
    %v1133 = vpow.pop %v1132
    %v1134 = vsel %vm805, %v1127, 0.0
    %1135 = vadd.xlane.f32.xlu0 %v1134
    %v1136 = vpop.xlane.xlu0 %1135
    %v1137 = vsel %vm805, %v1129, 0.0
    %1138 = vadd.xlane.f32.xlu0 %v1137
    %v1139 = vpop.xlane.xlu0 %1138
    %v1140 = vsel %vm805, %v1131, 0.0
    %1141 = vadd.xlane.f32.xlu0 %v1140
    %v1142 = vpop.xlane.xlu0 %1141
    %v1143 = vsel %vm805, %v1133, 0.0
    %1144 = vadd.xlane.f32.xlu0 %v1143
    %v1145 = vpop.xlane.xlu0 %1144
    %v1146 = vrcp.pop %v1136
    %v1147 = vrcp.pop %v1139
    %v1148 = vrcp.pop %v1142
    %v1149 = vrcp.pop %v1145
    %v1150 = vmul.f32 %v1127, %v1146
    %v1151 = vmul.f32 %v1129, %v1147
    %v1152 = vmul.f32 %v1131, %v1148
    %v1153 = vmul.f32 %v1133, %v1149
    %v1155 = vsel %vm805, %v1150, 0
    %1157 = vmatprep.subr.mxu0 0.0
    %1158 = vmatpush1.msra.mxu0 %v801
    %1159 = vmatprep.subr.mxu0 0.0
    %1160 = vmatpush1.msra.mxu0 0.0
    %1161 = vmatprep.subr.mxu0 0.0
    %1162 = vmatpush1.msra.mxu0 0.0
    %1163 = vmatprep.subr.mxu0 0.0
    %1164 = vmatpush1.msra.mxu0 0.0
    %1165 = vmatprep.subr.mxu0 0.0
    %1166 = vmatpush1.msra.mxu0 0.0
    %1167 = vmatprep.subr.mxu0 0.0
    %1168 = vmatpush1.msra.mxu0 0.0
    %1169 = vmatprep.subr.mxu0 0.0
    %1170 = vmatpush1.msra.mxu0 0.0
    %1171 = vmatprep.subr.mxu0 0.0
    %1172 = vmatpush1.msra.mxu0 0.0
    %1173 = vmatprep.subr.mxu0 0.0
    %1174 = vmatpush1.msra.mxu0 0.0
    %1175 = vmatprep.subr.mxu0 0.0
    %1176 = vmatpush1.msra.mxu0 0.0
    %1177 = vmatprep.subr.mxu0 0.0
    %1178 = vmatpush1.msra.mxu0 0.0
    %1179 = vmatprep.subr.mxu0 0.0
    %1180 = vmatpush1.msra.mxu0 0.0
    %1181 = vmatprep.subr.mxu0 0.0
    %1182 = vmatpush1.msra.mxu0 0.0
    %1183 = vmatprep.subr.mxu0 0.0
    %1184 = vmatpush1.msra.mxu0 0.0
    %1185 = vmatprep.subr.mxu0 0.0
    %1186 = vmatpush1.msra.mxu0 0.0
    %1187 = vmatprep.subr.mxu0 0.0
    %1188 = vmatpush1.msra.mxu0 0.0
    %1189 = vmatprep.subr.mxu0 0.0
    %1190 = vmatpush1.msra.mxu0 0.0
    %1191 = vmatprep.subr.mxu0 0.0
    %1192 = vmatpush1.msra.mxu0 0.0
    %1193 = vmatprep.subr.mxu0 0.0
    %1194 = vmatpush1.msra.mxu0 0.0
    %1195 = vmatprep.subr.mxu0 0.0
    %1196 = vmatpush1.msra.mxu0 0.0
    %1197 = vmatprep.subr.mxu0 0.0
    %1198 = vmatpush1.msra.mxu0 0.0
    %1199 = vmatprep.subr.mxu0 0.0
    %1200 = vmatpush1.msra.mxu0 0.0
    %1201 = vmatprep.subr.mxu0 0.0
    %1202 = vmatpush1.msra.mxu0 0.0
    %1203 = vmatprep.subr.mxu0 0.0
    %1204 = vmatpush1.msra.mxu0 0.0
    %1205 = vmatprep.subr.mxu0 0.0
    %1206 = vmatpush1.msra.mxu0 0.0
    %1207 = vmatprep.subr.mxu0 0.0
    %1208 = vmatpush1.msra.mxu0 0.0
    %1209 = vmatprep.subr.mxu0 0.0
    %1210 = vmatpush1.msra.mxu0 0.0
    %1211 = vmatprep.subr.mxu0 0.0
    %1212 = vmatpush1.msra.mxu0 0.0
    %1213 = vmatprep.subr.mxu0 0.0
    %1214 = vmatpush1.msra.mxu0 0.0
    %1215 = vmatprep.subr.mxu0 0.0
    %1216 = vmatpush1.msra.mxu0 0.0
    %1217 = vmatprep.subr.mxu0 0.0
    %1218 = vmatpush1.msra.mxu0 0.0
    %1219 = vmatprep.subr.mxu0 0.0
    %1220 = vmatpush1.msra.mxu0 0.0
    %1221 = vmatprep.mubr.f32.mxu0 0.0
    %1222 = vmatmul.mubr.f32.gmra.mrb[0].mxu0 %v1155
    %v1223 = vpop.f32.mrb[0].mxu0
    %v1224 = vadd.f32 0.0, %v1223
    %v1225 = vpop.f32.mrb[0].mxu0
    %1226 = vdwg.mxu0
    %v1228 = vsel %vm805, %v1151, 0
    %1230 = vmatprep.subr.mxu0 0.0
    %1231 = vmatpush1.msra.mxu0 %v802
    %1232 = vmatprep.subr.mxu0 0.0
    %1233 = vmatpush1.msra.mxu0 0.0
    %1234 = vmatprep.subr.mxu0 0.0
    %1235 = vmatpush1.msra.mxu0 0.0
    %1236 = vmatprep.subr.mxu0 0.0
    %1237 = vmatpush1.msra.mxu0 0.0
    %1238 = vmatprep.subr.mxu0 0.0
    %1239 = vmatpush1.msra.mxu0 0.0
    %1240 = vmatprep.subr.mxu0 0.0
    %1241 = vmatpush1.msra.mxu0 0.0
    %1242 = vmatprep.subr.mxu0 0.0
    %1243 = vmatpush1.msra.mxu0 0.0
    %1244 = vmatprep.subr.mxu0 0.0
    %1245 = vmatpush1.msra.mxu0 0.0
    %1246 = vmatprep.subr.mxu0 0.0
    %1247 = vmatpush1.msra.mxu0 0.0
    %1248 = vmatprep.subr.mxu0 0.0
    %1249 = vmatpush1.msra.mxu0 0.0
    %1250 = vmatprep.subr.mxu0 0.0
    %1251 = vmatpush1.msra.mxu0 0.0
    %1252 = vmatprep.subr.mxu0 0.0
    %1253 = vmatpush1.msra.mxu0 0.0
    %1254 = vmatprep.subr.mxu0 0.0
    %1255 = vmatpush1.msra.mxu0 0.0
    %1256 = vmatprep.subr.mxu0 0.0
    %1257 = vmatpush1.msra.mxu0 0.0
    %1258 = vmatprep.subr.mxu0 0.0
    %1259 = vmatpush1.msra.mxu0 0.0
    %1260 = vmatprep.subr.mxu0 0.0
    %1261 = vmatpush1.msra.mxu0 0.0
    %1262 = vmatprep.subr.mxu0 0.0
    %1263 = vmatpush1.msra.mxu0 0.0
    %1264 = vmatprep.subr.mxu0 0.0
    %1265 = vmatpush1.msra.mxu0 0.0
    %1266 = vmatprep.subr.mxu0 0.0
    %1267 = vmatpush1.msra.mxu0 0.0
    %1268 = vmatprep.subr.mxu0 0.0
    %1269 = vmatpush1.msra.mxu0 0.0
    %1270 = vmatprep.subr.mxu0 0.0
    %1271 = vmatpush1.msra.mxu0 0.0
    %1272 = vmatprep.subr.mxu0 0.0
    %1273 = vmatpush1.msra.mxu0 0.0
    %1274 = vmatprep.subr.mxu0 0.0
    %1275 = vmatpush1.msra.mxu0 0.0
    %1276 = vmatprep.subr.mxu0 0.0
    %1277 = vmatpush1.msra.mxu0 0.0
    %1278 = vmatprep.subr.mxu0 0.0
    %1279 = vmatpush1.msra.mxu0 0.0
    %1280 = vmatprep.subr.mxu0 0.0
    %1281 = vmatpush1.msra.mxu0 0.0
    %1282 = vmatprep.subr.mxu0 0.0
    %1283 = vmatpush1.msra.mxu0 0.0
    %1284 = vmatprep.subr.mxu0 0.0
    %1285 = vmatpush1.msra.mxu0 0.0
    %1286 = vmatprep.subr.mxu0 0.0
    %1287 = vmatpush1.msra.mxu0 0.0
    %1288 = vmatprep.subr.mxu0 0.0
    %1289 = vmatpush1.msra.mxu0 0.0
    %1290 = vmatprep.subr.mxu0 0.0
    %1291 = vmatpush1.msra.mxu0 0.0
    %1292 = vmatprep.subr.mxu0 0.0
    %1293 = vmatpush1.msra.mxu0 0.0
    %1294 = vmatprep.mubr.f32.mxu0 0.0
    %1295 = vmatmul.mubr.f32.gmra.mrb[0].mxu0 %v1228
    %v1296 = vpop.f32.mrb[0].mxu0
    %v1297 = vadd.f32 0.0, %v1296
    %v1298 = vpop.f32.mrb[0].mxu0
    %1299 = vdwg.mxu0
    %v1301 = vsel %vm805, %v1152, 0
    %1303 = vmatprep.subr.mxu0 0.0
    %1304 = vmatpush1.msra.mxu0 %v803
    %1305 = vmatprep.subr.mxu0 0.0
    %1306 = vmatpush1.msra.mxu0 0.0
    %1307 = vmatprep.subr.mxu0 0.0
    %1308 = vmatpush1.msra.mxu0 0.0
    %1309 = vmatprep.subr.mxu0 0.0
    %1310 = vmatpush1.msra.mxu0 0.0
    %1311 = vmatprep.subr.mxu0 0.0
    %1312 = vmatpush1.msra.mxu0 0.0
    %1313 = vmatprep.subr.mxu0 0.0
    %1314 = vmatpush1.msra.mxu0 0.0
    %1315 = vmatprep.subr.mxu0 0.0
    %1316 = vmatpush1.msra.mxu0 0.0
    %1317 = vmatprep.subr.mxu0 0.0
    %1318 = vmatpush1.msra.mxu0 0.0
    %1319 = vmatprep.subr.mxu0 0.0
    %1320 = vmatpush1.msra.mxu0 0.0
    %1321 = vmatprep.subr.mxu0 0.0
    %1322 = vmatpush1.msra.mxu0 0.0
    %1323 = vmatprep.subr.mxu0 0.0
    %1324 = vmatpush1.msra.mxu0 0.0
    %1325 = vmatprep.subr.mxu0 0.0
    %1326 = vmatpush1.msra.mxu0 0.0
    %1327 = vmatprep.subr.mxu0 0.0
    %1328 = vmatpush1.msra.mxu0 0.0
    %1329 = vmatprep.subr.mxu0 0.0
    %1330 = vmatpush1.msra.mxu0 0.0
    %1331 = vmatprep.subr.mxu0 0.0
    %1332 = vmatpush1.msra.mxu0 0.0
    %1333 = vmatprep.subr.mxu0 0.0
    %1334 = vmatpush1.msra.mxu0 0.0
    %1335 = vmatprep.subr.mxu0 0.0
    %1336 = vmatpush1.msra.mxu0 0.0
    %1337 = vmatprep.subr.mxu0 0.0
    %1338 = vmatpush1.msra.mxu0 0.0
    %1339 = vmatprep.subr.mxu0 0.0
    %1340 = vmatpush1.msra.mxu0 0.0
    %1341 = vmatprep.subr.mxu0 0.0
    %1342 = vmatpush1.msra.mxu0 0.0
    %1343 = vmatprep.subr.mxu0 0.0
    %1344 = vmatpush1.msra.mxu0 0.0
    %1345 = vmatprep.subr.mxu0 0.0
    %1346 = vmatpush1.msra.mxu0 0.0
    %1347 = vmatprep.subr.mxu0 0.0
    %1348 = vmatpush1.msra.mxu0 0.0
    %1349 = vmatprep.subr.mxu0 0.0
    %1350 = vmatpush1.msra.mxu0 0.0
    %1351 = vmatprep.subr.mxu0 0.0
    %1352 = vmatpush1.msra.mxu0 0.0
    %1353 = vmatprep.subr.mxu0 0.0
    %1354 = vmatpush1.msra.mxu0 0.0
    %1355 = vmatprep.subr.mxu0 0.0
    %1356 = vmatpush1.msra.mxu0 0.0
    %1357 = vmatprep.subr.mxu0 0.0
    %1358 = vmatpush1.msra.mxu0 0.0
    %1359 = vmatprep.subr.mxu0 0.0
    %1360 = vmatpush1.msra.mxu0 0.0
    %1361 = vmatprep.subr.mxu0 0.0
    %1362 = vmatpush1.msra.mxu0 0.0
    %1363 = vmatprep.subr.mxu0 0.0
    %1364 = vmatpush1.msra.mxu0 0.0
    %1365 = vmatprep.subr.mxu0 0.0
    %1366 = vmatpush1.msra.mxu0 0.0
    %1367 = vmatprep.mubr.f32.mxu0 0.0
    %1368 = vmatmul.mubr.f32.gmra.mrb[0].mxu0 %v1301
    %v1369 = vpop.f32.mrb[0].mxu0
    %v1370 = vadd.f32 0.0, %v1369
    %v1371 = vpop.f32.mrb[0].mxu0
    %1372 = vdwg.mxu0
    %v1374 = vsel %vm805, %v1153, 0
    %1376 = vmatprep.subr.mxu0 0.0
    %1377 = vmatpush1.msra.mxu0 %v804
    %1378 = vmatprep.subr.mxu0 0.0
    %1379 = vmatpush1.msra.mxu0 0.0
    %1380 = vmatprep.subr.mxu0 0.0
    %1381 = vmatpush1.msra.mxu0 0.0
    %1382 = vmatprep.subr.mxu0 0.0
    %1383 = vmatpush1.msra.mxu0 0.0
    %1384 = vmatprep.subr.mxu0 0.0
    %1385 = vmatpush1.msra.mxu0 0.0
    %1386 = vmatprep.subr.mxu0 0.0
    %1387 = vmatpush1.msra.mxu0 0.0
    %1388 = vmatprep.subr.mxu0 0.0
    %1389 = vmatpush1.msra.mxu0 0.0
    %1390 = vmatprep.subr.mxu0 0.0
    %1391 = vmatpush1.msra.mxu0 0.0
    %1392 = vmatprep.subr.mxu0 0.0
    %1393 = vmatpush1.msra.mxu0 0.0
    %1394 = vmatprep.subr.mxu0 0.0
    %1395 = vmatpush1.msra.mxu0 0.0
    %1396 = vmatprep.subr.mxu0 0.0
    %1397 = vmatpush1.msra.mxu0 0.0
    %1398 = vmatprep.subr.mxu0 0.0
    %1399 = vmatpush1.msra.mxu0 0.0
    %1400 = vmatprep.subr.mxu0 0.0
    %1401 = vmatpush1.msra.mxu0 0.0
    %1402 = vmatprep.subr.mxu0 0.0
    %1403 = vmatpush1.msra.mxu0 0.0
    %1404 = vmatprep.subr.mxu0 0.0
    %1405 = vmatpush1.msra.mxu0 0.0
    %1406 = vmatprep.subr.mxu0 0.0
    %1407 = vmatpush1.msra.mxu0 0.0
    %1408 = vmatprep.subr.mxu0 0.0
    %1409 = vmatpush1.msra.mxu0 0.0
    %1410 = vmatprep.subr.mxu0 0.0
    %1411 = vmatpush1.msra.mxu0 0.0
    %1412 = vmatprep.subr.mxu0 0.0
    %1413 = vmatpush1.msra.mxu0 0.0
    %1414 = vmatprep.subr.mxu0 0.0
    %1415 = vmatpush1.msra.mxu0 0.0
    %1416 = vmatprep.subr.mxu0 0.0
    %1417 = vmatpush1.msra.mxu0 0.0
    %1418 = vmatprep.subr.mxu0 0.0
    %1419 = vmatpush1.msra.mxu0 0.0
    %1420 = vmatprep.subr.mxu0 0.0
    %1421 = vmatpush1.msra.mxu0 0.0
    %1422 = vmatprep.subr.mxu0 0.0
    %1423 = vmatpush1.msra.mxu0 0.0
    %1424 = vmatprep.subr.mxu0 0.0
    %1425 = vmatpush1.msra.mxu0 0.0
    %1426 = vmatprep.subr.mxu0 0.0
    %1427 = vmatpush1.msra.mxu0 0.0
    %1428 = vmatprep.subr.mxu0 0.0
    %1429 = vmatpush1.msra.mxu0 0.0
    %1430 = vmatprep.subr.mxu0 0.0
    %1431 = vmatpush1.msra.mxu0 0.0
    %1432 = vmatprep.subr.mxu0 0.0
    %1433 = vmatpush1.msra.mxu0 0.0
    %1434 = vmatprep.subr.mxu0 0.0
    %1435 = vmatpush1.msra.mxu0 0.0
    %1436 = vmatprep.subr.mxu0 0.0
    %1437 = vmatpush1.msra.mxu0 0.0
    %1438 = vmatprep.subr.mxu0 0.0
    %1439 = vmatpush1.msra.mxu0 0.0
    %1440 = vmatprep.mubr.f32.mxu0 0.0
    %1441 = vmatmul.mubr.f32.gmra.mrb[0].mxu0 %v1374
    %v1442 = vpop.f32.mrb[0].mxu0
    %v1443 = vadd.f32 0.0, %v1442
    %v1444 = vpop.f32.mrb[0].mxu0
    %1445 = vdwg.mxu0
    %v1446 = vcombine.low %v1224, %v1370
    %v1447 = vcombine.high %v1224, %v1370
    %v1449 = vunpack.c.l.s4 1983009808
    %v1450 = vunpack.c.0.s8 %v1449
    %v1451 = vlaneseq
    %v1452 = vshrl.u32 %v1451, 7
    %v1453 = vsub.s32 %v1450, %v1452
    %v1454 = vrot.slane %v1446, %v1453
    %v1456 = vunpack.c.l.s4 1983009808
    %v1457 = vunpack.c.0.s8 %v1456
    %v1458 = vlaneseq
    %v1459 = vshrl.u32 %v1458, 7
    %v1460 = vsub.s32 %v1457, %v1459
    %v1461 = vrot.slane %v1447, %v1460
    %v1462 = vcombine.low %v1297, %v1443
    %v1463 = vcombine.high %v1297, %v1443
    %v1465 = vunpack.c.l.s4 1983009808
    %v1466 = vunpack.c.0.s8 %v1465
    %v1467 = vlaneseq
    %v1468 = vshrl.u32 %v1467, 7
    %v1469 = vsub.s32 %v1466, %v1468
    %v1470 = vrot.slane %v1462, %v1469
    %v1472 = vunpack.c.l.s4 1983009808
    %v1473 = vunpack.c.0.s8 %v1472
    %v1474 = vlaneseq
    %v1475 = vshrl.u32 %v1474, 7
    %v1476 = vsub.s32 %v1473, %v1475
    %v1477 = vrot.slane %v1463, %v1476
    %v1478 = vcombine.low %v1454, %v1470
    %v1479 = vcombine.high %v1454, %v1470
    %v1481 = vunpack.c.l.s4 1934713408
    %v1482 = vunpack.c.0.s8 %v1481
    %v1483 = vlaneseq
    %v1484 = vshrl.u32 %v1483, 7
    %v1485 = vsub.s32 %v1482, %v1484
    %v1486 = vrot.slane %v1478, %v1485
    %v1488 = vunpack.c.l.s4 1934713408
    %v1489 = vunpack.c.0.s8 %v1488
    %v1490 = vlaneseq
    %v1491 = vshrl.u32 %v1490, 7
    %v1492 = vsub.s32 %v1489, %v1491
    %v1493 = vrot.slane %v1479, %v1492
    %v1494 = vcombine.low %v1461, %v1477
    %v1495 = vcombine.high %v1461, %v1477
    %v1497 = vunpack.c.l.s4 1934713408
    %v1498 = vunpack.c.0.s8 %v1497
    %v1499 = vlaneseq
    %v1500 = vshrl.u32 %v1499, 7
    %v1501 = vsub.s32 %v1498, %v1500
    %v1502 = vrot.slane %v1494, %v1501
    %v1504 = vunpack.c.l.s4 1934713408
    %v1505 = vunpack.c.0.s8 %v1504
    %v1506 = vlaneseq
    %v1507 = vshrl.u32 %v1506, 7
    %v1508 = vsub.s32 %v1505, %v1507
    %v1509 = vrot.slane %v1495, %v1508
    %v1510 = vcombine.high %v1486, 0.0
    %v1511 = vcombine.high %v1493, 0.0
    %v1512 = vcombine.high %v1502, 0.0
    %v1513 = vcombine.high %v1509, 0.0
    %v1514 = vcombine.low %v1486, %v1493
    %v1516 = vunpack.c.l.s4 1983009808
    %v1517 = vunpack.c.0.s8 %v1516
    %v1518 = vlaneseq
    %v1519 = vshrl.u32 %v1518, 7
    %v1520 = vsub.s32 %v1517, %v1519
    %v1521 = vrot.slane %v1514, %v1520
    %v1522 = vcombine.low %v1510, %v1511
    %v1524 = vunpack.c.l.s4 1983009808
    %v1525 = vunpack.c.0.s8 %v1524
    %v1526 = vlaneseq
    %v1527 = vshrl.u32 %v1526, 7
    %v1528 = vsub.s32 %v1525, %v1527
    %v1529 = vrot.slane %v1522, %v1528
    %v1530 = vcombine.low %v1502, %v1509
    %v1532 = vunpack.c.l.s4 1983009808
    %v1533 = vunpack.c.0.s8 %v1532
    %v1534 = vlaneseq
    %v1535 = vshrl.u32 %v1534, 7
    %v1536 = vsub.s32 %v1533, %v1535
    %v1537 = vrot.slane %v1530, %v1536
    %v1538 = vcombine.low %v1512, %v1513
    %v1540 = vunpack.c.l.s4 1983009808
    %v1541 = vunpack.c.0.s8 %v1540
    %v1542 = vlaneseq
    %v1543 = vshrl.u32 %v1542, 7
    %v1544 = vsub.s32 %v1541, %v1543
    %v1545 = vrot.slane %v1538, %v1544
    %v1546 = vcombine.low %v1521, %v1529
    %v1547 = vcombine.high %v1521, %v1529
    %v1549 = vunpack.c.l.s4 1934713408
    %v1550 = vunpack.c.0.s8 %v1549
    %v1551 = vlaneseq
    %v1552 = vshrl.u32 %v1551, 7
    %v1553 = vsub.s32 %v1550, %v1552
    %v1554 = vrot.slane %v1546, %v1553
    %v1556 = vunpack.c.l.s4 1934713408
    %v1557 = vunpack.c.0.s8 %v1556
    %v1558 = vlaneseq
    %v1559 = vshrl.u32 %v1558, 7
    %v1560 = vsub.s32 %v1557, %v1559
    %v1561 = vrot.slane %v1547, %v1560
    %v1562 = vcombine.low %v1537, %v1545
    %v1563 = vcombine.high %v1537, %v1545
    %v1565 = vunpack.c.l.s4 1934713408
    %v1566 = vunpack.c.0.s8 %v1565
    %v1567 = vlaneseq
    %v1568 = vshrl.u32 %v1567, 7
    %v1569 = vsub.s32 %v1566, %v1568
    %v1570 = vrot.slane %v1562, %v1569
    %v1572 = vunpack.c.l.s4 1934713408
    %v1573 = vunpack.c.0.s8 %v1572
    %v1574 = vlaneseq
    %v1575 = vshrl.u32 %v1574, 7
    %v1576 = vsub.s32 %v1573, %v1575
    %v1577 = vrot.slane %v1563, %v1576
    %v1578 = vcombine.low %v1554, %v1570
    %v1579 = vcombine.high %v1554, %v1570
    %v1580 = vcombine.low %v1561, %v1577
    %v1581 = vcombine.high %v1561, %v1577
    %1583 = vrot.lane.b32.xlu0 %v1579, 8
    %v1584 = vpop.permute.xlu0 %1583
    %1587 = vrot.lane.b32.xlu0 %v1580, 16
    %v1588 = vpop.permute.xlu0 %1587
    %1591 = vrot.lane.b32.xlu0 %v1581, 24
    %v1592 = vpop.permute.xlu0 %1591
    %v1594 = vsel %vm805, %v1578, %v1584
    %vm1595 = vcmask 130048
    %v1596 = vsel %vm1595, %v1594, %v1588
    %vm1597 = vcmask 195584
    %v1598 = vsel %vm1597, %v1596, %v1592
    %1599 = vst.msk [vmem:[#allocation2] sm:$0xff] %vm55, %v1598
    %1601 = vrot.lane.b32.xlu0 %v348, 120
    %v1602 = vpop.permute.xlu0 %1601
    %1604 = vrot.lane.b32.xlu0 %v348, 112
    %v1605 = vpop.permute.xlu0 %1604
    %1607 = vrot.lane.b32.xlu0 %v348, 104
    %v1608 = vpop.permute.xlu0 %1607
    %v1610 = vcombine.low %v348, %v1605
    %v1611 = vcombine.high %v348, %v1605
    %v1613 = vunpack.c.l.s4 1983009808
    %v1614 = vunpack.c.0.s8 %v1613
    %v1615 = vlaneseq
    %v1616 = vshrl.u32 %v1615, 7
    %v1617 = vsub.s32 %v1614, %v1616
    %v1618 = vrot.slane %v1610, %v1617
    %v1620 = vunpack.c.l.s4 1983009808
    %v1621 = vunpack.c.0.s8 %v1620
    %v1622 = vlaneseq
    %v1623 = vshrl.u32 %v1622, 7
    %v1624 = vsub.s32 %v1621, %v1623
    %v1625 = vrot.slane %v1611, %v1624
    %v1626 = vcombine.low %v1602, %v1608
    %v1627 = vcombine.high %v1602, %v1608
    %v1629 = vunpack.c.l.s4 1983009808
    %v1630 = vunpack.c.0.s8 %v1629
    %v1631 = vlaneseq
    %v1632 = vshrl.u32 %v1631, 7
    %v1633 = vsub.s32 %v1630, %v1632
    %v1634 = vrot.slane %v1626, %v1633
    %v1636 = vunpack.c.l.s4 1983009808
    %v1637 = vunpack.c.0.s8 %v1636
    %v1638 = vlaneseq
    %v1639 = vshrl.u32 %v1638, 7
    %v1640 = vsub.s32 %v1637, %v1639
    %v1641 = vrot.slane %v1627, %v1640
    %v1642 = vcombine.low %v1618, %v1634
    %v1643 = vcombine.high %v1618, %v1634
    %v1645 = vunpack.c.l.s4 1934713408
    %v1646 = vunpack.c.0.s8 %v1645
    %v1647 = vlaneseq
    %v1648 = vshrl.u32 %v1647, 7
    %v1649 = vsub.s32 %v1646, %v1648
    %v1650 = vrot.slane %v1642, %v1649
    %v1652 = vunpack.c.l.s4 1934713408
    %v1653 = vunpack.c.0.s8 %v1652
    %v1654 = vlaneseq
    %v1655 = vshrl.u32 %v1654, 7
    %v1656 = vsub.s32 %v1653, %v1655
    %v1657 = vrot.slane %v1643, %v1656
    %v1658 = vcombine.low %v1625, %v1641
    %v1659 = vcombine.high %v1625, %v1641
    %v1661 = vunpack.c.l.s4 1934713408
    %v1662 = vunpack.c.0.s8 %v1661
    %v1663 = vlaneseq
    %v1664 = vshrl.u32 %v1663, 7
    %v1665 = vsub.s32 %v1662, %v1664
    %v1666 = vrot.slane %v1658, %v1665
    %v1668 = vunpack.c.l.s4 1934713408
    %v1669 = vunpack.c.0.s8 %v1668
    %v1670 = vlaneseq
    %v1671 = vshrl.u32 %v1670, 7
    %v1672 = vsub.s32 %v1669, %v1671
    %v1673 = vrot.slane %v1659, %v1672
    %v1674 = vcombine.high %v1650, 0.0
    %v1675 = vcombine.high %v1657, 0.0
    %v1676 = vcombine.high %v1666, 0.0
    %v1677 = vcombine.high %v1673, 0.0
    %v1678 = vcombine.low %v1650, %v1657
    %v1680 = vunpack.c.l.s4 1983009808
    %v1681 = vunpack.c.0.s8 %v1680
    %v1682 = vlaneseq
    %v1683 = vshrl.u32 %v1682, 7
    %v1684 = vsub.s32 %v1681, %v1683
    %v1685 = vrot.slane %v1678, %v1684
    %v1686 = vcombine.low %v1674, %v1675
    %v1688 = vunpack.c.l.s4 1983009808
    %v1689 = vunpack.c.0.s8 %v1688
    %v1690 = vlaneseq
    %v1691 = vshrl.u32 %v1690, 7
    %v1692 = vsub.s32 %v1689, %v1691
    %v1693 = vrot.slane %v1686, %v1692
    %v1694 = vcombine.low %v1666, %v1673
    %v1696 = vunpack.c.l.s4 1983009808
    %v1697 = vunpack.c.0.s8 %v1696
    %v1698 = vlaneseq
    %v1699 = vshrl.u32 %v1698, 7
    %v1700 = vsub.s32 %v1697, %v1699
    %v1701 = vrot.slane %v1694, %v1700
    %v1702 = vcombine.low %v1676, %v1677
    %v1704 = vunpack.c.l.s4 1983009808
    %v1705 = vunpack.c.0.s8 %v1704
    %v1706 = vlaneseq
    %v1707 = vshrl.u32 %v1706, 7
    %v1708 = vsub.s32 %v1705, %v1707
    %v1709 = vrot.slane %v1702, %v1708
    %v1710 = vcombine.low %v1685, %v1693
    %v1711 = vcombine.high %v1685, %v1693
    %v1713 = vunpack.c.l.s4 1934713408
    %v1714 = vunpack.c.0.s8 %v1713
    %v1715 = vlaneseq
    %v1716 = vshrl.u32 %v1715, 7
    %v1717 = vsub.s32 %v1714, %v1716
    %v1718 = vrot.slane %v1710, %v1717
    %v1720 = vunpack.c.l.s4 1934713408
    %v1721 = vunpack.c.0.s8 %v1720
    %v1722 = vlaneseq
    %v1723 = vshrl.u32 %v1722, 7
    %v1724 = vsub.s32 %v1721, %v1723
    %v1725 = vrot.slane %v1711, %v1724
    %v1726 = vcombine.low %v1701, %v1709
    %v1727 = vcombine.high %v1701, %v1709
    %v1729 = vunpack.c.l.s4 1934713408
    %v1730 = vunpack.c.0.s8 %v1729
    %v1731 = vlaneseq
    %v1732 = vshrl.u32 %v1731, 7
    %v1733 = vsub.s32 %v1730, %v1732
    %v1734 = vrot.slane %v1726, %v1733
    %v1736 = vunpack.c.l.s4 1934713408
    %v1737 = vunpack.c.0.s8 %v1736
    %v1738 = vlaneseq
    %v1739 = vshrl.u32 %v1738, 7
    %v1740 = vsub.s32 %v1737, %v1739
    %v1741 = vrot.slane %v1727, %v1740
    %v1742 = vcombine.low %v1718, %v1734
    %v1743 = vcombine.high %v1718, %v1734
    %v1744 = vcombine.low %v1725, %v1741
    %v1745 = vcombine.high %v1725, %v1741
    %1747 = vrot.lane.b32.xlu0 %v346, 120
    %v1748 = vpop.permute.xlu0 %1747
    %1749 = vrot.lane.b32.xlu0 %v346, 112
    %v1750 = vpop.permute.xlu0 %1749
    %1751 = vrot.lane.b32.xlu0 %v346, 104
    %v1752 = vpop.permute.xlu0 %1751
    %1753 = vrot.lane.b32.xlu0 %v346, 96
    %v1754 = vpop.permute.xlu0 %1753
    %1755 = vrot.lane.b32.xlu0 %v1748, 96
    %v1756 = vpop.permute.xlu0 %1755
    %1757 = vrot.lane.b32.xlu0 %v1750, 96
    %v1758 = vpop.permute.xlu0 %1757
    %1759 = vrot.lane.b32.xlu0 %v1752, 96
    %v1760 = vpop.permute.xlu0 %1759
    %v1765 = vcombine.low %v1754, %v1758
    %v1766 = vcombine.high %v1754, %v1758
    %v1768 = vunpack.c.l.s4 1983009808
    %v1769 = vunpack.c.0.s8 %v1768
    %v1770 = vlaneseq
    %v1771 = vshrl.u32 %v1770, 7
    %v1772 = vsub.s32 %v1769, %v1771
    %v1773 = vrot.slane %v1765, %v1772
    %v1775 = vunpack.c.l.s4 1983009808
    %v1776 = vunpack.c.0.s8 %v1775
    %v1777 = vlaneseq
    %v1778 = vshrl.u32 %v1777, 7
    %v1779 = vsub.s32 %v1776, %v1778
    %v1780 = vrot.slane %v1766, %v1779
    %v1781 = vcombine.low %v1756, %v1760
    %v1782 = vcombine.high %v1756, %v1760
    %v1784 = vunpack.c.l.s4 1983009808
    %v1785 = vunpack.c.0.s8 %v1784
    %v1786 = vlaneseq
    %v1787 = vshrl.u32 %v1786, 7
    %v1788 = vsub.s32 %v1785, %v1787
    %v1789 = vrot.slane %v1781, %v1788
    %v1791 = vunpack.c.l.s4 1983009808
    %v1792 = vunpack.c.0.s8 %v1791
    %v1793 = vlaneseq
    %v1794 = vshrl.u32 %v1793, 7
    %v1795 = vsub.s32 %v1792, %v1794
    %v1796 = vrot.slane %v1782, %v1795
    %v1797 = vcombine.low %v1773, %v1789
    %v1798 = vcombine.high %v1773, %v1789
    %v1800 = vunpack.c.l.s4 1934713408
    %v1801 = vunpack.c.0.s8 %v1800
    %v1802 = vlaneseq
    %v1803 = vshrl.u32 %v1802, 7
    %v1804 = vsub.s32 %v1801, %v1803
    %v1805 = vrot.slane %v1797, %v1804
    %v1807 = vunpack.c.l.s4 1934713408
    %v1808 = vunpack.c.0.s8 %v1807
    %v1809 = vlaneseq
    %v1810 = vshrl.u32 %v1809, 7
    %v1811 = vsub.s32 %v1808, %v1810
    %v1812 = vrot.slane %v1798, %v1811
    %v1813 = vcombine.low %v1780, %v1796
    %v1814 = vcombine.high %v1780, %v1796
    %v1816 = vunpack.c.l.s4 1934713408
    %v1817 = vunpack.c.0.s8 %v1816
    %v1818 = vlaneseq
    %v1819 = vshrl.u32 %v1818, 7
    %v1820 = vsub.s32 %v1817, %v1819
    %v1821 = vrot.slane %v1813, %v1820
    %v1823 = vunpack.c.l.s4 1934713408
    %v1824 = vunpack.c.0.s8 %v1823
    %v1825 = vlaneseq
    %v1826 = vshrl.u32 %v1825, 7
    %v1827 = vsub.s32 %v1824, %v1826
    %v1828 = vrot.slane %v1814, %v1827
    %v1829 = vcombine.high %v1805, 0.0
    %v1830 = vcombine.high %v1812, 0.0
    %v1831 = vcombine.high %v1821, 0.0
    %v1832 = vcombine.high %v1828, 0.0
    %v1833 = vcombine.low %v1805, %v1812
    %v1835 = vunpack.c.l.s4 1983009808
    %v1836 = vunpack.c.0.s8 %v1835
    %v1837 = vlaneseq
    %v1838 = vshrl.u32 %v1837, 7
    %v1839 = vsub.s32 %v1836, %v1838
    %v1840 = vrot.slane %v1833, %v1839
    %v1841 = vcombine.low %v1829, %v1830
    %v1843 = vunpack.c.l.s4 1983009808
    %v1844 = vunpack.c.0.s8 %v1843
    %v1845 = vlaneseq
    %v1846 = vshrl.u32 %v1845, 7
    %v1847 = vsub.s32 %v1844, %v1846
    %v1848 = vrot.slane %v1841, %v1847
    %v1849 = vcombine.low %v1821, %v1828
    %v1851 = vunpack.c.l.s4 1983009808
    %v1852 = vunpack.c.0.s8 %v1851
    %v1853 = vlaneseq
    %v1854 = vshrl.u32 %v1853, 7
    %v1855 = vsub.s32 %v1852, %v1854
    %v1856 = vrot.slane %v1849, %v1855
    %v1857 = vcombine.low %v1831, %v1832
    %v1859 = vunpack.c.l.s4 1983009808
    %v1860 = vunpack.c.0.s8 %v1859
    %v1861 = vlaneseq
    %v1862 = vshrl.u32 %v1861, 7
    %v1863 = vsub.s32 %v1860, %v1862
    %v1864 = vrot.slane %v1857, %v1863
    %v1865 = vcombine.low %v1840, %v1848
    %v1866 = vcombine.high %v1840, %v1848
    %v1868 = vunpack.c.l.s4 1934713408
    %v1869 = vunpack.c.0.s8 %v1868
    %v1870 = vlaneseq
    %v1871 = vshrl.u32 %v1870, 7
    %v1872 = vsub.s32 %v1869, %v1871
    %v1873 = vrot.slane %v1865, %v1872
    %v1875 = vunpack.c.l.s4 1934713408
    %v1876 = vunpack.c.0.s8 %v1875
    %v1877 = vlaneseq
    %v1878 = vshrl.u32 %v1877, 7
    %v1879 = vsub.s32 %v1876, %v1878
    %v1880 = vrot.slane %v1866, %v1879
    %v1881 = vcombine.low %v1856, %v1864
    %v1882 = vcombine.high %v1856, %v1864
    %v1884 = vunpack.c.l.s4 1934713408
    %v1885 = vunpack.c.0.s8 %v1884
    %v1886 = vlaneseq
    %v1887 = vshrl.u32 %v1886, 7
    %v1888 = vsub.s32 %v1885, %v1887
    %v1889 = vrot.slane %v1881, %v1888
    %v1891 = vunpack.c.l.s4 1934713408
    %v1892 = vunpack.c.0.s8 %v1891
    %v1893 = vlaneseq
    %v1894 = vshrl.u32 %v1893, 7
    %v1895 = vsub.s32 %v1892, %v1894
    %v1896 = vrot.slane %v1882, %v1895
    %v1897 = vcombine.low %v1873, %v1889
    %v1898 = vcombine.high %v1873, %v1889
    %v1899 = vcombine.low %v1880, %v1896
    %v1900 = vcombine.high %v1880, %v1896
    %1902 = vrot.lane.b32.xlu0 %v195, 120
    %v1903 = vpop.permute.xlu0 %1902
    %1904 = vrot.lane.b32.xlu0 %v195, 112
    %v1905 = vpop.permute.xlu0 %1904
    %1906 = vrot.lane.b32.xlu0 %v195, 104
    %v1907 = vpop.permute.xlu0 %1906
    %1908 = vrot.lane.b32.xlu0 %v195, 64
    %v1909 = vpop.permute.xlu0 %1908
    %1910 = vrot.lane.b32.xlu0 %v1903, 64
    %v1911 = vpop.permute.xlu0 %1910
    %1912 = vrot.lane.b32.xlu0 %v1905, 64
    %v1913 = vpop.permute.xlu0 %1912
    %1914 = vrot.lane.b32.xlu0 %v1907, 64
    %v1915 = vpop.permute.xlu0 %1914
    %v1920 = vcombine.low %v1909, %v1913
    %v1921 = vcombine.high %v1909, %v1913
    %v1923 = vunpack.c.l.s4 1983009808
    %v1924 = vunpack.c.0.s8 %v1923
    %v1925 = vlaneseq
    %v1926 = vshrl.u32 %v1925, 7
    %v1927 = vsub.s32 %v1924, %v1926
    %v1928 = vrot.slane %v1920, %v1927
    %v1930 = vunpack.c.l.s4 1983009808
    %v1931 = vunpack.c.0.s8 %v1930
    %v1932 = vlaneseq
    %v1933 = vshrl.u32 %v1932, 7
    %v1934 = vsub.s32 %v1931, %v1933
    %v1935 = vrot.slane %v1921, %v1934
    %v1936 = vcombine.low %v1911, %v1915
    %v1937 = vcombine.high %v1911, %v1915
    %v1939 = vunpack.c.l.s4 1983009808
    %v1940 = vunpack.c.0.s8 %v1939
    %v1941 = vlaneseq
    %v1942 = vshrl.u32 %v1941, 7
    %v1943 = vsub.s32 %v1940, %v1942
    %v1944 = vrot.slane %v1936, %v1943
    %v1946 = vunpack.c.l.s4 1983009808
    %v1947 = vunpack.c.0.s8 %v1946
    %v1948 = vlaneseq
    %v1949 = vshrl.u32 %v1948, 7
    %v1950 = vsub.s32 %v1947, %v1949
    %v1951 = vrot.slane %v1937, %v1950
    %v1952 = vcombine.low %v1928, %v1944
    %v1953 = vcombine.high %v1928, %v1944
    %v1955 = vunpack.c.l.s4 1934713408
    %v1956 = vunpack.c.0.s8 %v1955
    %v1957 = vlaneseq
    %v1958 = vshrl.u32 %v1957, 7
    %v1959 = vsub.s32 %v1956, %v1958
    %v1960 = vrot.slane %v1952, %v1959
    %v1962 = vunpack.c.l.s4 1934713408
    %v1963 = vunpack.c.0.s8 %v1962
    %v1964 = vlaneseq
    %v1965 = vshrl.u32 %v1964, 7
    %v1966 = vsub.s32 %v1963, %v1965
    %v1967 = vrot.slane %v1953, %v1966
    %v1968 = vcombine.low %v1935, %v1951
    %v1969 = vcombine.high %v1935, %v1951
    %v1971 = vunpack.c.l.s4 1934713408
    %v1972 = vunpack.c.0.s8 %v1971
    %v1973 = vlaneseq
    %v1974 = vshrl.u32 %v1973, 7
    %v1975 = vsub.s32 %v1972, %v1974
    %v1976 = vrot.slane %v1968, %v1975
    %v1978 = vunpack.c.l.s4 1934713408
    %v1979 = vunpack.c.0.s8 %v1978
    %v1980 = vlaneseq
    %v1981 = vshrl.u32 %v1980, 7
    %v1982 = vsub.s32 %v1979, %v1981
    %v1983 = vrot.slane %v1969, %v1982
    %v1984 = vcombine.high %v1960, 0.0
    %v1985 = vcombine.high %v1967, 0.0
    %v1986 = vcombine.high %v1976, 0.0
    %v1987 = vcombine.high %v1983, 0.0
    %v1988 = vcombine.low %v1960, %v1967
    %v1990 = vunpack.c.l.s4 1983009808
    %v1991 = vunpack.c.0.s8 %v1990
    %v1992 = vlaneseq
    %v1993 = vshrl.u32 %v1992, 7
    %v1994 = vsub.s32 %v1991, %v1993
    %v1995 = vrot.slane %v1988, %v1994
    %v1996 = vcombine.low %v1984, %v1985
    %v1998 = vunpack.c.l.s4 1983009808
    %v1999 = vunpack.c.0.s8 %v1998
    %v2000 = vlaneseq
    %v2001 = vshrl.u32 %v2000, 7
    %v2002 = vsub.s32 %v1999, %v2001
    %v2003 = vrot.slane %v1996, %v2002
    %v2004 = vcombine.low %v1976, %v1983
    %v2006 = vunpack.c.l.s4 1983009808
    %v2007 = vunpack.c.0.s8 %v2006
    %v2008 = vlaneseq
    %v2009 = vshrl.u32 %v2008, 7
    %v2010 = vsub.s32 %v2007, %v2009
    %v2011 = vrot.slane %v2004, %v2010
    %v2012 = vcombine.low %v1986, %v1987
    %v2014 = vunpack.c.l.s4 1983009808
    %v2015 = vunpack.c.0.s8 %v2014
    %v2016 = vlaneseq
    %v2017 = vshrl.u32 %v2016, 7
    %v2018 = vsub.s32 %v2015, %v2017
    %v2019 = vrot.slane %v2012, %v2018
    %v2020 = vcombine.low %v1995, %v2003
    %v2021 = vcombine.high %v1995, %v2003
    %v2023 = vunpack.c.l.s4 1934713408
    %v2024 = vunpack.c.0.s8 %v2023
    %v2025 = vlaneseq
    %v2026 = vshrl.u32 %v2025, 7
    %v2027 = vsub.s32 %v2024, %v2026
    %v2028 = vrot.slane %v2020, %v2027
    %v2030 = vunpack.c.l.s4 1934713408
    %v2031 = vunpack.c.0.s8 %v2030
    %v2032 = vlaneseq
    %v2033 = vshrl.u32 %v2032, 7
    %v2034 = vsub.s32 %v2031, %v2033
    %v2035 = vrot.slane %v2021, %v2034
    %v2036 = vcombine.low %v2011, %v2019
    %v2037 = vcombine.high %v2011, %v2019
    %v2039 = vunpack.c.l.s4 1934713408
    %v2040 = vunpack.c.0.s8 %v2039
    %v2041 = vlaneseq
    %v2042 = vshrl.u32 %v2041, 7
    %v2043 = vsub.s32 %v2040, %v2042
    %v2044 = vrot.slane %v2036, %v2043
    %v2046 = vunpack.c.l.s4 1934713408
    %v2047 = vunpack.c.0.s8 %v2046
    %v2048 = vlaneseq
    %v2049 = vshrl.u32 %v2048, 7
    %v2050 = vsub.s32 %v2047, %v2049
    %v2051 = vrot.slane %v2037, %v2050
    %v2052 = vcombine.low %v2028, %v2044
    %v2053 = vcombine.high %v2028, %v2044
    %v2054 = vcombine.low %v2035, %v2051
    %v2055 = vcombine.high %v2035, %v2051
    %v2057 = vsel %vm805, %v1742, 0
    %v2060 = vsel %vm805, %v1897, 0
    %2062 = vmatprep.subr.mxu0 0.0
    %2063 = vmatpush1.xpose.msra.mxu0 %v2060
    %2064 = vmatprep.subr.mxu0 0.0
    %2065 = vmatpush1.xpose.msra.mxu0 0.0
    %2066 = vmatprep.subr.mxu0 0.0
    %2067 = vmatpush1.xpose.msra.mxu0 0.0
    %2068 = vmatprep.subr.mxu0 0.0
    %2069 = vmatpush1.xpose.msra.mxu0 0.0
    %2070 = vmatprep.subr.mxu0 0.0
    %2071 = vmatpush1.xpose.msra.mxu0 0.0
    %2072 = vmatprep.subr.mxu0 0.0
    %2073 = vmatpush1.xpose.msra.mxu0 0.0
    %2074 = vmatprep.subr.mxu0 0.0
    %2075 = vmatpush1.xpose.msra.mxu0 0.0
    %2076 = vmatprep.subr.mxu0 0.0
    %2077 = vmatpush1.xpose.msra.mxu0 0.0
    %2078 = vmatprep.subr.mxu0 0.0
    %2079 = vmatpush1.xpose.msra.mxu0 0.0
    %2080 = vmatprep.subr.mxu0 0.0
    %2081 = vmatpush1.xpose.msra.mxu0 0.0
    %2082 = vmatprep.subr.mxu0 0.0
    %2083 = vmatpush1.xpose.msra.mxu0 0.0
    %2084 = vmatprep.subr.mxu0 0.0
    %2085 = vmatpush1.xpose.msra.mxu0 0.0
    %2086 = vmatprep.subr.mxu0 0.0
    %2087 = vmatpush1.xpose.msra.mxu0 0.0
    %2088 = vmatprep.subr.mxu0 0.0
    %2089 = vmatpush1.xpose.msra.mxu0 0.0
    %2090 = vmatprep.subr.mxu0 0.0
    %2091 = vmatpush1.xpose.msra.mxu0 0.0
    %2092 = vmatprep.subr.mxu0 0.0
    %2093 = vmatpush1.xpose.msra.mxu0 0.0
    %2094 = vmatprep.subr.mxu0 0.0
    %2095 = vmatpush1.xpose.msra.mxu0 0.0
    %2096 = vmatprep.subr.mxu0 0.0
    %2097 = vmatpush1.xpose.msra.mxu0 0.0
    %2098 = vmatprep.subr.mxu0 0.0
    %2099 = vmatpush1.xpose.msra.mxu0 0.0
    %2100 = vmatprep.subr.mxu0 0.0
    %2101 = vmatpush1.xpose.msra.mxu0 0.0
    %2102 = vmatprep.subr.mxu0 0.0
    %2103 = vmatpush1.xpose.msra.mxu0 0.0
    %2104 = vmatprep.subr.mxu0 0.0
    %2105 = vmatpush1.xpose.msra.mxu0 0.0
    %2106 = vmatprep.subr.mxu0 0.0
    %2107 = vmatpush1.xpose.msra.mxu0 0.0
    %2108 = vmatprep.subr.mxu0 0.0
    %2109 = vmatpush1.xpose.msra.mxu0 0.0
    %2110 = vmatprep.subr.mxu0 0.0
    %2111 = vmatpush1.xpose.msra.mxu0 0.0
    %2112 = vmatprep.subr.mxu0 0.0
    %2113 = vmatpush1.xpose.msra.mxu0 0.0
    %2114 = vmatprep.subr.mxu0 0.0
    %2115 = vmatpush1.xpose.msra.mxu0 0.0
    %2116 = vmatprep.subr.mxu0 0.0
    %2117 = vmatpush1.xpose.msra.mxu0 0.0
    %2118 = vmatprep.subr.mxu0 0.0
    %2119 = vmatpush1.xpose.msra.mxu0 0.0
    %2120 = vmatprep.subr.mxu0 0.0
    %2121 = vmatpush1.xpose.msra.mxu0 0.0
    %2122 = vmatprep.subr.mxu0 0.0
    %2123 = vmatpush1.xpose.msra.mxu0 0.0
    %2124 = vmatprep.subr.mxu0 0.0
    %2125 = vmatpush1.xpose.msra.mxu0 0.0
    %2126 = vmatprep.mubr.f32.mxu0 0.0
    %2127 = vmatmul.mubr.f32.gmra.mrb[0].mxu0 %v2057
    %v2128 = vpop.f32.mrb[0].mxu0
    %v2129 = vadd.f32 0.0, %v2128
    %v2130 = vpop.f32.mrb[0].mxu0
    %2131 = vdwg.mxu0
    %v2133 = vsel %vm805, %v1743, 0
    %v2136 = vsel %vm805, %v1898, 0
    %2138 = vmatprep.subr.mxu0 0.0
    %2139 = vmatpush1.xpose.msra.mxu0 %v2136
    %2140 = vmatprep.subr.mxu0 0.0
    %2141 = vmatpush1.xpose.msra.mxu0 0.0
    %2142 = vmatprep.subr.mxu0 0.0
    %2143 = vmatpush1.xpose.msra.mxu0 0.0
    %2144 = vmatprep.subr.mxu0 0.0
    %2145 = vmatpush1.xpose.msra.mxu0 0.0
    %2146 = vmatprep.subr.mxu0 0.0
    %2147 = vmatpush1.xpose.msra.mxu0 0.0
    %2148 = vmatprep.subr.mxu0 0.0
    %2149 = vmatpush1.xpose.msra.mxu0 0.0
    %2150 = vmatprep.subr.mxu0 0.0
    %2151 = vmatpush1.xpose.msra.mxu0 0.0
    %2152 = vmatprep.subr.mxu0 0.0
    %2153 = vmatpush1.xpose.msra.mxu0 0.0
    %2154 = vmatprep.subr.mxu0 0.0
    %2155 = vmatpush1.xpose.msra.mxu0 0.0
    %2156 = vmatprep.subr.mxu0 0.0
    %2157 = vmatpush1.xpose.msra.mxu0 0.0
    %2158 = vmatprep.subr.mxu0 0.0
    %2159 = vmatpush1.xpose.msra.mxu0 0.0
    %2160 = vmatprep.subr.mxu0 0.0
    %2161 = vmatpush1.xpose.msra.mxu0 0.0
    %2162 = vmatprep.subr.mxu0 0.0
    %2163 = vmatpush1.xpose.msra.mxu0 0.0
    %2164 = vmatprep.subr.mxu0 0.0
    %2165 = vmatpush1.xpose.msra.mxu0 0.0
    %2166 = vmatprep.subr.mxu0 0.0
    %2167 = vmatpush1.xpose.msra.mxu0 0.0
    %2168 = vmatprep.subr.mxu0 0.0
    %2169 = vmatpush1.xpose.msra.mxu0 0.0
    %2170 = vmatprep.subr.mxu0 0.0
    %2171 = vmatpush1.xpose.msra.mxu0 0.0
    %2172 = vmatprep.subr.mxu0 0.0
    %2173 = vmatpush1.xpose.msra.mxu0 0.0
    %2174 = vmatprep.subr.mxu0 0.0
    %2175 = vmatpush1.xpose.msra.mxu0 0.0
    %2176 = vmatprep.subr.mxu0 0.0
    %2177 = vmatpush1.xpose.msra.mxu0 0.0
    %2178 = vmatprep.subr.mxu0 0.0
    %2179 = vmatpush1.xpose.msra.mxu0 0.0
    %2180 = vmatprep.subr.mxu0 0.0
    %2181 = vmatpush1.xpose.msra.mxu0 0.0
    %2182 = vmatprep.subr.mxu0 0.0
    %2183 = vmatpush1.xpose.msra.mxu0 0.0
    %2184 = vmatprep.subr.mxu0 0.0
    %2185 = vmatpush1.xpose.msra.mxu0 0.0
    %2186 = vmatprep.subr.mxu0 0.0
    %2187 = vmatpush1.xpose.msra.mxu0 0.0
    %2188 = vmatprep.subr.mxu0 0.0
    %2189 = vmatpush1.xpose.msra.mxu0 0.0
    %2190 = vmatprep.subr.mxu0 0.0
    %2191 = vmatpush1.xpose.msra.mxu0 0.0
    %2192 = vmatprep.subr.mxu0 0.0
    %2193 = vmatpush1.xpose.msra.mxu0 0.0
    %2194 = vmatprep.subr.mxu0 0.0
    %2195 = vmatpush1.xpose.msra.mxu0 0.0
    %2196 = vmatprep.subr.mxu0 0.0
    %2197 = vmatpush1.xpose.msra.mxu0 0.0
    %2198 = vmatprep.subr.mxu0 0.0
    %2199 = vmatpush1.xpose.msra.mxu0 0.0
    %2200 = vmatprep.subr.mxu0 0.0
    %2201 = vmatpush1.xpose.msra.mxu0 0.0
    %2202 = vmatprep.mubr.f32.mxu0 0.0
    %2203 = vmatmul.mubr.f32.gmra.mrb[0].mxu0 %v2133
    %v2204 = vpop.f32.mrb[0].mxu0
    %v2205 = vadd.f32 0.0, %v2204
    %v2206 = vpop.f32.mrb[0].mxu0
    %2207 = vdwg.mxu0
    %v2209 = vsel %vm805, %v1744, 0
    %v2212 = vsel %vm805, %v1899, 0
    %2214 = vmatprep.subr.mxu0 0.0
    %2215 = vmatpush1.xpose.msra.mxu0 %v2212
    %2216 = vmatprep.subr.mxu0 0.0
    %2217 = vmatpush1.xpose.msra.mxu0 0.0
    %2218 = vmatprep.subr.mxu0 0.0
    %2219 = vmatpush1.xpose.msra.mxu0 0.0
    %2220 = vmatprep.subr.mxu0 0.0
    %2221 = vmatpush1.xpose.msra.mxu0 0.0
    %2222 = vmatprep.subr.mxu0 0.0
    %2223 = vmatpush1.xpose.msra.mxu0 0.0
    %2224 = vmatprep.subr.mxu0 0.0
    %2225 = vmatpush1.xpose.msra.mxu0 0.0
    %2226 = vmatprep.subr.mxu0 0.0
    %2227 = vmatpush1.xpose.msra.mxu0 0.0
    %2228 = vmatprep.subr.mxu0 0.0
    %2229 = vmatpush1.xpose.msra.mxu0 0.0
    %2230 = vmatprep.subr.mxu0 0.0
    %2231 = vmatpush1.xpose.msra.mxu0 0.0
    %2232 = vmatprep.subr.mxu0 0.0
    %2233 = vmatpush1.xpose.msra.mxu0 0.0
    %2234 = vmatprep.subr.mxu0 0.0
    %2235 = vmatpush1.xpose.msra.mxu0 0.0
    %2236 = vmatprep.subr.mxu0 0.0
    %2237 = vmatpush1.xpose.msra.mxu0 0.0
    %2238 = vmatprep.subr.mxu0 0.0
    %2239 = vmatpush1.xpose.msra.mxu0 0.0
    %2240 = vmatprep.subr.mxu0 0.0
    %2241 = vmatpush1.xpose.msra.mxu0 0.0
    %2242 = vmatprep.subr.mxu0 0.0
    %2243 = vmatpush1.xpose.msra.mxu0 0.0
    %2244 = vmatprep.subr.mxu0 0.0
    %2245 = vmatpush1.xpose.msra.mxu0 0.0
    %2246 = vmatprep.subr.mxu0 0.0
    %2247 = vmatpush1.xpose.msra.mxu0 0.0
    %2248 = vmatprep.subr.mxu0 0.0
    %2249 = vmatpush1.xpose.msra.mxu0 0.0
    %2250 = vmatprep.subr.mxu0 0.0
    %2251 = vmatpush1.xpose.msra.mxu0 0.0
    %2252 = vmatprep.subr.mxu0 0.0
    %2253 = vmatpush1.xpose.msra.mxu0 0.0
    %2254 = vmatprep.subr.mxu0 0.0
    %2255 = vmatpush1.xpose.msra.mxu0 0.0
    %2256 = vmatprep.subr.mxu0 0.0
    %2257 = vmatpush1.xpose.msra.mxu0 0.0
    %2258 = vmatprep.subr.mxu0 0.0
    %2259 = vmatpush1.xpose.msra.mxu0 0.0
    %2260 = vmatprep.subr.mxu0 0.0
    %2261 = vmatpush1.xpose.msra.mxu0 0.0
    %2262 = vmatprep.subr.mxu0 0.0
    %2263 = vmatpush1.xpose.msra.mxu0 0.0
    %2264 = vmatprep.subr.mxu0 0.0
    %2265 = vmatpush1.xpose.msra.mxu0 0.0
    %2266 = vmatprep.subr.mxu0 0.0
    %2267 = vmatpush1.xpose.msra.mxu0 0.0
    %2268 = vmatprep.subr.mxu0 0.0
    %2269 = vmatpush1.xpose.msra.mxu0 0.0
    %2270 = vmatprep.subr.mxu0 0.0
    %2271 = vmatpush1.xpose.msra.mxu0 0.0
    %2272 = vmatprep.subr.mxu0 0.0
    %2273 = vmatpush1.xpose.msra.mxu0 0.0
    %2274 = vmatprep.subr.mxu0 0.0
    %2275 = vmatpush1.xpose.msra.mxu0 0.0
    %2276 = vmatprep.subr.mxu0 0.0
    %2277 = vmatpush1.xpose.msra.mxu0 0.0
    %2278 = vmatprep.mubr.f32.mxu0 0.0
    %2279 = vmatmul.mubr.f32.gmra.mrb[0].mxu0 %v2209
    %v2280 = vpop.f32.mrb[0].mxu0
    %v2281 = vadd.f32 0.0, %v2280
    %v2282 = vpop.f32.mrb[0].mxu0
    %2283 = vdwg.mxu0
    %v2285 = vsel %vm805, %v1745, 0
    %v2288 = vsel %vm805, %v1900, 0
    %2290 = vmatprep.subr.mxu0 0.0
    %2291 = vmatpush1.xpose.msra.mxu0 %v2288
    %2292 = vmatprep.subr.mxu0 0.0
    %2293 = vmatpush1.xpose.msra.mxu0 0.0
    %2294 = vmatprep.subr.mxu0 0.0
    %2295 = vmatpush1.xpose.msra.mxu0 0.0
    %2296 = vmatprep.subr.mxu0 0.0
    %2297 = vmatpush1.xpose.msra.mxu0 0.0
    %2298 = vmatprep.subr.mxu0 0.0
    %2299 = vmatpush1.xpose.msra.mxu0 0.0
    %2300 = vmatprep.subr.mxu0 0.0
    %2301 = vmatpush1.xpose.msra.mxu0 0.0
    %2302 = vmatprep.subr.mxu0 0.0
    %2303 = vmatpush1.xpose.msra.mxu0 0.0
    %2304 = vmatprep.subr.mxu0 0.0
    %2305 = vmatpush1.xpose.msra.mxu0 0.0
    %2306 = vmatprep.subr.mxu0 0.0
    %2307 = vmatpush1.xpose.msra.mxu0 0.0
    %2308 = vmatprep.subr.mxu0 0.0
    %2309 = vmatpush1.xpose.msra.mxu0 0.0
    %2310 = vmatprep.subr.mxu0 0.0
    %2311 = vmatpush1.xpose.msra.mxu0 0.0
    %2312 = vmatprep.subr.mxu0 0.0
    %2313 = vmatpush1.xpose.msra.mxu0 0.0
    %2314 = vmatprep.subr.mxu0 0.0
    %2315 = vmatpush1.xpose.msra.mxu0 0.0
    %2316 = vmatprep.subr.mxu0 0.0
    %2317 = vmatpush1.xpose.msra.mxu0 0.0
    %2318 = vmatprep.subr.mxu0 0.0
    %2319 = vmatpush1.xpose.msra.mxu0 0.0
    %2320 = vmatprep.subr.mxu0 0.0
    %2321 = vmatpush1.xpose.msra.mxu0 0.0
    %2322 = vmatprep.subr.mxu0 0.0
    %2323 = vmatpush1.xpose.msra.mxu0 0.0
    %2324 = vmatprep.subr.mxu0 0.0
    %2325 = vmatpush1.xpose.msra.mxu0 0.0
    %2326 = vmatprep.subr.mxu0 0.0
    %2327 = vmatpush1.xpose.msra.mxu0 0.0
    %2328 = vmatprep.subr.mxu0 0.0
    %2329 = vmatpush1.xpose.msra.mxu0 0.0
    %2330 = vmatprep.subr.mxu0 0.0
    %2331 = vmatpush1.xpose.msra.mxu0 0.0
    %2332 = vmatprep.subr.mxu0 0.0
    %2333 = vmatpush1.xpose.msra.mxu0 0.0
    %2334 = vmatprep.subr.mxu0 0.0
    %2335 = vmatpush1.xpose.msra.mxu0 0.0
    %2336 = vmatprep.subr.mxu0 0.0
    %2337 = vmatpush1.xpose.msra.mxu0 0.0
    %2338 = vmatprep.subr.mxu0 0.0
    %2339 = vmatpush1.xpose.msra.mxu0 0.0
    %2340 = vmatprep.subr.mxu0 0.0
    %2341 = vmatpush1.xpose.msra.mxu0 0.0
    %2342 = vmatprep.subr.mxu0 0.0
    %2343 = vmatpush1.xpose.msra.mxu0 0.0
    %2344 = vmatprep.subr.mxu0 0.0
    %2345 = vmatpush1.xpose.msra.mxu0 0.0
    %2346 = vmatprep.subr.mxu0 0.0
    %2347 = vmatpush1.xpose.msra.mxu0 0.0
    %2348 = vmatprep.subr.mxu0 0.0
    %2349 = vmatpush1.xpose.msra.mxu0 0.0
    %2350 = vmatprep.subr.mxu0 0.0
    %2351 = vmatpush1.xpose.msra.mxu0 0.0
    %2352 = vmatprep.subr.mxu0 0.0
    %2353 = vmatpush1.xpose.msra.mxu0 0.0
    %2354 = vmatprep.mubr.f32.mxu0 0.0
    %2355 = vmatmul.mubr.f32.gmra.mrb[0].mxu0 %v2285
    %v2356 = vpop.f32.mrb[0].mxu0
    %v2357 = vadd.f32 0.0, %v2356
    %v2358 = vpop.f32.mrb[0].mxu0
    %2359 = vdwg.mxu0
    %v2360 = vsel %vm805, %v2129, -inf
    %2361 = vmax.xlane.f32.xlu0 %v2360
    %v2362 = vpop.xlane.xlu0 %2361
    %v2363 = vsel %vm805, %v2205, -inf
    %2364 = vmax.xlane.f32.xlu0 %v2363
    %v2365 = vpop.xlane.xlu0 %2364
    %v2366 = vsel %vm805, %v2281, -inf
    %2367 = vmax.xlane.f32.xlu0 %v2366
    %v2368 = vpop.xlane.xlu0 %2367
    %v2369 = vsel %vm805, %v2357, -inf
    %2370 = vmax.xlane.f32.xlu0 %v2369
    %v2371 = vpop.xlane.xlu0 %2370
    %v2372 = vsub.f32 %v2129, %v2362
    %v2373 = vsub.f32 %v2205, %v2365
    %v2374 = vsub.f32 %v2281, %v2368
    %v2375 = vsub.f32 %v2357, %v2371
    %v2376 = vmul.f32 %v2372, 1.442695
    %v2377 = vpow.pop %v2376
    %v2378 = vmul.f32 %v2373, 1.442695
    %v2379 = vpow.pop %v2378
    %v2380 = vmul.f32 %v2374, 1.442695
    %v2381 = vpow.pop %v2380
    %v2382 = vmul.f32 %v2375, 1.442695
    %v2383 = vpow.pop %v2382
    %v2384 = vsel %vm805, %v2377, 0.0
    %2385 = vadd.xlane.f32.xlu0 %v2384
    %v2386 = vpop.xlane.xlu0 %2385
    %v2387 = vsel %vm805, %v2379, 0.0
    %2388 = vadd.xlane.f32.xlu0 %v2387
    %v2389 = vpop.xlane.xlu0 %2388
    %v2390 = vsel %vm805, %v2381, 0.0
    %2391 = vadd.xlane.f32.xlu0 %v2390
    %v2392 = vpop.xlane.xlu0 %2391
    %v2393 = vsel %vm805, %v2383, 0.0
    %2394 = vadd.xlane.f32.xlu0 %v2393
    %v2395 = vpop.xlane.xlu0 %2394
    %v2396 = vrcp.pop %v2386
    %v2397 = vrcp.pop %v2389
    %v2398 = vrcp.pop %v2392
    %v2399 = vrcp.pop %v2395
    %v2400 = vmul.f32 %v2377, %v2396
    %v2401 = vmul.f32 %v2379, %v2397
    %v2402 = vmul.f32 %v2381, %v2398
    %v2403 = vmul.f32 %v2383, %v2399
    %v2405 = vsel %vm805, %v2400, 0
    %2407 = vmatprep.subr.mxu0 0.0
    %2408 = vmatpush1.msra.mxu0 %v2052
    %2409 = vmatprep.subr.mxu0 0.0
    %2410 = vmatpush1.msra.mxu0 0.0
    %2411 = vmatprep.subr.mxu0 0.0
    %2412 = vmatpush1.msra.mxu0 0.0
    %2413 = vmatprep.subr.mxu0 0.0
    %2414 = vmatpush1.msra.mxu0 0.0
    %2415 = vmatprep.subr.mxu0 0.0
    %2416 = vmatpush1.msra.mxu0 0.0
    %2417 = vmatprep.subr.mxu0 0.0
    %2418 = vmatpush1.msra.mxu0 0.0
    %2419 = vmatprep.subr.mxu0 0.0
    %2420 = vmatpush1.msra.mxu0 0.0
    %2421 = vmatprep.subr.mxu0 0.0
    %2422 = vmatpush1.msra.mxu0 0.0
    %2423 = vmatprep.subr.mxu0 0.0
    %2424 = vmatpush1.msra.mxu0 0.0
    %2425 = vmatprep.subr.mxu0 0.0
    %2426 = vmatpush1.msra.mxu0 0.0
    %2427 = vmatprep.subr.mxu0 0.0
    %2428 = vmatpush1.msra.mxu0 0.0
    %2429 = vmatprep.subr.mxu0 0.0
    %2430 = vmatpush1.msra.mxu0 0.0
    %2431 = vmatprep.subr.mxu0 0.0
    %2432 = vmatpush1.msra.mxu0 0.0
    %2433 = vmatprep.subr.mxu0 0.0
    %2434 = vmatpush1.msra.mxu0 0.0
    %2435 = vmatprep.subr.mxu0 0.0
    %2436 = vmatpush1.msra.mxu0 0.0
    %2437 = vmatprep.subr.mxu0 0.0
    %2438 = vmatpush1.msra.mxu0 0.0
    %2439 = vmatprep.subr.mxu0 0.0
    %2440 = vmatpush1.msra.mxu0 0.0
    %2441 = vmatprep.subr.mxu0 0.0
    %2442 = vmatpush1.msra.mxu0 0.0
    %2443 = vmatprep.subr.mxu0 0.0
    %2444 = vmatpush1.msra.mxu0 0.0
    %2445 = vmatprep.subr.mxu0 0.0
    %2446 = vmatpush1.msra.mxu0 0.0
    %2447 = vmatprep.subr.mxu0 0.0
    %2448 = vmatpush1.msra.mxu0 0.0
    %2449 = vmatprep.subr.mxu0 0.0
    %2450 = vmatpush1.msra.mxu0 0.0
    %2451 = vmatprep.subr.mxu0 0.0
    %2452 = vmatpush1.msra.mxu0 0.0
    %2453 = vmatprep.subr.mxu0 0.0
    %2454 = vmatpush1.msra.mxu0 0.0
    %2455 = vmatprep.subr.mxu0 0.0
    %2456 = vmatpush1.msra.mxu0 0.0
    %2457 = vmatprep.subr.mxu0 0.0
    %2458 = vmatpush1.msra.mxu0 0.0
    %2459 = vmatprep.subr.mxu0 0.0
    %2460 = vmatpush1.msra.mxu0 0.0
    %2461 = vmatprep.subr.mxu0 0.0
    %2462 = vmatpush1.msra.mxu0 0.0
    %2463 = vmatprep.subr.mxu0 0.0
    %2464 = vmatpush1.msra.mxu0 0.0
    %2465 = vmatprep.subr.mxu0 0.0
    %2466 = vmatpush1.msra.mxu0 0.0
    %2467 = vmatprep.subr.mxu0 0.0
    %2468 = vmatpush1.msra.mxu0 0.0
    %2469 = vmatprep.subr.mxu0 0.0
    %2470 = vmatpush1.msra.mxu0 0.0
    %2471 = vmatprep.mubr.f32.mxu0 0.0
    %2472 = vmatmul.mubr.f32.gmra.mrb[0].mxu0 %v2405
    %v2473 = vpop.f32.mrb[0].mxu0
    %v2474 = vadd.f32 0.0, %v2473
    %v2475 = vpop.f32.mrb[0].mxu0
    %2476 = vdwg.mxu0
    %v2478 = vsel %vm805, %v2401, 0
    %2480 = vmatprep.subr.mxu0 0.0
    %2481 = vmatpush1.msra.mxu0 %v2053
    %2482 = vmatprep.subr.mxu0 0.0
    %2483 = vmatpush1.msra.mxu0 0.0
    %2484 = vmatprep.subr.mxu0 0.0
    %2485 = vmatpush1.msra.mxu0 0.0
    %2486 = vmatprep.subr.mxu0 0.0
    %2487 = vmatpush1.msra.mxu0 0.0
    %2488 = vmatprep.subr.mxu0 0.0
    %2489 = vmatpush1.msra.mxu0 0.0
    %2490 = vmatprep.subr.mxu0 0.0
    %2491 = vmatpush1.msra.mxu0 0.0
    %2492 = vmatprep.subr.mxu0 0.0
    %2493 = vmatpush1.msra.mxu0 0.0
    %2494 = vmatprep.subr.mxu0 0.0
    %2495 = vmatpush1.msra.mxu0 0.0
    %2496 = vmatprep.subr.mxu0 0.0
    %2497 = vmatpush1.msra.mxu0 0.0
    %2498 = vmatprep.subr.mxu0 0.0
    %2499 = vmatpush1.msra.mxu0 0.0
    %2500 = vmatprep.subr.mxu0 0.0
    %2501 = vmatpush1.msra.mxu0 0.0
    %2502 = vmatprep.subr.mxu0 0.0
    %2503 = vmatpush1.msra.mxu0 0.0
    %2504 = vmatprep.subr.mxu0 0.0
    %2505 = vmatpush1.msra.mxu0 0.0
    %2506 = vmatprep.subr.mxu0 0.0
    %2507 = vmatpush1.msra.mxu0 0.0
    %2508 = vmatprep.subr.mxu0 0.0
    %2509 = vmatpush1.msra.mxu0 0.0
    %2510 = vmatprep.subr.mxu0 0.0
    %2511 = vmatpush1.msra.mxu0 0.0
    %2512 = vmatprep.subr.mxu0 0.0
    %2513 = vmatpush1.msra.mxu0 0.0
    %2514 = vmatprep.subr.mxu0 0.0
    %2515 = vmatpush1.msra.mxu0 0.0
    %2516 = vmatprep.subr.mxu0 0.0
    %2517 = vmatpush1.msra.mxu0 0.0
    %2518 = vmatprep.subr.mxu0 0.0
    %2519 = vmatpush1.msra.mxu0 0.0
    %2520 = vmatprep.subr.mxu0 0.0
    %2521 = vmatpush1.msra.mxu0 0.0
    %2522 = vmatprep.subr.mxu0 0.0
    %2523 = vmatpush1.msra.mxu0 0.0
    %2524 = vmatprep.subr.mxu0 0.0
    %2525 = vmatpush1.msra.mxu0 0.0
    %2526 = vmatprep.subr.mxu0 0.0
    %2527 = vmatpush1.msra.mxu0 0.0
    %2528 = vmatprep.subr.mxu0 0.0
    %2529 = vmatpush1.msra.mxu0 0.0
    %2530 = vmatprep.subr.mxu0 0.0
    %2531 = vmatpush1.msra.mxu0 0.0
    %2532 = vmatprep.subr.mxu0 0.0
    %2533 = vmatpush1.msra.mxu0 0.0
    %2534 = vmatprep.subr.mxu0 0.0
    %2535 = vmatpush1.msra.mxu0 0.0
    %2536 = vmatprep.subr.mxu0 0.0
    %2537 = vmatpush1.msra.mxu0 0.0
    %2538 = vmatprep.subr.mxu0 0.0
    %2539 = vmatpush1.msra.mxu0 0.0
    %2540 = vmatprep.subr.mxu0 0.0
    %2541 = vmatpush1.msra.mxu0 0.0
    %2542 = vmatprep.subr.mxu0 0.0
    %2543 = vmatpush1.msra.mxu0 0.0
    %2544 = vmatprep.mubr.f32.mxu0 0.0
    %2545 = vmatmul.mubr.f32.gmra.mrb[0].mxu0 %v2478
    %v2546 = vpop.f32.mrb[0].mxu0
    %v2547 = vadd.f32 0.0, %v2546
    %v2548 = vpop.f32.mrb[0].mxu0
    %2549 = vdwg.mxu0
    %v2551 = vsel %vm805, %v2402, 0
    %2553 = vmatprep.subr.mxu0 0.0
    %2554 = vmatpush1.msra.mxu0 %v2054
    %2555 = vmatprep.subr.mxu0 0.0
    %2556 = vmatpush1.msra.mxu0 0.0
    %2557 = vmatprep.subr.mxu0 0.0
    %2558 = vmatpush1.msra.mxu0 0.0
    %2559 = vmatprep.subr.mxu0 0.0
    %2560 = vmatpush1.msra.mxu0 0.0
    %2561 = vmatprep.subr.mxu0 0.0
    %2562 = vmatpush1.msra.mxu0 0.0
    %2563 = vmatprep.subr.mxu0 0.0
    %2564 = vmatpush1.msra.mxu0 0.0
    %2565 = vmatprep.subr.mxu0 0.0
    %2566 = vmatpush1.msra.mxu0 0.0
    %2567 = vmatprep.subr.mxu0 0.0
    %2568 = vmatpush1.msra.mxu0 0.0
    %2569 = vmatprep.subr.mxu0 0.0
    %2570 = vmatpush1.msra.mxu0 0.0
    %2571 = vmatprep.subr.mxu0 0.0
    %2572 = vmatpush1.msra.mxu0 0.0
    %2573 = vmatprep.subr.mxu0 0.0
    %2574 = vmatpush1.msra.mxu0 0.0
    %2575 = vmatprep.subr.mxu0 0.0
    %2576 = vmatpush1.msra.mxu0 0.0
    %2577 = vmatprep.subr.mxu0 0.0
    %2578 = vmatpush1.msra.mxu0 0.0
    %2579 = vmatprep.subr.mxu0 0.0
    %2580 = vmatpush1.msra.mxu0 0.0
    %2581 = vmatprep.subr.mxu0 0.0
    %2582 = vmatpush1.msra.mxu0 0.0
    %2583 = vmatprep.subr.mxu0 0.0
    %2584 = vmatpush1.msra.mxu0 0.0
    %2585 = vmatprep.subr.mxu0 0.0
    %2586 = vmatpush1.msra.mxu0 0.0
    %2587 = vmatprep.subr.mxu0 0.0
    %2588 = vmatpush1.msra.mxu0 0.0
    %2589 = vmatprep.subr.mxu0 0.0
    %2590 = vmatpush1.msra.mxu0 0.0
    %2591 = vmatprep.subr.mxu0 0.0
    %2592 = vmatpush1.msra.mxu0 0.0
    %2593 = vmatprep.subr.mxu0 0.0
    %2594 = vmatpush1.msra.mxu0 0.0
    %2595 = vmatprep.subr.mxu0 0.0
    %2596 = vmatpush1.msra.mxu0 0.0
    %2597 = vmatprep.subr.mxu0 0.0
    %2598 = vmatpush1.msra.mxu0 0.0
    %2599 = vmatprep.subr.mxu0 0.0
    %2600 = vmatpush1.msra.mxu0 0.0
    %2601 = vmatprep.subr.mxu0 0.0
    %2602 = vmatpush1.msra.mxu0 0.0
    %2603 = vmatprep.subr.mxu0 0.0
    %2604 = vmatpush1.msra.mxu0 0.0
    %2605 = vmatprep.subr.mxu0 0.0
    %2606 = vmatpush1.msra.mxu0 0.0
    %2607 = vmatprep.subr.mxu0 0.0
    %2608 = vmatpush1.msra.mxu0 0.0
    %2609 = vmatprep.subr.mxu0 0.0
    %2610 = vmatpush1.msra.mxu0 0.0
    %2611 = vmatprep.subr.mxu0 0.0
    %2612 = vmatpush1.msra.mxu0 0.0
    %2613 = vmatprep.subr.mxu0 0.0
    %2614 = vmatpush1.msra.mxu0 0.0
    %2615 = vmatprep.subr.mxu0 0.0
    %2616 = vmatpush1.msra.mxu0 0.0
    %2617 = vmatprep.mubr.f32.mxu0 0.0
    %2618 = vmatmul.mubr.f32.gmra.mrb[0].mxu0 %v2551
    %v2619 = vpop.f32.mrb[0].mxu0
    %v2620 = vadd.f32 0.0, %v2619
    %v2621 = vpop.f32.mrb[0].mxu0
    %2622 = vdwg.mxu0
    %v2624 = vsel %vm805, %v2403, 0
    %2626 = vmatprep.subr.mxu0 0.0
    %2627 = vmatpush1.msra.mxu0 %v2055
    %2628 = vmatprep.subr.mxu0 0.0
    %2629 = vmatpush1.msra.mxu0 0.0
    %2630 = vmatprep.subr.mxu0 0.0
    %2631 = vmatpush1.msra.mxu0 0.0
    %2632 = vmatprep.subr.mxu0 0.0
    %2633 = vmatpush1.msra.mxu0 0.0
    %2634 = vmatprep.subr.mxu0 0.0
    %2635 = vmatpush1.msra.mxu0 0.0
    %2636 = vmatprep.subr.mxu0 0.0
    %2637 = vmatpush1.msra.mxu0 0.0
    %2638 = vmatprep.subr.mxu0 0.0
    %2639 = vmatpush1.msra.mxu0 0.0
    %2640 = vmatprep.subr.mxu0 0.0
    %2641 = vmatpush1.msra.mxu0 0.0
    %2642 = vmatprep.subr.mxu0 0.0
    %2643 = vmatpush1.msra.mxu0 0.0
    %2644 = vmatprep.subr.mxu0 0.0
    %2645 = vmatpush1.msra.mxu0 0.0
    %2646 = vmatprep.subr.mxu0 0.0
    %2647 = vmatpush1.msra.mxu0 0.0
    %2648 = vmatprep.subr.mxu0 0.0
    %2649 = vmatpush1.msra.mxu0 0.0
    %2650 = vmatprep.subr.mxu0 0.0
    %2651 = vmatpush1.msra.mxu0 0.0
    %2652 = vmatprep.subr.mxu0 0.0
    %2653 = vmatpush1.msra.mxu0 0.0
    %2654 = vmatprep.subr.mxu0 0.0
    %2655 = vmatpush1.msra.mxu0 0.0
    %2656 = vmatprep.subr.mxu0 0.0
    %2657 = vmatpush1.msra.mxu0 0.0
    %2658 = vmatprep.subr.mxu0 0.0
    %2659 = vmatpush1.msra.mxu0 0.0
    %2660 = vmatprep.subr.mxu0 0.0
    %2661 = vmatpush1.msra.mxu0 0.0
    %2662 = vmatprep.subr.mxu0 0.0
    %2663 = vmatpush1.msra.mxu0 0.0
    %2664 = vmatprep.subr.mxu0 0.0
    %2665 = vmatpush1.msra.mxu0 0.0
    %2666 = vmatprep.subr.mxu0 0.0
    %2667 = vmatpush1.msra.mxu0 0.0
    %2668 = vmatprep.subr.mxu0 0.0
    %2669 = vmatpush1.msra.mxu0 0.0
    %2670 = vmatprep.subr.mxu0 0.0
    %2671 = vmatpush1.msra.mxu0 0.0
    %2672 = vmatprep.subr.mxu0 0.0
    %2673 = vmatpush1.msra.mxu0 0.0
    %2674 = vmatprep.subr.mxu0 0.0
    %2675 = vmatpush1.msra.mxu0 0.0
    %2676 = vmatprep.subr.mxu0 0.0
    %2677 = vmatpush1.msra.mxu0 0.0
    %2678 = vmatprep.subr.mxu0 0.0
    %2679 = vmatpush1.msra.mxu0 0.0
    %2680 = vmatprep.subr.mxu0 0.0
    %2681 = vmatpush1.msra.mxu0 0.0
    %2682 = vmatprep.subr.mxu0 0.0
    %2683 = vmatpush1.msra.mxu0 0.0
    %2684 = vmatprep.subr.mxu0 0.0
    %2685 = vmatpush1.msra.mxu0 0.0
    %2686 = vmatprep.subr.mxu0 0.0
    %2687 = vmatpush1.msra.mxu0 0.0
    %2688 = vmatprep.subr.mxu0 0.0
    %2689 = vmatpush1.msra.mxu0 0.0
    %2690 = vmatprep.mubr.f32.mxu0 0.0
    %2691 = vmatmul.mubr.f32.gmra.mrb[0].mxu0 %v2624
    %v2692 = vpop.f32.mrb[0].mxu0
    %v2693 = vadd.f32 0.0, %v2692
    %v2694 = vpop.f32.mrb[0].mxu0
    %2695 = vdwg.mxu0
    %v2696 = vcombine.low %v2474, %v2620
    %v2697 = vcombine.high %v2474, %v2620
    %v2699 = vunpack.c.l.s4 1983009808
    %v2700 = vunpack.c.0.s8 %v2699
    %v2701 = vlaneseq
    %v2702 = vshrl.u32 %v2701, 7
    %v2703 = vsub.s32 %v2700, %v2702
    %v2704 = vrot.slane %v2696, %v2703
    %v2706 = vunpack.c.l.s4 1983009808
    %v2707 = vunpack.c.0.s8 %v2706
    %v2708 = vlaneseq
    %v2709 = vshrl.u32 %v2708, 7
    %v2710 = vsub.s32 %v2707, %v2709
    %v2711 = vrot.slane %v2697, %v2710
    %v2712 = vcombine.low %v2547, %v2693
    %v2713 = vcombine.high %v2547, %v2693
    %v2715 = vunpack.c.l.s4 1983009808
    %v2716 = vunpack.c.0.s8 %v2715
    %v2717 = vlaneseq
    %v2718 = vshrl.u32 %v2717, 7
    %v2719 = vsub.s32 %v2716, %v2718
    %v2720 = vrot.slane %v2712, %v2719
    %v2722 = vunpack.c.l.s4 1983009808
    %v2723 = vunpack.c.0.s8 %v2722
    %v2724 = vlaneseq
    %v2725 = vshrl.u32 %v2724, 7
    %v2726 = vsub.s32 %v2723, %v2725
    %v2727 = vrot.slane %v2713, %v2726
    %v2728 = vcombine.low %v2704, %v2720
    %v2729 = vcombine.high %v2704, %v2720
    %v2731 = vunpack.c.l.s4 1934713408
    %v2732 = vunpack.c.0.s8 %v2731
    %v2733 = vlaneseq
    %v2734 = vshrl.u32 %v2733, 7
    %v2735 = vsub.s32 %v2732, %v2734
    %v2736 = vrot.slane %v2728, %v2735
    %v2738 = vunpack.c.l.s4 1934713408
    %v2739 = vunpack.c.0.s8 %v2738
    %v2740 = vlaneseq
    %v2741 = vshrl.u32 %v2740, 7
    %v2742 = vsub.s32 %v2739, %v2741
    %v2743 = vrot.slane %v2729, %v2742
    %v2744 = vcombine.low %v2711, %v2727
    %v2745 = vcombine.high %v2711, %v2727
    %v2747 = vunpack.c.l.s4 1934713408
    %v2748 = vunpack.c.0.s8 %v2747
    %v2749 = vlaneseq
    %v2750 = vshrl.u32 %v2749, 7
    %v2751 = vsub.s32 %v2748, %v2750
    %v2752 = vrot.slane %v2744, %v2751
    %v2754 = vunpack.c.l.s4 1934713408
    %v2755 = vunpack.c.0.s8 %v2754
    %v2756 = vlaneseq
    %v2757 = vshrl.u32 %v2756, 7
    %v2758 = vsub.s32 %v2755, %v2757
    %v2759 = vrot.slane %v2745, %v2758
    %v2760 = vcombine.high %v2736, 0.0
    %v2761 = vcombine.high %v2743, 0.0
    %v2762 = vcombine.high %v2752, 0.0
    %v2763 = vcombine.high %v2759, 0.0
    %v2764 = vcombine.low %v2736, %v2743
    %v2766 = vunpack.c.l.s4 1983009808
    %v2767 = vunpack.c.0.s8 %v2766
    %v2768 = vlaneseq
    %v2769 = vshrl.u32 %v2768, 7
    %v2770 = vsub.s32 %v2767, %v2769
    %v2771 = vrot.slane %v2764, %v2770
    %v2772 = vcombine.low %v2760, %v2761
    %v2774 = vunpack.c.l.s4 1983009808
    %v2775 = vunpack.c.0.s8 %v2774
    %v2776 = vlaneseq
    %v2777 = vshrl.u32 %v2776, 7
    %v2778 = vsub.s32 %v2775, %v2777
    %v2779 = vrot.slane %v2772, %v2778
    %v2780 = vcombine.low %v2752, %v2759
    %v2782 = vunpack.c.l.s4 1983009808
    %v2783 = vunpack.c.0.s8 %v2782
    %v2784 = vlaneseq
    %v2785 = vshrl.u32 %v2784, 7
    %v2786 = vsub.s32 %v2783, %v2785
    %v2787 = vrot.slane %v2780, %v2786
    %v2788 = vcombine.low %v2762, %v2763
    %v2790 = vunpack.c.l.s4 1983009808
    %v2791 = vunpack.c.0.s8 %v2790
    %v2792 = vlaneseq
    %v2793 = vshrl.u32 %v2792, 7
    %v2794 = vsub.s32 %v2791, %v2793
    %v2795 = vrot.slane %v2788, %v2794
    %v2796 = vcombine.low %v2771, %v2779
    %v2797 = vcombine.high %v2771, %v2779
    %v2799 = vunpack.c.l.s4 1934713408
    %v2800 = vunpack.c.0.s8 %v2799
    %v2801 = vlaneseq
    %v2802 = vshrl.u32 %v2801, 7
    %v2803 = vsub.s32 %v2800, %v2802
    %v2804 = vrot.slane %v2796, %v2803
    %v2806 = vunpack.c.l.s4 1934713408
    %v2807 = vunpack.c.0.s8 %v2806
    %v2808 = vlaneseq
    %v2809 = vshrl.u32 %v2808, 7
    %v2810 = vsub.s32 %v2807, %v2809
    %v2811 = vrot.slane %v2797, %v2810
    %v2812 = vcombine.low %v2787, %v2795
    %v2813 = vcombine.high %v2787, %v2795
    %v2815 = vunpack.c.l.s4 1934713408
    %v2816 = vunpack.c.0.s8 %v2815
    %v2817 = vlaneseq
    %v2818 = vshrl.u32 %v2817, 7
    %v2819 = vsub.s32 %v2816, %v2818
    %v2820 = vrot.slane %v2812, %v2819
    %v2822 = vunpack.c.l.s4 1934713408
    %v2823 = vunpack.c.0.s8 %v2822
    %v2824 = vlaneseq
    %v2825 = vshrl.u32 %v2824, 7
    %v2826 = vsub.s32 %v2823, %v2825
    %v2827 = vrot.slane %v2813, %v2826
    %v2828 = vcombine.low %v2804, %v2820
    %v2829 = vcombine.high %v2804, %v2820
    %v2830 = vcombine.low %v2811, %v2827
    %v2831 = vcombine.high %v2811, %v2827
    %2833 = vrot.lane.b32.xlu0 %v2829, 8
    %v2834 = vpop.permute.xlu0 %2833
    %2837 = vrot.lane.b32.xlu0 %v2830, 16
    %v2838 = vpop.permute.xlu0 %2837
    %2841 = vrot.lane.b32.xlu0 %v2831, 24
    %v2842 = vpop.permute.xlu0 %2841
    %v2844 = vsel %vm805, %v2828, %v2834
    %v2845 = vsel %vm1595, %v2844, %v2838
    %v2846 = vsel %vm1597, %v2845, %v2842
    %s2847 = scalar_lea.vmem [#allocation2], 8
    %2848 = vst.msk [vmem:[%s2847] sm:$0xff] %vm55, %v2846
    // Predicated region
    $region22: #{tpu_custom_call.1} parent=1 // pred_check
      _
    $region23: #{tpu_custom_call.1} parent=1 // pred_check_branch
      %2850 = sbr.rel (0) target = $region25
    $region24: #{tpu_custom_call.1} parent=1 // pred_region
      %s2852 = ssub.s32 256, 256
      %2853 = vsyncadd [#allocation3], %s2852
      %s2854 = sshll.u32 [#allocation2], 4
      %s2855 = int_to_ptr.vmem [resolvable:$true] %s2854
      %2860 = dma.vmem_to_hbm [thread:$0]  %s2855, 256, %s5, [#allocation3], 128, 128, 8
    $region25: #{tpu_custom_call.1} parent=1 // pred_fallthru
      _
    // Predicated region
    $region26: #{tpu_custom_call.1} parent=1 // pred_check
      _
    $region27: #{tpu_custom_call.1} parent=1 // pred_check_branch
      %2862 = sbr.rel (0) target = $region29
    $region28: #{tpu_custom_call.1} parent=1 // pred_region
      %2863 = dma.done [#allocation3], 256
    $region29: #{tpu_custom_call.1} parent=1 // pred_fallthru
      _
    %2864 = vsyncpa [#allocation3], 1

</llo_original>
